<compile_context>
chip_gen: v5e
topology: v5e:2x2
jax: 0.10.0
libtpu: 0.0.40
codegen_flags: <defaults>
</compile_context>

<pallas_src>
import functools
import math

import jax
import jax.numpy as jnp
from jax.experimental import pallas as pl
from jax.experimental.pallas import tpu as pltpu

EPS = 1e-5


def _cparams(n_axes=1):
    return pltpu.CompilerParams(
        dimension_semantics=("parallel",) * n_axes,
        vmem_limit_bytes=48 * 1024 * 1024)


def _pick_tile(m, cap=1024):
    """Largest row tile <= cap that exactly divides m (multiple of 8 when tiling)."""
    if m <= cap:
        return m
    for t in range(cap - cap % 8, 7, -8):
        if m % t == 0:
            return t
    return m  # fallback: single block


# ---------------------------------------------------------------------------
# Kernel 1: conv1 (1x1) as matmul + per-tile BN partial statistics.
#   y = x @ w  (bf16 operands, f32 accumulation), emitted in width-grouped layout
#   (scale, M, width) so downstream consumers DMA only their slice.
#   stats[tile] = [sum(y), sum(y*y)] per output channel (finalized in XLA).
# ---------------------------------------------------------------------------
def _conv1_kernel(x_ref, w_ref, y_ref, st_ref, *, width, scale):
    y = jnp.dot(x_ref[...], w_ref[...], preferred_element_type=jnp.float32)
    st_ref[0, 0:1, :] = jnp.sum(y, axis=0, keepdims=True)
    st_ref[0, 1:2, :] = jnp.sum(y * y, axis=0, keepdims=True)
    for g in range(scale):  # static channel-group split, done once in the producer
        y_ref[g] = y[:, g * width:(g + 1) * width]


def conv1_matmul_stats(x2d, w_mat, tm, *, width, scale):
    m, cin = x2d.shape
    c1 = w_mat.shape[1]
    nm = m // tm
    return pl.pallas_call(
        functools.partial(_conv1_kernel, width=width, scale=scale),
        out_shape=(jax.ShapeDtypeStruct((scale, m, width), jnp.float32),
                   jax.ShapeDtypeStruct((nm, 2, c1), jnp.float32)),
        grid=(nm,),
        in_specs=[pl.BlockSpec((tm, cin), lambda i: (i, 0)),
                  pl.BlockSpec((cin, c1), lambda i: (0, 0))],
        out_specs=(pl.BlockSpec((scale, tm, width), lambda i: (0, i, 0)),
                   pl.BlockSpec((1, 2, c1), lambda i: (i, 0, 0))),
        compiler_params=_cparams(),
    )(x2d, w_mat)


def finalize_stats(partial, gamma, beta, count):
    """(tiles, 2, C) partial sums -> per-channel affine (scale, shift), each (1, C)."""
    s = jnp.sum(partial, axis=0)
    mean = s[0] / count
    var = jnp.maximum(s[1] / count - mean * mean, 0.0)
    scale = gamma * jax.lax.rsqrt(var + EPS)
    shift = beta - mean * scale
    return (scale.reshape(1, -1).astype(jnp.float32),
            shift.reshape(1, -1).astype(jnp.float32))


# ---------------------------------------------------------------------------
# Kernel 2 (x nums): hierarchical 3x3 branch conv, one image per grid step.
#   Normalizes its inputs in-kernel (bn1 affine for its y1 slice, previous branch's
#   bn affine for the carry), builds a zero-bordered halo in VMEM scratch, runs the
#   3x3 conv as ONE im2col matmul, and emits pre-BN output + per-image partial stats.
# ---------------------------------------------------------------------------
def _branch_kernel(*refs, width, has_prev, h, w):
    if has_prev:
        (y1_ref, sc1_ref, sh1_ref, yp_ref, scp_ref, shp_ref,
         w_ref, out_ref, st_ref, pad_ref) = refs
    else:
        (y1_ref, sc1_ref, sh1_ref, w_ref, out_ref, st_ref, pad_ref) = refs

    sc1 = sc1_ref[...].reshape(1, 1, width)
    sh1 = sh1_ref[...].reshape(1, 1, width)
    sp = jnp.maximum(y1_ref[0, 0] * sc1 + sh1, 0.0)
    if has_prev:
        scp = scp_ref[...].reshape(1, 1, width)
        shp = shp_ref[...].reshape(1, 1, width)
        sp = sp + jnp.maximum(yp_ref[0] * scp + shp, 0.0)

    # Zero only the 1-px border; the interior is fully overwritten each step.
    # TODO(synk): hold the halo in bf16 once packed unaligned sublane slices are robust.
    zrow = jnp.zeros((1, w + 2, width), pad_ref.dtype)
    zcol = jnp.zeros((h, 1, width), pad_ref.dtype)
    pad_ref[0:1] = zrow
    pad_ref[h + 1:h + 2] = zrow
    pad_ref[1:h + 1, 0:1, :] = zcol
    pad_ref[1:h + 1, w + 1:w + 2, :] = zcol
    pad_ref[1:h + 1, 1:w + 1, :] = sp

    # One im2col matmul: (h*w, 9*width) @ (9*width, width), bf16 operands.
    cols = [pad_ref[ky:ky + h, kx:kx + w, :].reshape(h * w, width)
            for ky in range(3) for kx in range(3)]
    slab = jnp.concatenate(cols, axis=-1).astype(jnp.bfloat16)
    acc = jnp.dot(slab, w_ref[...], preferred_element_type=jnp.float32)

    out_ref[0] = acc.reshape(h, w, width)
    st_ref[0, 0:1, :] = jnp.sum(acc, axis=0, keepdims=True)
    st_ref[0, 1:2, :] = jnp.sum(acc * acc, axis=0, keepdims=True)


def branch_conv(y1g_sp, sc1, sh1, yprev, scp, shp, w_mat, *, branch, width):
    scale, n, h, w, _ = y1g_sp.shape
    has_prev = yprev is not None
    kernel = functools.partial(_branch_kernel, width=width, has_prev=has_prev, h=h, w=w)
    arrays = [y1g_sp, sc1, sh1]
    specs = [pl.BlockSpec((1, 1, h, w, width), lambda b, g=branch: (g, b, 0, 0, 0)),
             pl.BlockSpec((1, width), lambda b: (0, 0)),
             pl.BlockSpec((1, width), lambda b: (0, 0))]
    if has_prev:
        arrays += [yprev, scp, shp]
        specs += [pl.BlockSpec((1, h, w, width), lambda b: (b, 0, 0, 0)),
                  pl.BlockSpec((1, width), lambda b: (0, 0)),
                  pl.BlockSpec((1, width), lambda b: (0, 0))]
    arrays.append(w_mat)
    specs.append(pl.BlockSpec((9 * width, width), lambda b: (0, 0)))
    # TODO(synk): for production H,W add a spatial row-tile grid axis with a th+2 halo
    # so the per-image blocks stay within v7x's 64 MiB VMEM and pipeline across 2 cores.
    return pl.pallas_call(
        kernel,
        out_shape=(jax.ShapeDtypeStruct((n, h, w, width), jnp.float32),
                   jax.ShapeDtypeStruct((n, 2, width), jnp.float32)),
        grid=(n,),
        in_specs=specs,
        out_specs=(pl.BlockSpec((1, h, w, width), lambda b: (b, 0, 0, 0)),
                   pl.BlockSpec((1, 2, width), lambda b: (b, 0, 0))),
        scratch_shapes=[pltpu.VMEM((h + 2, w + 2, width), jnp.float32)],
        compiler_params=_cparams(),
    )(*arrays)


# ---------------------------------------------------------------------------
# Kernel 3: conv3 (1x1) as a single matmul.  The normalized branch outputs and the
# spx[scale-1] passthrough are concatenated in-register (no HBM concatenate).
# ---------------------------------------------------------------------------
def _conv3_kernel(*refs, nums):
    yp_ref, scp_ref, shp_ref = refs[0], refs[1], refs[2]
    w_ref = refs[3 + 3 * nums]
    y_ref = refs[4 + 3 * nums]
    st_ref = refs[5 + 3 * nums]

    pieces = []
    for j in range(nums):                              # relu(bn_j(conv_j))
        yj, scj, shj = refs[3 + 3 * j], refs[4 + 3 * j], refs[5 + 3 * j]
        pieces.append(jnp.maximum(yj[...] * scj[...] + shj[...], 0.0))
    pieces.append(jnp.maximum(yp_ref[0] * scp_ref[...] + shp_ref[...], 0.0))  # spx[-1]
    z = jnp.concatenate(pieces, axis=-1).astype(jnp.bfloat16)

    acc = jnp.dot(z, w_ref[...], preferred_element_type=jnp.float32)
    y_ref[...] = acc
    st_ref[0, 0:1, :] = jnp.sum(acc, axis=0, keepdims=True)
    st_ref[0, 1:2, :] = jnp.sum(acc * acc, axis=0, keepdims=True)


def conv3_matmul(y1g, sc1_last, sh1_last, y2_list, sc2_list, sh2_list, w3, tm, *, width):
    scale, m, _ = y1g.shape
    c1, c3 = w3.shape
    nums = len(y2_list)
    nm = m // tm
    arrays = [y1g, sc1_last, sh1_last]
    specs = [pl.BlockSpec((1, tm, width), lambda i, g=scale - 1: (g, i, 0)),
             pl.BlockSpec((1, width), lambda i: (0, 0)),
             pl.BlockSpec((1, width), lambda i: (0, 0))]
    for j in range(nums):
        arrays += [y2_list[j], sc2_list[j], sh2_list[j]]
        specs += [pl.BlockSpec((tm, width), lambda i: (i, 0)),
                  pl.BlockSpec((1, width), lambda i: (0, 0)),
                  pl.BlockSpec((1, width), lambda i: (0, 0))]
    arrays.append(w3)
    specs.append(pl.BlockSpec((c1, c3), lambda i: (0, 0)))
    return pl.pallas_call(
        functools.partial(_conv3_kernel, nums=nums),
        out_shape=(jax.ShapeDtypeStruct((m, c3), jnp.float32),
                   jax.ShapeDtypeStruct((nm, 2, c3), jnp.float32)),
        grid=(nm,),
        in_specs=specs,
        out_specs=(pl.BlockSpec((tm, c3), lambda i: (i, 0)),
                   pl.BlockSpec((1, 2, c3), lambda i: (i, 0, 0))),
        compiler_params=_cparams(),
    )(*arrays)


# ---------------------------------------------------------------------------
# Kernel 4: bn3 + identity residual (f32 input) + relu, tiled elementwise epilogue.
# ---------------------------------------------------------------------------
def _bn_res_relu_kernel(y_ref, sc_ref, sh_ref, r_ref, o_ref):
    o_ref[...] = jnp.maximum(y_ref[...] * sc_ref[...] + sh_ref[...] + r_ref[...], 0.0)


def bn_residual_relu(y3, sc3, sh3, res2d, tm):
    m, c3 = y3.shape
    nm = m // tm
    return pl.pallas_call(
        _bn_res_relu_kernel,
        out_shape=jax.ShapeDtypeStruct((m, c3), jnp.float32),
        grid=(nm,),
        in_specs=[pl.BlockSpec((tm, c3), lambda i: (i, 0)),
                  pl.BlockSpec((1, c3), lambda i: (0, 0)),
                  pl.BlockSpec((1, c3), lambda i: (0, 0)),
                  pl.BlockSpec((tm, c3), lambda i: (i, 0))],
        out_specs=pl.BlockSpec((tm, c3), lambda i: (i, 0)),
        compiler_params=_cparams(),
    )(y3, sc3, sh3, res2d)


# ---------------------------------------------------------------------------
# Bottle2neck forward (stride=1, downsample=None, scale>1, train-mode BN stats).
# ---------------------------------------------------------------------------
def bottle2neck_forward(x_nchw, p, *, width, scale):
    assert scale >= 2, "only the scale>1 ('normal') path is implemented"  # TODO(synk): scale==1 path
    nums = scale - 1
    n, cin, h, w = x_nchw.shape
    m = n * h * w
    assert cin == p["w3_mat"].shape[1], "identity residual requires inplanes == planes*4"
    tm = _pick_tile(m)

    x_nhwc = jnp.transpose(x_nchw, (0, 2, 3, 1)).reshape(m, cin)   # f32 residual view
    x2d = x_nhwc.astype(jnp.bfloat16)                              # MXU operand

    # conv1 (1x1) + partial stats; bn1 affine is folded into the consumers below.
    y1g, st1 = conv1_matmul_stats(x2d, p["w1_mat"], tm, width=width, scale=scale)
    sc1, sh1 = finalize_stats(st1, p["g1"], p["b1"], m)

    # hierarchical 3x3 branches (sequential: each needs the previous branch's global
    # BN stats, finalized between the pallas_calls)
    y1g_sp = y1g.reshape(scale, n, h, w, width)        # free reshape (row-major)
    y2_list, sc2_list, sh2_list = [], [], []
    yprev = scp = shp = None
    for i in range(nums):
        y2, st2 = branch_conv(
            y1g_sp,
            sc1[:, i * width:(i + 1) * width], sh1[:, i * width:(i + 1) * width],
            yprev, scp, shp, p["w2_stack"][i], branch=i, width=width)
        scp, shp = finalize_stats(st2, p["g2"][i], p["b2"][i], m)
        yprev = y2
        y2_list.append(y2.reshape(m, width))
        sc2_list.append(scp)
        sh2_list.append(shp)

    # conv3 (1x1) consuming branch outputs + spx[-1] slice directly (no HBM concat)
    y3, st3 = conv3_matmul(y1g, sc1[:, nums * width:], sh1[:, nums * width:],
                           y2_list, sc2_list, sh2_list, p["w3_mat"], tm, width=width)
    sc3, sh3 = finalize_stats(st3, p["g3"], p["b3"], m)

    # bn3 + identity residual (full-precision input) + relu
    # TODO(synk): downsample / stride>1 path not implemented (module defaults used).
    out2d = bn_residual_relu(y3, sc3, sh3, x_nhwc, tm)
    # TODO(synk): keep channels-last end-to-end if the surrounding net allows; this
    # trailing transpose back to NCHW is an extra HBM pass kept only to match PyTorch.
    return jnp.transpose(out2d.reshape(n, h, w, -1), (0, 3, 1, 2))


# ---------------------------------------------------------------------------
# Pure-JAX reference mirroring the PyTorch module (NCHW, train-mode BN).
# ---------------------------------------------------------------------------
def reference_forward(x, p, *, width, scale):
    nums = scale - 1

    def conv(x, w, pad=0):
        return jax.lax.conv_general_dilated(
            x, w, window_strides=(1, 1),
            padding=((pad, pad), (pad, pad)),
            dimension_numbers=("NCHW", "OIHW", "NCHW"))

    def bn(y, g, b):
        mean = y.mean(axis=(0, 2, 3), keepdims=True)
        var = ((y - mean) ** 2).mean(axis=(0, 2, 3), keepdims=True)
        return (g[None, :, None, None] * (y - mean) / jnp.sqrt(var + EPS)
                + b[None, :, None, None])

    relu = lambda t: jnp.maximum(t, 0.0)

    residual = x
    out = relu(bn(conv(x, p["w1_oihw"]), p["g1"], p["b1"]))
    spx = [out[:, i * width:(i + 1) * width] for i in range(scale)]
    for i in range(nums):
        sp = spx[0] if i == 0 else sp + spx[i]
        sp = conv(sp, p["w2_oihw"][i], pad=1)
        sp = relu(bn(sp, p["g2"][i], p["b2"][i]))
        out = sp if i == 0 else jnp.concatenate([out, sp], axis=1)
    out = jnp.concatenate([out, spx[nums]], axis=1)
    out = bn(conv(out, p["w3_oihw"]), p["g3"], p["b3"])
    return relu(out + residual)


# ---------------------------------------------------------------------------
# Deterministic parameter construction (matches nn.Module __init__ shapes).
# bf16 matmul layouts are cached here so the forward pays no per-call casts.
# ---------------------------------------------------------------------------
def make_params(key, inplanes, planes, baseWidth=26, scale=4):
    expansion = 4
    width = int(math.floor(planes * (baseWidth / 64.0)))
    nums = scale - 1
    keys = jax.random.split(key, 3 + nums)

    w1 = 0.1 * jax.random.normal(keys[0], (width * scale, inplanes, 1, 1), jnp.float32)
    w3 = 0.1 * jax.random.normal(keys[1], (planes * expansion, width * scale, 1, 1),
                                 jnp.float32)
    w2 = [0.1 * jax.random.normal(keys[2 + i], (width, width, 3, 3), jnp.float32)
          for i in range(nums)]

    def bn_params(k, c):
        kg, kb = jax.random.split(k)
        return (1.0 + 0.1 * jax.random.normal(kg, (c,), jnp.float32),
                0.1 * jax.random.normal(kb, (c,), jnp.float32))

    kbn = jax.random.split(keys[-1], 2 + nums)
    g1, b1 = bn_params(kbn[0], width * scale)
    g3, b3 = bn_params(kbn[1], planes * expansion)
    g2, b2 = zip(*[bn_params(kbn[2 + i], width) for i in range(nums)])

    params = dict(
        w1_oihw=w1, w3_oihw=w3, w2_oihw=list(w2),
        g1=g1, b1=b1, g3=g3, b3=b3, g2=list(g2), b2=list(b2),
        # cached bf16 matmul layouts for the Pallas path
        w1_mat=w1[:, :, 0, 0].T.astype(jnp.bfloat16),              # [Cin, width*scale]
        w3_mat=w3[:, :, 0, 0].T.astype(jnp.bfloat16),              # [width*scale, planes*4]
        w2_stack=[jnp.transpose(wi, (2, 3, 1, 0))                  # [(tap,in) -> out]
                  .reshape(9 * width, width).astype(jnp.bfloat16)
                  for wi in w2],
    )
    return params, width


if __name__ == "__main__":
    # Small shapes consistent with the module: inplanes = planes * expansion so the
    # identity residual is valid (downsample=None, stride=1).
    planes, inplanes = 16, 64          # width = floor(16 * 26/64) = 6, scale = 4
    n, h, w = 2, 8, 8
    scale = 4

    key = jax.random.PRNGKey(0)
    kx, kp = jax.random.split(key)
    x = jax.random.normal(kx, (n, inplanes, h, w), jnp.float32)

    params, width = make_params(kp, inplanes, planes, baseWidth=26, scale=scale)
    assert inplanes == planes * 4

    fwd = jax.jit(functools.partial(bottle2neck_forward, width=width, scale=scale))
    out = jax.block_until_ready(fwd(x, params))

    ref = jax.block_until_ready(reference_forward(x, params, width=width, scale=scale))

    assert out.shape == ref.shape == (n, planes * 4, h, w)
    # bf16 MXU operands vs. the pure-f32 reference: small absolute slack.
    max_err = float(jnp.max(jnp.abs(out - ref)))
    assert jnp.allclose(out, ref, atol=5e-2, rtol=5e-2), max_err

    print("KERNEL_OK")
</pallas_src>

<mosaic_0001>
module attributes {stable_mosaic.version = 11 : i64} {
  func.func @_conv1_kernel(%arg0: i32, %arg1: memref<128x64xbf16, #tpu.memory_space<vmem>>, %arg2: memref<64x24xbf16, #tpu.memory_space<vmem>>, %arg3: memref<4x128x6xf32, #tpu.memory_space<vmem>>, %arg4: memref<1x2x24xf32, #tpu.memory_space<vmem>>) attributes {dimension_semantics = [#tpu.dimension_semantics<parallel>], iteration_bounds = array<i64: 1>, scalar_prefetch = 0 : i64, scratch_operands = 0 : i64, tpu.core_type = #tpu.core_type<tc>, window_params = [{transform_indices = @transform_0, window_bounds = array<i64: 128, 64>}, {pipeline_mode = #tpu.pipeline_mode<synchronous>, transform_indices = @transform_1, window_bounds = array<i64: 64, 24>}, {transform_indices = @transform_2, window_bounds = array<i64: 4, 128, 6>}, {transform_indices = @transform_3, window_bounds = array<i64: 1, 2, 24>}]} {
    %c0 = arith.constant 0 : index
    %c0_0 = arith.constant 0 : index
    %0 = vector.load %arg1[%c0, %c0_0] : memref<128x64xbf16, #tpu.memory_space<vmem>>, vector<128x64xbf16>
    %c0_1 = arith.constant 0 : index
    %c0_2 = arith.constant 0 : index
    %1 = vector.load %arg2[%c0_1, %c0_2] : memref<64x24xbf16, #tpu.memory_space<vmem>>, vector<64x24xbf16>
    %cst = arith.constant dense<0.000000e+00> : vector<128x24xf32>
    %2 = tpu.matmul %0, %1, %cst {dimension_numbers = #tpu.dot_dimension_numbers<[1], [0], [0], [1], [0, 0, 1, 1], [], []>} : vector<128x64xbf16>, vector<64x24xbf16>, vector<128x24xf32> -> vector<128x24xf32>
    %cst_3 = arith.constant dense<0.000000e+00> : vector<24xf32>
    %3 = vector.multi_reduction <add>, %2, %cst_3 [0] : vector<128x24xf32> to vector<24xf32>
    %4 = vector.shape_cast %3 : vector<24xf32> to vector<1x24xf32>
    %c0_4 = arith.constant 0 : index
    %c0_5 = arith.constant 0 : index
    %c0_6 = arith.constant 0 : index
    %5 = vector.load %arg4[%c0_4, %c0_5, %c0_6] : memref<1x2x24xf32, #tpu.memory_space<vmem>>, vector<1x1x24xf32>
    %6 = vector.shape_cast %5 : vector<1x1x24xf32> to vector<1x24xf32>
    %7 = vector.shape_cast %4 : vector<1x24xf32> to vector<1x1x24xf32>
    tpu.vector_store %arg4[%c0_4, %c0_5, %c0_6], %7 {strides = array<i32>} : memref<1x2x24xf32, #tpu.memory_space<vmem>>, vector<1x1x24xf32>,
    %8 = arith.mulf %2, %2 : vector<128x24xf32>
    %cst_7 = arith.constant dense<0.000000e+00> : vector<24xf32>
    %9 = vector.multi_reduction <add>, %8, %cst_7 [0] : vector<128x24xf32> to vector<24xf32>
    %10 = vector.shape_cast %9 : vector<24xf32> to vector<1x24xf32>
    %c0_8 = arith.constant 0 : index
    %c1 = arith.constant 1 : index
    %c0_9 = arith.constant 0 : index
    %11 = vector.load %arg4[%c0_8, %c1, %c0_9] : memref<1x2x24xf32, #tpu.memory_space<vmem>>, vector<1x1x24xf32>
    %12 = vector.shape_cast %11 : vector<1x1x24xf32> to vector<1x24xf32>
    %13 = vector.shape_cast %10 : vector<1x24xf32> to vector<1x1x24xf32>
    tpu.vector_store %arg4[%c0_8, %c1, %c0_9], %13 {strides = array<i32>} : memref<1x2x24xf32, #tpu.memory_space<vmem>>, vector<1x1x24xf32>,
    %14 = vector.extract_strided_slice %2 {offsets = [0, 0], sizes = [128, 6], strides = [1, 1]} : vector<128x24xf32> to vector<128x6xf32>
    %c0_10 = arith.constant 0 : index
    %c0_11 = arith.constant 0 : index
    %c0_12 = arith.constant 0 : index
    %15 = vector.load %arg3[%c0_10, %c0_11, %c0_12] : memref<4x128x6xf32, #tpu.memory_space<vmem>>, vector<1x128x6xf32>
    %16 = vector.shape_cast %15 : vector<1x128x6xf32> to vector<128x6xf32>
    %17 = vector.shape_cast %14 : vector<128x6xf32> to vector<1x128x6xf32>
    tpu.vector_store %arg3[%c0_10, %c0_11, %c0_12], %17 {strides = array<i32>} : memref<4x128x6xf32, #tpu.memory_space<vmem>>, vector<1x128x6xf32>,
    %18 = vector.extract_strided_slice %2 {offsets = [0, 6], sizes = [128, 6], strides = [1, 1]} : vector<128x24xf32> to vector<128x6xf32>
    %c1_13 = arith.constant 1 : index
    %c0_14 = arith.constant 0 : index
    %c0_15 = arith.constant 0 : index
    %19 = vector.load %arg3[%c1_13, %c0_14, %c0_15] : memref<4x128x6xf32, #tpu.memory_space<vmem>>, vector<1x128x6xf32>
    %20 = vector.shape_cast %19 : vector<1x128x6xf32> to vector<128x6xf32>
    %21 = vector.shape_cast %18 : vector<128x6xf32> to vector<1x128x6xf32>
    tpu.vector_store %arg3[%c1_13, %c0_14, %c0_15], %21 {strides = array<i32>} : memref<4x128x6xf32, #tpu.memory_space<vmem>>, vector<1x128x6xf32>,
    %22 = vector.extract_strided_slice %2 {offsets = [0, 12], sizes = [128, 6], strides = [1, 1]} : vector<128x24xf32> to vector<128x6xf32>
    %c2 = arith.constant 2 : index
    %c0_16 = arith.constant 0 : index
    %c0_17 = arith.constant 0 : index
    %23 = vector.load %arg3[%c2, %c0_16, %c0_17] : memref<4x128x6xf32, #tpu.memory_space<vmem>>, vector<1x128x6xf32>
    %24 = vector.shape_cast %23 : vector<1x128x6xf32> to vector<128x6xf32>
    %25 = vector.shape_cast %22 : vector<128x6xf32> to vector<1x128x6xf32>
    tpu.vector_store %arg3[%c2, %c0_16, %c0_17], %25 {strides = array<i32>} : memref<4x128x6xf32, #tpu.memory_space<vmem>>, vector<1x128x6xf32>,
    %26 = vector.extract_strided_slice %2 {offsets = [0, 18], sizes = [128, 6], strides = [1, 1]} : vector<128x24xf32> to vector<128x6xf32>
    %c3 = arith.constant 3 : index
    %c0_18 = arith.constant 0 : index
    %c0_19 = arith.constant 0 : index
    %27 = vector.load %arg3[%c3, %c0_18, %c0_19] : memref<4x128x6xf32, #tpu.memory_space<vmem>>, vector<1x128x6xf32>
    %28 = vector.shape_cast %27 : vector<1x128x6xf32> to vector<128x6xf32>
    %29 = vector.shape_cast %26 : vector<128x6xf32> to vector<1x128x6xf32>
    tpu.vector_store %arg3[%c3, %c0_18, %c0_19], %29 {strides = array<i32>} : memref<4x128x6xf32, #tpu.memory_space<vmem>>, vector<1x128x6xf32>,
    return
  }
  func.func @transform_0(%arg0: i32) -> (i32, i32) {
    %c0_i32 = arith.constant 0 : i32
    %c0_i32_0 = arith.constant 0 : i32
    return %arg0, %c0_i32 : i32, i32
  }
  func.func @transform_1(%arg0: i32) -> (i32, i32) {
    %c0_i32 = arith.constant 0 : i32
    %c0_i32_0 = arith.constant 0 : i32
    %c0_i32_1 = arith.constant 0 : i32
    return %c0_i32, %c0_i32_0 : i32, i32
  }
  func.func @transform_2(%arg0: i32) -> (i32, i32, i32) {
    %c0_i32 = arith.constant 0 : i32
    %c0_i32_0 = arith.constant 0 : i32
    %c0_i32_1 = arith.constant 0 : i32
    return %c0_i32, %arg0, %c0_i32_0 : i32, i32, i32
  }
  func.func @transform_3(%arg0: i32) -> (i32, i32, i32) {
    %c0_i32 = arith.constant 0 : i32
    %c0_i32_0 = arith.constant 0 : i32
    %c0_i32_1 = arith.constant 0 : i32
    return %arg0, %c0_i32, %c0_i32_0 : i32, i32, i32
  }
}

module attributes {stable_mosaic.version = 11 : i64} {
  func.func @_branch_kernel(%arg0: i32, %arg1: memref<1x1x8x8x6xf32, #tpu.memory_space<vmem>>, %arg2: memref<1x6xf32, #tpu.memory_space<vmem>>, %arg3: memref<1x6xf32, #tpu.memory_space<vmem>>, %arg4: memref<1x8x8x6xf32, #tpu.memory_space<vmem>>, %arg5: memref<1x6xf32, #tpu.memory_space<vmem>>, %arg6: memref<1x6xf32, #tpu.memory_space<vmem>>, %arg7: memref<54x6xbf16, #tpu.memory_space<vmem>>, %arg8: memref<1x8x8x6xf32, #tpu.memory_space<vmem>>, %arg9: memref<1x2x6xf32, #tpu.memory_space<vmem>>, %arg10: memref<10x10x6xf32, #tpu.memory_space<vmem>>) attributes {dimension_semantics = [#tpu.dimension_semantics<parallel>], iteration_bounds = array<i64: 2>, scalar_prefetch = 0 : i64, scratch_operands = 1 : i64, tpu.core_type = #tpu.core_type<tc>, window_params = [{transform_indices = @transform_0, window_bounds = array<i64: 1, 1, 8, 8, 6>}, {pipeline_mode = #tpu.pipeline_mode<synchronous>, transform_indices = @transform_1, window_bounds = array<i64: 1, 6>}, {pipeline_mode = #tpu.pipeline_mode<synchronous>, transform_indices = @transform_2, window_bounds = array<i64: 1, 6>}, {transform_indices = @transform_3, window_bounds = array<i64: 1, 8, 8, 6>}, {pipeline_mode = #tpu.pipeline_mode<synchronous>, transform_indices = @transform_4, window_bounds = array<i64: 1, 6>}, {pipeline_mode = #tpu.pipeline_mode<synchronous>, transform_indices = @transform_5, window_bounds = array<i64: 1, 6>}, {pipeline_mode = #tpu.pipeline_mode<synchronous>, transform_indices = @transform_6, window_bounds = array<i64: 54, 6>}, {transform_indices = @transform_7, window_bounds = array<i64: 1, 8, 8, 6>}, {transform_indices = @transform_8, window_bounds = array<i64: 1, 2, 6>}]} {
    %c0 = arith.constant 0 : index
    %c0_0 = arith.constant 0 : index
    %0 = vector.load %arg2[%c0, %c0_0] : memref<1x6xf32, #tpu.memory_space<vmem>>, vector<1x6xf32>
    %1 = vector.shape_cast %0 : vector<1x6xf32> to vector<1x1x6xf32>
    %c0_1 = arith.constant 0 : index
    %c0_2 = arith.constant 0 : index
    %2 = vector.load %arg3[%c0_1, %c0_2] : memref<1x6xf32, #tpu.memory_space<vmem>>, vector<1x6xf32>
    %3 = vector.shape_cast %2 : vector<1x6xf32> to vector<1x1x6xf32>
    %c0_3 = arith.constant 0 : index
    %c0_4 = arith.constant 0 : index
    %c0_5 = arith.constant 0 : index
    %c0_6 = arith.constant 0 : index
    %c0_7 = arith.constant 0 : index
    %4 = vector.load %arg1[%c0_3, %c0_4, %c0_5, %c0_6, %c0_7] : memref<1x1x8x8x6xf32, #tpu.memory_space<vmem>>, vector<1x1x8x8x6xf32>
    %5 = vector.shape_cast %4 : vector<1x1x8x8x6xf32> to vector<8x8x6xf32>
    %6 = vector.broadcast %1 : vector<1x1x6xf32> to vector<8x8x6xf32>
    %7 = arith.mulf %5, %6 : vector<8x8x6xf32>
    %8 = vector.broadcast %3 : vector<1x1x6xf32> to vector<8x8x6xf32>
    %9 = arith.addf %7, %8 : vector<8x8x6xf32>
    %cst = arith.constant 0.000000e+00 : f32
    %10 = vector.broadcast %cst : f32 to vector<8x8x6xf32>
    %11 = arith.maximumf %9, %10 : vector<8x8x6xf32>
    %c0_8 = arith.constant 0 : index
    %c0_9 = arith.constant 0 : index
    %12 = vector.load %arg5[%c0_8, %c0_9] : memref<1x6xf32, #tpu.memory_space<vmem>>, vector<1x6xf32>
    %13 = vector.shape_cast %12 : vector<1x6xf32> to vector<1x1x6xf32>
    %c0_10 = arith.constant 0 : index
    %c0_11 = arith.constant 0 : index
    %14 = vector.load %arg6[%c0_10, %c0_11] : memref<1x6xf32, #tpu.memory_space<vmem>>, vector<1x6xf32>
    %15 = vector.shape_cast %14 : vector<1x6xf32> to vector<1x1x6xf32>
    %c0_12 = arith.constant 0 : index
    %c0_13 = arith.constant 0 : index
    %c0_14 = arith.constant 0 : index
    %c0_15 = arith.constant 0 : index
    %16 = vector.load %arg4[%c0_12, %c0_13, %c0_14, %c0_15] : memref<1x8x8x6xf32, #tpu.memory_space<vmem>>, vector<1x8x8x6xf32>
    %17 = vector.shape_cast %16 : vector<1x8x8x6xf32> to vector<8x8x6xf32>
    %18 = vector.broadcast %13 : vector<1x1x6xf32> to vector<8x8x6xf32>
    %19 = arith.mulf %17, %18 : vector<8x8x6xf32>
    %20 = vector.broadcast %15 : vector<1x1x6xf32> to vector<8x8x6xf32>
    %21 = arith.addf %19, %20 : vector<8x8x6xf32>
    %cst_16 = arith.constant 0.000000e+00 : f32
    %22 = vector.broadcast %cst_16 : f32 to vector<8x8x6xf32>
    %23 = arith.maximumf %21, %22 : vector<8x8x6xf32>
    %24 = arith.addf %11, %23 : vector<8x8x6xf32>
    %cst_17 = arith.constant 0.000000e+00 : f32
    %25 = vector.broadcast %cst_17 : f32 to vector<1x10x6xf32>
    %cst_18 = arith.constant 0.000000e+00 : f32
    %26 = vector.broadcast %cst_18 : f32 to vector<8x1x6xf32>
    %c0_19 = arith.constant 0 : index
    %c0_20 = arith.constant 0 : index
    %c0_21 = arith.constant 0 : index
    %27 = vector.load %arg10[%c0_19, %c0_20, %c0_21] : memref<10x10x6xf32, #tpu.memory_space<vmem>>, vector<1x10x6xf32>
    tpu.vector_store %arg10[%c0_19, %c0_20, %c0_21], %25 {strides = array<i32>} : memref<10x10x6xf32, #tpu.memory_space<vmem>>, vector<1x10x6xf32>,
    %c9 = arith.constant 9 : index
    %c0_22 = arith.constant 0 : index
    %c0_23 = arith.constant 0 : index
    %28 = vector.load %arg10[%c9, %c0_22, %c0_23] : memref<10x10x6xf32, #tpu.memory_space<vmem>>, vector<1x10x6xf32>
    tpu.vector_store %arg10[%c9, %c0_22, %c0_23], %25 {strides = array<i32>} : memref<10x10x6xf32, #tpu.memory_space<vmem>>, vector<1x10x6xf32>,
    %c1 = arith.constant 1 : index
    %c0_24 = arith.constant 0 : index
    %c0_25 = arith.constant 0 : index
    %29 = vector.load %arg10[%c1, %c0_24, %c0_25] : memref<10x10x6xf32, #tpu.memory_space<vmem>>, vector<8x1x6xf32>
    tpu.vector_store %arg10[%c1, %c0_24, %c0_25], %26 {strides = array<i32>} : memref<10x10x6xf32, #tpu.memory_space<vmem>>, vector<8x1x6xf32>,
    %c1_26 = arith.constant 1 : index
    %c9_27 = arith.constant 9 : index
    %c0_28 = arith.constant 0 : index
    %30 = vector.load %arg10[%c1_26, %c9_27, %c0_28] : memref<10x10x6xf32, #tpu.memory_space<vmem>>, vector<8x1x6xf32>
    tpu.vector_store %arg10[%c1_26, %c9_27, %c0_28], %26 {strides = array<i32>} : memref<10x10x6xf32, #tpu.memory_space<vmem>>, vector<8x1x6xf32>,
    %c1_29 = arith.constant 1 : index
    %c1_30 = arith.constant 1 : index
    %c0_31 = arith.constant 0 : index
    %31 = vector.load %arg10[%c1_29, %c1_30, %c0_31] : memref<10x10x6xf32, #tpu.memory_space<vmem>>, vector<8x8x6xf32>
    tpu.vector_store %arg10[%c1_29, %c1_30, %c0_31], %24 {strides = array<i32>} : memref<10x10x6xf32, #tpu.memory_space<vmem>>, vector<8x8x6xf32>,
    %c0_32 = arith.constant 0 : index
    %c0_33 = arith.constant 0 : index
    %c0_34 = arith.constant 0 : index
    %32 = vector.load %arg10[%c0_32, %c0_33, %c0_34] : memref<10x10x6xf32, #tpu.memory_space<vmem>>, vector<8x8x6xf32>
    %33 = vector.shape_cast %32 : vector<8x8x6xf32> to vector<64x6xf32>
    %c0_35 = arith.constant 0 : index
    %c1_36 = arith.constant 1 : index
    %c0_37 = arith.constant 0 : index
    %34 = vector.load %arg10[%c0_35, %c1_36, %c0_37] : memref<10x10x6xf32, #tpu.memory_space<vmem>>, vector<8x8x6xf32>
    %35 = vector.shape_cast %34 : vector<8x8x6xf32> to vector<64x6xf32>
    %c0_38 = arith.constant 0 : index
    %c2 = arith.constant 2 : index
    %c0_39 = arith.constant 0 : index
    %36 = vector.load %arg10[%c0_38, %c2, %c0_39] : memref<10x10x6xf32, #tpu.memory_space<vmem>>, vector<8x8x6xf32>
    %37 = vector.shape_cast %36 : vector<8x8x6xf32> to vector<64x6xf32>
    %c1_40 = arith.constant 1 : index
    %c0_41 = arith.constant 0 : index
    %c0_42 = arith.constant 0 : index
    %38 = vector.load %arg10[%c1_40, %c0_41, %c0_42] : memref<10x10x6xf32, #tpu.memory_space<vmem>>, vector<8x8x6xf32>
    %39 = vector.shape_cast %38 : vector<8x8x6xf32> to vector<64x6xf32>
    %c1_43 = arith.constant 1 : index
    %c1_44 = arith.constant 1 : index
    %c0_45 = arith.constant 0 : index
    %40 = vector.load %arg10[%c1_43, %c1_44, %c0_45] : memref<10x10x6xf32, #tpu.memory_space<vmem>>, vector<8x8x6xf32>
    %41 = vector.shape_cast %40 : vector<8x8x6xf32> to vector<64x6xf32>
    %c1_46 = arith.constant 1 : index
    %c2_47 = arith.constant 2 : index
    %c0_48 = arith.constant 0 : index
    %42 = vector.load %arg10[%c1_46, %c2_47, %c0_48] : memref<10x10x6xf32, #tpu.memory_space<vmem>>, vector<8x8x6xf32>
    %43 = vector.shape_cast %42 : vector<8x8x6xf32> to vector<64x6xf32>
    %c2_49 = arith.constant 2 : index
    %c0_50 = arith.constant 0 : index
    %c0_51 = arith.constant 0 : index
    %44 = vector.load %arg10[%c2_49, %c0_50, %c0_51] : memref<10x10x6xf32, #tpu.memory_space<vmem>>, vector<8x8x6xf32>
    %45 = vector.shape_cast %44 : vector<8x8x6xf32> to vector<64x6xf32>
    %c2_52 = arith.constant 2 : index
    %c1_53 = arith.constant 1 : index
    %c0_54 = arith.constant 0 : index
    %46 = vector.load %arg10[%c2_52, %c1_53, %c0_54] : memref<10x10x6xf32, #tpu.memory_space<vmem>>, vector<8x8x6xf32>
    %47 = vector.shape_cast %46 : vector<8x8x6xf32> to vector<64x6xf32>
    %c2_55 = arith.constant 2 : index
    %c2_56 = arith.constant 2 : index
    %c0_57 = arith.constant 0 : index
    %48 = vector.load %arg10[%c2_55, %c2_56, %c0_57] : memref<10x10x6xf32, #tpu.memory_space<vmem>>, vector<8x8x6xf32>
    %49 = vector.shape_cast %48 : vector<8x8x6xf32> to vector<64x6xf32>
    %50 = tpu.concatenate %33, %35, %37, %39, %41, %43, %45, %47, %49 in 1 : vector<64x6xf32>, vector<64x6xf32>, vector<64x6xf32>, vector<64x6xf32>, vector<64x6xf32>, vector<64x6xf32>, vector<64x6xf32>, vector<64x6xf32>, vector<64x6xf32> -> vector<64x54xf32>
    %51 = arith.truncf %50 : vector<64x54xf32> to vector<64x54xbf16>
    %c0_58 = arith.constant 0 : index
    %c0_59 = arith.constant 0 : index
    %52 = vector.load %arg7[%c0_58, %c0_59] : memref<54x6xbf16, #tpu.memory_space<vmem>>, vector<54x6xbf16>
    %cst_60 = arith.constant dense<0.000000e+00> : vector<64x6xf32>
    %53 = tpu.matmul %51, %52, %cst_60 {dimension_numbers = #tpu.dot_dimension_numbers<[1], [0], [0], [1], [0, 0, 1, 1], [], []>} : vector<64x54xbf16>, vector<54x6xbf16>, vector<64x6xf32> -> vector<64x6xf32>
    %54 = vector.shape_cast %53 : vector<64x6xf32> to vector<8x8x6xf32>
    %c0_61 = arith.constant 0 : index
    %c0_62 = arith.constant 0 : index
    %c0_63 = arith.constant 0 : index
    %c0_64 = arith.constant 0 : index
    %55 = vector.load %arg8[%c0_61, %c0_62, %c0_63, %c0_64] : memref<1x8x8x6xf32, #tpu.memory_space<vmem>>, vector<1x8x8x6xf32>
    %56 = vector.shape_cast %55 : vector<1x8x8x6xf32> to vector<8x8x6xf32>
    %57 = vector.shape_cast %54 : vector<8x8x6xf32> to vector<1x8x8x6xf32>
    tpu.vector_store %arg8[%c0_61, %c0_62, %c0_63, %c0_64], %57 {strides = array<i32>} : memref<1x8x8x6xf32, #tpu.memory_space<vmem>>, vector<1x8x8x6xf32>,
    %cst_65 = arith.constant dense<0.000000e+00> : vector<6xf32>
    %58 = vector.multi_reduction <add>, %53, %cst_65 [0] : vector<64x6xf32> to vector<6xf32>
    %59 = vector.shape_cast %58 : vector<6xf32> to vector<1x6xf32>
    %c0_66 = arith.constant 0 : index
    %c0_67 = arith.constant 0 : index
    %c0_68 = arith.constant 0 : index
    %60 = vector.load %arg9[%c0_66, %c0_67, %c0_68] : memref<1x2x6xf32, #tpu.memory_space<vmem>>, vector<1x1x6xf32>
    %61 = vector.shape_cast %60 : vector<1x1x6xf32> to vector<1x6xf32>
    %62 = vector.shape_cast %59 : vector<1x6xf32> to vector<1x1x6xf32>
    tpu.vector_store %arg9[%c0_66, %c0_67, %c0_68], %62 {strides = array<i32>} : memref<1x2x6xf32, #tpu.memory_space<vmem>>, vector<1x1x6xf32>,
    %63 = arith.mulf %53, %53 : vector<64x6xf32>
    %cst_69 = arith.constant dense<0.000000e+00> : vector<6xf32>
    %64 = vector.multi_reduction <add>, %63, %cst_69 [0] : vector<64x6xf32> to vector<6xf32>
    %65 = vector.shape_cast %64 : vector<6xf32> to vector<1x6xf32>
    %c0_70 = arith.constant 0 : index
    %c1_71 = arith.constant 1 : index
    %c0_72 = arith.constant 0 : index
    %66 = vector.load %arg9[%c0_70, %c1_71, %c0_72] : memref<1x2x6xf32, #tpu.memory_space<vmem>>, vector<1x1x6xf32>
    %67 = vector.shape_cast %66 : vector<1x1x6xf32> to vector<1x6xf32>
    %68 = vector.shape_cast %65 : vector<1x6xf32> to vector<1x1x6xf32>
    tpu.vector_store %arg9[%c0_70, %c1_71, %c0_72], %68 {strides = array<i32>} : memref<1x2x6xf32, #tpu.memory_space<vmem>>, vector<1x1x6xf32>,
    return
  }
  func.func @transform_0(%arg0: i32) -> (i32, i32, i32, i32, i32) {
    %c1_i32 = arith.constant 1 : i32
    %c0_i32 = arith.constant 0 : i32
    %c0_i32_0 = arith.constant 0 : i32
    %c0_i32_1 = arith.constant 0 : i32
    %c0_i32_2 = arith.constant 0 : i32
    return %c1_i32, %arg0, %c0_i32, %c0_i32_0, %c0_i32_1 : i32, i32, i32, i32, i32
  }
  func.func @transform_1(%arg0: i32) -> (i32, i32) {
    %c0_i32 = arith.constant 0 : i32
    %c0_i32_0 = arith.constant 0 : i32
    %c0_i32_1 = arith.constant 0 : i32
    return %c0_i32, %c0_i32_0 : i32, i32
  }
  func.func @transform_2(%arg0: i32) -> (i32, i32) {
    %c0_i32 = arith.constant 0 : i32
    %c0_i32_0 = arith.constant 0 : i32
    %c0_i32_1 = arith.constant 0 : i32
    return %c0_i32, %c0_i32_0 : i32, i32
  }
  func.func @transform_3(%arg0: i32) -> (i32, i32, i32, i32) {
    %c0_i32 = arith.constant 0 : i32
    %c0_i32_0 = arith.constant 0 : i32
    %c0_i32_1 = arith.constant 0 : i32
    %c0_i32_2 = arith.constant 0 : i32
    return %arg0, %c0_i32, %c0_i32_0, %c0_i32_1 : i32, i32, i32, i32
  }
  func.func @transform_4(%arg0: i32) -> (i32, i32) {
    %c0_i32 = arith.constant 0 : i32
    %c0_i32_0 = arith.constant 0 : i32
    %c0_i32_1 = arith.constant 0 : i32
    return %c0_i32, %c0_i32_0 : i32, i32
  }
  func.func @transform_5(%arg0: i32) -> (i32, i32) {
    %c0_i32 = arith.constant 0 : i32
    %c0_i32_0 = arith.constant 0 : i32
    %c0_i32_1 = arith.constant 0 : i32
    return %c0_i32, %c0_i32_0 : i32, i32
  }
  func.func @transform_6(%arg0: i32) -> (i32, i32) {
    %c0_i32 = arith.constant 0 : i32
    %c0_i32_0 = arith.constant 0 : i32
    %c0_i32_1 = arith.constant 0 : i32
    return %c0_i32, %c0_i32_0 : i32, i32
  }
  func.func @transform_7(%arg0: i32) -> (i32, i32, i32, i32) {
    %c0_i32 = arith.constant 0 : i32
    %c0_i32_0 = arith.constant 0 : i32
    %c0_i32_1 = arith.constant 0 : i32
    %c0_i32_2 = arith.constant 0 : i32
    return %arg0, %c0_i32, %c0_i32_0, %c0_i32_1 : i32, i32, i32, i32
  }
  func.func @transform_8(%arg0: i32) -> (i32, i32, i32) {
    %c0_i32 = arith.constant 0 : i32
    %c0_i32_0 = arith.constant 0 : i32
    %c0_i32_1 = arith.constant 0 : i32
    return %arg0, %c0_i32, %c0_i32_0 : i32, i32, i32
  }
}

module attributes {stable_mosaic.version = 11 : i64} {
  func.func @_branch_kernel(%arg0: i32, %arg1: memref<1x1x8x8x6xf32, #tpu.memory_space<vmem>>, %arg2: memref<1x6xf32, #tpu.memory_space<vmem>>, %arg3: memref<1x6xf32, #tpu.memory_space<vmem>>, %arg4: memref<54x6xbf16, #tpu.memory_space<vmem>>, %arg5: memref<1x8x8x6xf32, #tpu.memory_space<vmem>>, %arg6: memref<1x2x6xf32, #tpu.memory_space<vmem>>, %arg7: memref<10x10x6xf32, #tpu.memory_space<vmem>>) attributes {dimension_semantics = [#tpu.dimension_semantics<parallel>], iteration_bounds = array<i64: 2>, scalar_prefetch = 0 : i64, scratch_operands = 1 : i64, tpu.core_type = #tpu.core_type<tc>, window_params = [{transform_indices = @transform_0, window_bounds = array<i64: 1, 1, 8, 8, 6>}, {pipeline_mode = #tpu.pipeline_mode<synchronous>, transform_indices = @transform_1, window_bounds = array<i64: 1, 6>}, {pipeline_mode = #tpu.pipeline_mode<synchronous>, transform_indices = @transform_2, window_bounds = array<i64: 1, 6>}, {pipeline_mode = #tpu.pipeline_mode<synchronous>, transform_indices = @transform_3, window_bounds = array<i64: 54, 6>}, {transform_indices = @transform_4, window_bounds = array<i64: 1, 8, 8, 6>}, {transform_indices = @transform_5, window_bounds = array<i64: 1, 2, 6>}]} {
    %c0 = arith.constant 0 : index
    %c0_0 = arith.constant 0 : index
    %0 = vector.load %arg2[%c0, %c0_0] : memref<1x6xf32, #tpu.memory_space<vmem>>, vector<1x6xf32>
    %1 = vector.shape_cast %0 : vector<1x6xf32> to vector<1x1x6xf32>
    %c0_1 = arith.constant 0 : index
    %c0_2 = arith.constant 0 : index
    %2 = vector.load %arg3[%c0_1, %c0_2] : memref<1x6xf32, #tpu.memory_space<vmem>>, vector<1x6xf32>
    %3 = vector.shape_cast %2 : vector<1x6xf32> to vector<1x1x6xf32>
    %c0_3 = arith.constant 0 : index
    %c0_4 = arith.constant 0 : index
    %c0_5 = arith.constant 0 : index
    %c0_6 = arith.constant 0 : index
    %c0_7 = arith.constant 0 : index
    %4 = vector.load %arg1[%c0_3, %c0_4, %c0_5, %c0_6, %c0_7] : memref<1x1x8x8x6xf32, #tpu.memory_space<vmem>>, vector<1x1x8x8x6xf32>
    %5 = vector.shape_cast %4 : vector<1x1x8x8x6xf32> to vector<8x8x6xf32>
    %6 = vector.broadcast %1 : vector<1x1x6xf32> to vector<8x8x6xf32>
    %7 = arith.mulf %5, %6 : vector<8x8x6xf32>
    %8 = vector.broadcast %3 : vector<1x1x6xf32> to vector<8x8x6xf32>
    %9 = arith.addf %7, %8 : vector<8x8x6xf32>
    %cst = arith.constant 0.000000e+00 : f32
    %10 = vector.broadcast %cst : f32 to vector<8x8x6xf32>
    %11 = arith.maximumf %9, %10 : vector<8x8x6xf32>
    %cst_8 = arith.constant 0.000000e+00 : f32
    %12 = vector.broadcast %cst_8 : f32 to vector<1x10x6xf32>
    %cst_9 = arith.constant 0.000000e+00 : f32
    %13 = vector.broadcast %cst_9 : f32 to vector<8x1x6xf32>
    %c0_10 = arith.constant 0 : index
    %c0_11 = arith.constant 0 : index
    %c0_12 = arith.constant 0 : index
    %14 = vector.load %arg7[%c0_10, %c0_11, %c0_12] : memref<10x10x6xf32, #tpu.memory_space<vmem>>, vector<1x10x6xf32>
    tpu.vector_store %arg7[%c0_10, %c0_11, %c0_12], %12 {strides = array<i32>} : memref<10x10x6xf32, #tpu.memory_space<vmem>>, vector<1x10x6xf32>,
    %c9 = arith.constant 9 : index
    %c0_13 = arith.constant 0 : index
    %c0_14 = arith.constant 0 : index
    %15 = vector.load %arg7[%c9, %c0_13, %c0_14] : memref<10x10x6xf32, #tpu.memory_space<vmem>>, vector<1x10x6xf32>
    tpu.vector_store %arg7[%c9, %c0_13, %c0_14], %12 {strides = array<i32>} : memref<10x10x6xf32, #tpu.memory_space<vmem>>, vector<1x10x6xf32>,
    %c1 = arith.constant 1 : index
    %c0_15 = arith.constant 0 : index
    %c0_16 = arith.constant 0 : index
    %16 = vector.load %arg7[%c1, %c0_15, %c0_16] : memref<10x10x6xf32, #tpu.memory_space<vmem>>, vector<8x1x6xf32>
    tpu.vector_store %arg7[%c1, %c0_15, %c0_16], %13 {strides = array<i32>} : memref<10x10x6xf32, #tpu.memory_space<vmem>>, vector<8x1x6xf32>,
    %c1_17 = arith.constant 1 : index
    %c9_18 = arith.constant 9 : index
    %c0_19 = arith.constant 0 : index
    %17 = vector.load %arg7[%c1_17, %c9_18, %c0_19] : memref<10x10x6xf32, #tpu.memory_space<vmem>>, vector<8x1x6xf32>
    tpu.vector_store %arg7[%c1_17, %c9_18, %c0_19], %13 {strides = array<i32>} : memref<10x10x6xf32, #tpu.memory_space<vmem>>, vector<8x1x6xf32>,
    %c1_20 = arith.constant 1 : index
    %c1_21 = arith.constant 1 : index
    %c0_22 = arith.constant 0 : index
    %18 = vector.load %arg7[%c1_20, %c1_21, %c0_22] : memref<10x10x6xf32, #tpu.memory_space<vmem>>, vector<8x8x6xf32>
    tpu.vector_store %arg7[%c1_20, %c1_21, %c0_22], %11 {strides = array<i32>} : memref<10x10x6xf32, #tpu.memory_space<vmem>>, vector<8x8x6xf32>,
    %c0_23 = arith.constant 0 : index
    %c0_24 = arith.constant 0 : index
    %c0_25 = arith.constant 0 : index
    %19 = vector.load %arg7[%c0_23, %c0_24, %c0_25] : memref<10x10x6xf32, #tpu.memory_space<vmem>>, vector<8x8x6xf32>
    %20 = vector.shape_cast %19 : vector<8x8x6xf32> to vector<64x6xf32>
    %c0_26 = arith.constant 0 : index
    %c1_27 = arith.constant 1 : index
    %c0_28 = arith.constant 0 : index
    %21 = vector.load %arg7[%c0_26, %c1_27, %c0_28] : memref<10x10x6xf32, #tpu.memory_space<vmem>>, vector<8x8x6xf32>
    %22 = vector.shape_cast %21 : vector<8x8x6xf32> to vector<64x6xf32>
    %c0_29 = arith.constant 0 : index
    %c2 = arith.constant 2 : index
    %c0_30 = arith.constant 0 : index
    %23 = vector.load %arg7[%c0_29, %c2, %c0_30] : memref<10x10x6xf32, #tpu.memory_space<vmem>>, vector<8x8x6xf32>
    %24 = vector.shape_cast %23 : vector<8x8x6xf32> to vector<64x6xf32>
    %c1_31 = arith.constant 1 : index
    %c0_32 = arith.constant 0 : index
    %c0_33 = arith.constant 0 : index
    %25 = vector.load %arg7[%c1_31, %c0_32, %c0_33] : memref<10x10x6xf32, #tpu.memory_space<vmem>>, vector<8x8x6xf32>
    %26 = vector.shape_cast %25 : vector<8x8x6xf32> to vector<64x6xf32>
    %c1_34 = arith.constant 1 : index
    %c1_35 = arith.constant 1 : index
    %c0_36 = arith.constant 0 : index
    %27 = vector.load %arg7[%c1_34, %c1_35, %c0_36] : memref<10x10x6xf32, #tpu.memory_space<vmem>>, vector<8x8x6xf32>
    %28 = vector.shape_cast %27 : vector<8x8x6xf32> to vector<64x6xf32>
    %c1_37 = arith.constant 1 : index
    %c2_38 = arith.constant 2 : index
    %c0_39 = arith.constant 0 : index
    %29 = vector.load %arg7[%c1_37, %c2_38, %c0_39] : memref<10x10x6xf32, #tpu.memory_space<vmem>>, vector<8x8x6xf32>
    %30 = vector.shape_cast %29 : vector<8x8x6xf32> to vector<64x6xf32>
    %c2_40 = arith.constant 2 : index
    %c0_41 = arith.constant 0 : index
    %c0_42 = arith.constant 0 : index
    %31 = vector.load %arg7[%c2_40, %c0_41, %c0_42] : memref<10x10x6xf32, #tpu.memory_space<vmem>>, vector<8x8x6xf32>
    %32 = vector.shape_cast %31 : vector<8x8x6xf32> to vector<64x6xf32>
    %c2_43 = arith.constant 2 : index
    %c1_44 = arith.constant 1 : index
    %c0_45 = arith.constant 0 : index
    %33 = vector.load %arg7[%c2_43, %c1_44, %c0_45] : memref<10x10x6xf32, #tpu.memory_space<vmem>>, vector<8x8x6xf32>
    %34 = vector.shape_cast %33 : vector<8x8x6xf32> to vector<64x6xf32>
    %c2_46 = arith.constant 2 : index
    %c2_47 = arith.constant 2 : index
    %c0_48 = arith.constant 0 : index
    %35 = vector.load %arg7[%c2_46, %c2_47, %c0_48] : memref<10x10x6xf32, #tpu.memory_space<vmem>>, vector<8x8x6xf32>
    %36 = vector.shape_cast %35 : vector<8x8x6xf32> to vector<64x6xf32>
    %37 = tpu.concatenate %20, %22, %24, %26, %28, %30, %32, %34, %36 in 1 : vector<64x6xf32>, vector<64x6xf32>, vector<64x6xf32>, vector<64x6xf32>, vector<64x6xf32>, vector<64x6xf32>, vector<64x6xf32>, vector<64x6xf32>, vector<64x6xf32> -> vector<64x54xf32>
    %38 = arith.truncf %37 : vector<64x54xf32> to vector<64x54xbf16>
    %c0_49 = arith.constant 0 : index
    %c0_50 = arith.constant 0 : index
    %39 = vector.load %arg4[%c0_49, %c0_50] : memref<54x6xbf16, #tpu.memory_space<vmem>>, vector<54x6xbf16>
    %cst_51 = arith.constant dense<0.000000e+00> : vector<64x6xf32>
    %40 = tpu.matmul %38, %39, %cst_51 {dimension_numbers = #tpu.dot_dimension_numbers<[1], [0], [0], [1], [0, 0, 1, 1], [], []>} : vector<64x54xbf16>, vector<54x6xbf16>, vector<64x6xf32> -> vector<64x6xf32>
    %41 = vector.shape_cast %40 : vector<64x6xf32> to vector<8x8x6xf32>
    %c0_52 = arith.constant 0 : index
    %c0_53 = arith.constant 0 : index
    %c0_54 = arith.constant 0 : index
    %c0_55 = arith.constant 0 : index
    %42 = vector.load %arg5[%c0_52, %c0_53, %c0_54, %c0_55] : memref<1x8x8x6xf32, #tpu.memory_space<vmem>>, vector<1x8x8x6xf32>
    %43 = vector.shape_cast %42 : vector<1x8x8x6xf32> to vector<8x8x6xf32>
    %44 = vector.shape_cast %41 : vector<8x8x6xf32> to vector<1x8x8x6xf32>
    tpu.vector_store %arg5[%c0_52, %c0_53, %c0_54, %c0_55], %44 {strides = array<i32>} : memref<1x8x8x6xf32, #tpu.memory_space<vmem>>, vector<1x8x8x6xf32>,
    %cst_56 = arith.constant dense<0.000000e+00> : vector<6xf32>
    %45 = vector.multi_reduction <add>, %40, %cst_56 [0] : vector<64x6xf32> to vector<6xf32>
    %46 = vector.shape_cast %45 : vector<6xf32> to vector<1x6xf32>
    %c0_57 = arith.constant 0 : index
    %c0_58 = arith.constant 0 : index
    %c0_59 = arith.constant 0 : index
    %47 = vector.load %arg6[%c0_57, %c0_58, %c0_59] : memref<1x2x6xf32, #tpu.memory_space<vmem>>, vector<1x1x6xf32>
    %48 = vector.shape_cast %47 : vector<1x1x6xf32> to vector<1x6xf32>
    %49 = vector.shape_cast %46 : vector<1x6xf32> to vector<1x1x6xf32>
    tpu.vector_store %arg6[%c0_57, %c0_58, %c0_59], %49 {strides = array<i32>} : memref<1x2x6xf32, #tpu.memory_space<vmem>>, vector<1x1x6xf32>,
    %50 = arith.mulf %40, %40 : vector<64x6xf32>
    %cst_60 = arith.constant dense<0.000000e+00> : vector<6xf32>
    %51 = vector.multi_reduction <add>, %50, %cst_60 [0] : vector<64x6xf32> to vector<6xf32>
    %52 = vector.shape_cast %51 : vector<6xf32> to vector<1x6xf32>
    %c0_61 = arith.constant 0 : index
    %c1_62 = arith.constant 1 : index
    %c0_63 = arith.constant 0 : index
    %53 = vector.load %arg6[%c0_61, %c1_62, %c0_63] : memref<1x2x6xf32, #tpu.memory_space<vmem>>, vector<1x1x6xf32>
    %54 = vector.shape_cast %53 : vector<1x1x6xf32> to vector<1x6xf32>
    %55 = vector.shape_cast %52 : vector<1x6xf32> to vector<1x1x6xf32>
    tpu.vector_store %arg6[%c0_61, %c1_62, %c0_63], %55 {strides = array<i32>} : memref<1x2x6xf32, #tpu.memory_space<vmem>>, vector<1x1x6xf32>,
    return
  }
  func.func @transform_0(%arg0: i32) -> (i32, i32, i32, i32, i32) {
    %c0_i32 = arith.constant 0 : i32
    %c0_i32_0 = arith.constant 0 : i32
    %c0_i32_1 = arith.constant 0 : i32
    %c0_i32_2 = arith.constant 0 : i32
    %c0_i32_3 = arith.constant 0 : i32
    return %c0_i32, %arg0, %c0_i32_0, %c0_i32_1, %c0_i32_2 : i32, i32, i32, i32, i32
  }
  func.func @transform_1(%arg0: i32) -> (i32, i32) {
    %c0_i32 = arith.constant 0 : i32
    %c0_i32_0 = arith.constant 0 : i32
    %c0_i32_1 = arith.constant 0 : i32
    return %c0_i32, %c0_i32_0 : i32, i32
  }
  func.func @transform_2(%arg0: i32) -> (i32, i32) {
    %c0_i32 = arith.constant 0 : i32
    %c0_i32_0 = arith.constant 0 : i32
    %c0_i32_1 = arith.constant 0 : i32
    return %c0_i32, %c0_i32_0 : i32, i32
  }
  func.func @transform_3(%arg0: i32) -> (i32, i32) {
    %c0_i32 = arith.constant 0 : i32
    %c0_i32_0 = arith.constant 0 : i32
    %c0_i32_1 = arith.constant 0 : i32
    return %c0_i32, %c0_i32_0 : i32, i32
  }
  func.func @transform_4(%arg0: i32) -> (i32, i32, i32, i32) {
    %c0_i32 = arith.constant 0 : i32
    %c0_i32_0 = arith.constant 0 : i32
    %c0_i32_1 = arith.constant 0 : i32
    %c0_i32_2 = arith.constant 0 : i32
    return %arg0, %c0_i32, %c0_i32_0, %c0_i32_1 : i32, i32, i32, i32
  }
  func.func @transform_5(%arg0: i32) -> (i32, i32, i32) {
    %c0_i32 = arith.constant 0 : i32
    %c0_i32_0 = arith.constant 0 : i32
    %c0_i32_1 = arith.constant 0 : i32
    return %arg0, %c0_i32, %c0_i32_0 : i32, i32, i32
  }
}

module attributes {stable_mosaic.version = 11 : i64} {
  func.func @_branch_kernel(%arg0: i32, %arg1: memref<1x1x8x8x6xf32, #tpu.memory_space<vmem>>, %arg2: memref<1x6xf32, #tpu.memory_space<vmem>>, %arg3: memref<1x6xf32, #tpu.memory_space<vmem>>, %arg4: memref<1x8x8x6xf32, #tpu.memory_space<vmem>>, %arg5: memref<1x6xf32, #tpu.memory_space<vmem>>, %arg6: memref<1x6xf32, #tpu.memory_space<vmem>>, %arg7: memref<54x6xbf16, #tpu.memory_space<vmem>>, %arg8: memref<1x8x8x6xf32, #tpu.memory_space<vmem>>, %arg9: memref<1x2x6xf32, #tpu.memory_space<vmem>>, %arg10: memref<10x10x6xf32, #tpu.memory_space<vmem>>) attributes {dimension_semantics = [#tpu.dimension_semantics<parallel>], iteration_bounds = array<i64: 2>, scalar_prefetch = 0 : i64, scratch_operands = 1 : i64, tpu.core_type = #tpu.core_type<tc>, window_params = [{transform_indices = @transform_0, window_bounds = array<i64: 1, 1, 8, 8, 6>}, {pipeline_mode = #tpu.pipeline_mode<synchronous>, transform_indices = @transform_1, window_bounds = array<i64: 1, 6>}, {pipeline_mode = #tpu.pipeline_mode<synchronous>, transform_indices = @transform_2, window_bounds = array<i64: 1, 6>}, {transform_indices = @transform_3, window_bounds = array<i64: 1, 8, 8, 6>}, {pipeline_mode = #tpu.pipeline_mode<synchronous>, transform_indices = @transform_4, window_bounds = array<i64: 1, 6>}, {pipeline_mode = #tpu.pipeline_mode<synchronous>, transform_indices = @transform_5, window_bounds = array<i64: 1, 6>}, {pipeline_mode = #tpu.pipeline_mode<synchronous>, transform_indices = @transform_6, window_bounds = array<i64: 54, 6>}, {transform_indices = @transform_7, window_bounds = array<i64: 1, 8, 8, 6>}, {transform_indices = @transform_8, window_bounds = array<i64: 1, 2, 6>}]} {
    %c0 = arith.constant 0 : index
    %c0_0 = arith.constant 0 : index
    %0 = vector.load %arg2[%c0, %c0_0] : memref<1x6xf32, #tpu.memory_space<vmem>>, vector<1x6xf32>
    %1 = vector.shape_cast %0 : vector<1x6xf32> to vector<1x1x6xf32>
    %c0_1 = arith.constant 0 : index
    %c0_2 = arith.constant 0 : index
    %2 = vector.load %arg3[%c0_1, %c0_2] : memref<1x6xf32, #tpu.memory_space<vmem>>, vector<1x6xf32>
    %3 = vector.shape_cast %2 : vector<1x6xf32> to vector<1x1x6xf32>
    %c0_3 = arith.constant 0 : index
    %c0_4 = arith.constant 0 : index
    %c0_5 = arith.constant 0 : index
    %c0_6 = arith.constant 0 : index
    %c0_7 = arith.constant 0 : index
    %4 = vector.load %arg1[%c0_3, %c0_4, %c0_5, %c0_6, %c0_7] : memref<1x1x8x8x6xf32, #tpu.memory_space<vmem>>, vector<1x1x8x8x6xf32>
    %5 = vector.shape_cast %4 : vector<1x1x8x8x6xf32> to vector<8x8x6xf32>
    %6 = vector.broadcast %1 : vector<1x1x6xf32> to vector<8x8x6xf32>
    %7 = arith.mulf %5, %6 : vector<8x8x6xf32>
    %8 = vector.broadcast %3 : vector<1x1x6xf32> to vector<8x8x6xf32>
    %9 = arith.addf %7, %8 : vector<8x8x6xf32>
    %cst = arith.constant 0.000000e+00 : f32
    %10 = vector.broadcast %cst : f32 to vector<8x8x6xf32>
    %11 = arith.maximumf %9, %10 : vector<8x8x6xf32>
    %c0_8 = arith.constant 0 : index
    %c0_9 = arith.constant 0 : index
    %12 = vector.load %arg5[%c0_8, %c0_9] : memref<1x6xf32, #tpu.memory_space<vmem>>, vector<1x6xf32>
    %13 = vector.shape_cast %12 : vector<1x6xf32> to vector<1x1x6xf32>
    %c0_10 = arith.constant 0 : index
    %c0_11 = arith.constant 0 : index
    %14 = vector.load %arg6[%c0_10, %c0_11] : memref<1x6xf32, #tpu.memory_space<vmem>>, vector<1x6xf32>
    %15 = vector.shape_cast %14 : vector<1x6xf32> to vector<1x1x6xf32>
    %c0_12 = arith.constant 0 : index
    %c0_13 = arith.constant 0 : index
    %c0_14 = arith.constant 0 : index
    %c0_15 = arith.constant 0 : index
    %16 = vector.load %arg4[%c0_12, %c0_13, %c0_14, %c0_15] : memref<1x8x8x6xf32, #tpu.memory_space<vmem>>, vector<1x8x8x6xf32>
    %17 = vector.shape_cast %16 : vector<1x8x8x6xf32> to vector<8x8x6xf32>
    %18 = vector.broadcast %13 : vector<1x1x6xf32> to vector<8x8x6xf32>
    %19 = arith.mulf %17, %18 : vector<8x8x6xf32>
    %20 = vector.broadcast %15 : vector<1x1x6xf32> to vector<8x8x6xf32>
    %21 = arith.addf %19, %20 : vector<8x8x6xf32>
    %cst_16 = arith.constant 0.000000e+00 : f32
    %22 = vector.broadcast %cst_16 : f32 to vector<8x8x6xf32>
    %23 = arith.maximumf %21, %22 : vector<8x8x6xf32>
    %24 = arith.addf %11, %23 : vector<8x8x6xf32>
    %cst_17 = arith.constant 0.000000e+00 : f32
    %25 = vector.broadcast %cst_17 : f32 to vector<1x10x6xf32>
    %cst_18 = arith.constant 0.000000e+00 : f32
    %26 = vector.broadcast %cst_18 : f32 to vector<8x1x6xf32>
    %c0_19 = arith.constant 0 : index
    %c0_20 = arith.constant 0 : index
    %c0_21 = arith.constant 0 : index
    %27 = vector.load %arg10[%c0_19, %c0_20, %c0_21] : memref<10x10x6xf32, #tpu.memory_space<vmem>>, vector<1x10x6xf32>
    tpu.vector_store %arg10[%c0_19, %c0_20, %c0_21], %25 {strides = array<i32>} : memref<10x10x6xf32, #tpu.memory_space<vmem>>, vector<1x10x6xf32>,
    %c9 = arith.constant 9 : index
    %c0_22 = arith.constant 0 : index
    %c0_23 = arith.constant 0 : index
    %28 = vector.load %arg10[%c9, %c0_22, %c0_23] : memref<10x10x6xf32, #tpu.memory_space<vmem>>, vector<1x10x6xf32>
    tpu.vector_store %arg10[%c9, %c0_22, %c0_23], %25 {strides = array<i32>} : memref<10x10x6xf32, #tpu.memory_space<vmem>>, vector<1x10x6xf32>,
    %c1 = arith.constant 1 : index
    %c0_24 = arith.constant 0 : index
    %c0_25 = arith.constant 0 : index
    %29 = vector.load %arg10[%c1, %c0_24, %c0_25] : memref<10x10x6xf32, #tpu.memory_space<vmem>>, vector<8x1x6xf32>
    tpu.vector_store %arg10[%c1, %c0_24, %c0_25], %26 {strides = array<i32>} : memref<10x10x6xf32, #tpu.memory_space<vmem>>, vector<8x1x6xf32>,
    %c1_26 = arith.constant 1 : index
    %c9_27 = arith.constant 9 : index
    %c0_28 = arith.constant 0 : index
    %30 = vector.load %arg10[%c1_26, %c9_27, %c0_28] : memref<10x10x6xf32, #tpu.memory_space<vmem>>, vector<8x1x6xf32>
    tpu.vector_store %arg10[%c1_26, %c9_27, %c0_28], %26 {strides = array<i32>} : memref<10x10x6xf32, #tpu.memory_space<vmem>>, vector<8x1x6xf32>,
    %c1_29 = arith.constant 1 : index
    %c1_30 = arith.constant 1 : index
    %c0_31 = arith.constant 0 : index
    %31 = vector.load %arg10[%c1_29, %c1_30, %c0_31] : memref<10x10x6xf32, #tpu.memory_space<vmem>>, vector<8x8x6xf32>
    tpu.vector_store %arg10[%c1_29, %c1_30, %c0_31], %24 {strides = array<i32>} : memref<10x10x6xf32, #tpu.memory_space<vmem>>, vector<8x8x6xf32>,
    %c0_32 = arith.constant 0 : index
    %c0_33 = arith.constant 0 : index
    %c0_34 = arith.constant 0 : index
    %32 = vector.load %arg10[%c0_32, %c0_33, %c0_34] : memref<10x10x6xf32, #tpu.memory_space<vmem>>, vector<8x8x6xf32>
    %33 = vector.shape_cast %32 : vector<8x8x6xf32> to vector<64x6xf32>
    %c0_35 = arith.constant 0 : index
    %c1_36 = arith.constant 1 : index
    %c0_37 = arith.constant 0 : index
    %34 = vector.load %arg10[%c0_35, %c1_36, %c0_37] : memref<10x10x6xf32, #tpu.memory_space<vmem>>, vector<8x8x6xf32>
    %35 = vector.shape_cast %34 : vector<8x8x6xf32> to vector<64x6xf32>
    %c0_38 = arith.constant 0 : index
    %c2 = arith.constant 2 : index
    %c0_39 = arith.constant 0 : index
    %36 = vector.load %arg10[%c0_38, %c2, %c0_39] : memref<10x10x6xf32, #tpu.memory_space<vmem>>, vector<8x8x6xf32>
    %37 = vector.shape_cast %36 : vector<8x8x6xf32> to vector<64x6xf32>
    %c1_40 = arith.constant 1 : index
    %c0_41 = arith.constant 0 : index
    %c0_42 = arith.constant 0 : index
    %38 = vector.load %arg10[%c1_40, %c0_41, %c0_42] : memref<10x10x6xf32, #tpu.memory_space<vmem>>, vector<8x8x6xf32>
    %39 = vector.shape_cast %38 : vector<8x8x6xf32> to vector<64x6xf32>
    %c1_43 = arith.constant 1 : index
    %c1_44 = arith.constant 1 : index
    %c0_45 = arith.constant 0 : index
    %40 = vector.load %arg10[%c1_43, %c1_44, %c0_45] : memref<10x10x6xf32, #tpu.memory_space<vmem>>, vector<8x8x6xf32>
    %41 = vector.shape_cast %40 : vector<8x8x6xf32> to vector<64x6xf32>
    %c1_46 = arith.constant 1 : index
    %c2_47 = arith.constant 2 : index
    %c0_48 = arith.constant 0 : index
    %42 = vector.load %arg10[%c1_46, %c2_47, %c0_48] : memref<10x10x6xf32, #tpu.memory_space<vmem>>, vector<8x8x6xf32>
    %43 = vector.shape_cast %42 : vector<8x8x6xf32> to vector<64x6xf32>
    %c2_49 = arith.constant 2 : index
    %c0_50 = arith.constant 0 : index
    %c0_51 = arith.constant 0 : index
    %44 = vector.load %arg10[%c2_49, %c0_50, %c0_51] : memref<10x10x6xf32, #tpu.memory_space<vmem>>, vector<8x8x6xf32>
    %45 = vector.shape_cast %44 : vector<8x8x6xf32> to vector<64x6xf32>
    %c2_52 = arith.constant 2 : index
    %c1_53 = arith.constant 1 : index
    %c0_54 = arith.constant 0 : index
    %46 = vector.load %arg10[%c2_52, %c1_53, %c0_54] : memref<10x10x6xf32, #tpu.memory_space<vmem>>, vector<8x8x6xf32>
    %47 = vector.shape_cast %46 : vector<8x8x6xf32> to vector<64x6xf32>
    %c2_55 = arith.constant 2 : index
    %c2_56 = arith.constant 2 : index
    %c0_57 = arith.constant 0 : index
    %48 = vector.load %arg10[%c2_55, %c2_56, %c0_57] : memref<10x10x6xf32, #tpu.memory_space<vmem>>, vector<8x8x6xf32>
    %49 = vector.shape_cast %48 : vector<8x8x6xf32> to vector<64x6xf32>
    %50 = tpu.concatenate %33, %35, %37, %39, %41, %43, %45, %47, %49 in 1 : vector<64x6xf32>, vector<64x6xf32>, vector<64x6xf32>, vector<64x6xf32>, vector<64x6xf32>, vector<64x6xf32>, vector<64x6xf32>, vector<64x6xf32>, vector<64x6xf32> -> vector<64x54xf32>
    %51 = arith.truncf %50 : vector<64x54xf32> to vector<64x54xbf16>
    %c0_58 = arith.constant 0 : index
    %c0_59 = arith.constant 0 : index
    %52 = vector.load %arg7[%c0_58, %c0_59] : memref<54x6xbf16, #tpu.memory_space<vmem>>, vector<54x6xbf16>
    %cst_60 = arith.constant dense<0.000000e+00> : vector<64x6xf32>
    %53 = tpu.matmul %51, %52, %cst_60 {dimension_numbers = #tpu.dot_dimension_numbers<[1], [0], [0], [1], [0, 0, 1, 1], [], []>} : vector<64x54xbf16>, vector<54x6xbf16>, vector<64x6xf32> -> vector<64x6xf32>
    %54 = vector.shape_cast %53 : vector<64x6xf32> to vector<8x8x6xf32>
    %c0_61 = arith.constant 0 : index
    %c0_62 = arith.constant 0 : index
    %c0_63 = arith.constant 0 : index
    %c0_64 = arith.constant 0 : index
    %55 = vector.load %arg8[%c0_61, %c0_62, %c0_63, %c0_64] : memref<1x8x8x6xf32, #tpu.memory_space<vmem>>, vector<1x8x8x6xf32>
    %56 = vector.shape_cast %55 : vector<1x8x8x6xf32> to vector<8x8x6xf32>
    %57 = vector.shape_cast %54 : vector<8x8x6xf32> to vector<1x8x8x6xf32>
    tpu.vector_store %arg8[%c0_61, %c0_62, %c0_63, %c0_64], %57 {strides = array<i32>} : memref<1x8x8x6xf32, #tpu.memory_space<vmem>>, vector<1x8x8x6xf32>,
    %cst_65 = arith.constant dense<0.000000e+00> : vector<6xf32>
    %58 = vector.multi_reduction <add>, %53, %cst_65 [0] : vector<64x6xf32> to vector<6xf32>
    %59 = vector.shape_cast %58 : vector<6xf32> to vector<1x6xf32>
    %c0_66 = arith.constant 0 : index
    %c0_67 = arith.constant 0 : index
    %c0_68 = arith.constant 0 : index
    %60 = vector.load %arg9[%c0_66, %c0_67, %c0_68] : memref<1x2x6xf32, #tpu.memory_space<vmem>>, vector<1x1x6xf32>
    %61 = vector.shape_cast %60 : vector<1x1x6xf32> to vector<1x6xf32>
    %62 = vector.shape_cast %59 : vector<1x6xf32> to vector<1x1x6xf32>
    tpu.vector_store %arg9[%c0_66, %c0_67, %c0_68], %62 {strides = array<i32>} : memref<1x2x6xf32, #tpu.memory_space<vmem>>, vector<1x1x6xf32>,
    %63 = arith.mulf %53, %53 : vector<64x6xf32>
    %cst_69 = arith.constant dense<0.000000e+00> : vector<6xf32>
    %64 = vector.multi_reduction <add>, %63, %cst_69 [0] : vector<64x6xf32> to vector<6xf32>
    %65 = vector.shape_cast %64 : vector<6xf32> to vector<1x6xf32>
    %c0_70 = arith.constant 0 : index
    %c1_71 = arith.constant 1 : index
    %c0_72 = arith.constant 0 : index
    %66 = vector.load %arg9[%c0_70, %c1_71, %c0_72] : memref<1x2x6xf32, #tpu.memory_space<vmem>>, vector<1x1x6xf32>
    %67 = vector.shape_cast %66 : vector<1x1x6xf32> to vector<1x6xf32>
    %68 = vector.shape_cast %65 : vector<1x6xf32> to vector<1x1x6xf32>
    tpu.vector_store %arg9[%c0_70, %c1_71, %c0_72], %68 {strides = array<i32>} : memref<1x2x6xf32, #tpu.memory_space<vmem>>, vector<1x1x6xf32>,
    return
  }
  func.func @transform_0(%arg0: i32) -> (i32, i32, i32, i32, i32) {
    %c2_i32 = arith.constant 2 : i32
    %c0_i32 = arith.constant 0 : i32
    %c0_i32_0 = arith.constant 0 : i32
    %c0_i32_1 = arith.constant 0 : i32
    %c0_i32_2 = arith.constant 0 : i32
    return %c2_i32, %arg0, %c0_i32, %c0_i32_0, %c0_i32_1 : i32, i32, i32, i32, i32
  }
  func.func @transform_1(%arg0: i32) -> (i32, i32) {
    %c0_i32 = arith.constant 0 : i32
    %c0_i32_0 = arith.constant 0 : i32
    %c0_i32_1 = arith.constant 0 : i32
    return %c0_i32, %c0_i32_0 : i32, i32
  }
  func.func @transform_2(%arg0: i32) -> (i32, i32) {
    %c0_i32 = arith.constant 0 : i32
    %c0_i32_0 = arith.constant 0 : i32
    %c0_i32_1 = arith.constant 0 : i32
    return %c0_i32, %c0_i32_0 : i32, i32
  }
  func.func @transform_3(%arg0: i32) -> (i32, i32, i32, i32) {
    %c0_i32 = arith.constant 0 : i32
    %c0_i32_0 = arith.constant 0 : i32
    %c0_i32_1 = arith.constant 0 : i32
    %c0_i32_2 = arith.constant 0 : i32
    return %arg0, %c0_i32, %c0_i32_0, %c0_i32_1 : i32, i32, i32, i32
  }
  func.func @transform_4(%arg0: i32) -> (i32, i32) {
    %c0_i32 = arith.constant 0 : i32
    %c0_i32_0 = arith.constant 0 : i32
    %c0_i32_1 = arith.constant 0 : i32
    return %c0_i32, %c0_i32_0 : i32, i32
  }
  func.func @transform_5(%arg0: i32) -> (i32, i32) {
    %c0_i32 = arith.constant 0 : i32
    %c0_i32_0 = arith.constant 0 : i32
    %c0_i32_1 = arith.constant 0 : i32
    return %c0_i32, %c0_i32_0 : i32, i32
  }
  func.func @transform_6(%arg0: i32) -> (i32, i32) {
    %c0_i32 = arith.constant 0 : i32
    %c0_i32_0 = arith.constant 0 : i32
    %c0_i32_1 = arith.constant 0 : i32
    return %c0_i32, %c0_i32_0 : i32, i32
  }
  func.func @transform_7(%arg0: i32) -> (i32, i32, i32, i32) {
    %c0_i32 = arith.constant 0 : i32
    %c0_i32_0 = arith.constant 0 : i32
    %c0_i32_1 = arith.constant 0 : i32
    %c0_i32_2 = arith.constant 0 : i32
    return %arg0, %c0_i32, %c0_i32_0, %c0_i32_1 : i32, i32, i32, i32
  }
  func.func @transform_8(%arg0: i32) -> (i32, i32, i32) {
    %c0_i32 = arith.constant 0 : i32
    %c0_i32_0 = arith.constant 0 : i32
    %c0_i32_1 = arith.constant 0 : i32
    return %arg0, %c0_i32, %c0_i32_0 : i32, i32, i32
  }
}

module attributes {stable_mosaic.version = 11 : i64} {
  func.func @_conv3_kernel(%arg0: i32, %arg1: memref<1x128x6xf32, #tpu.memory_space<vmem>>, %arg2: memref<1x6xf32, #tpu.memory_space<vmem>>, %arg3: memref<1x6xf32, #tpu.memory_space<vmem>>, %arg4: memref<128x6xf32, #tpu.memory_space<vmem>>, %arg5: memref<1x6xf32, #tpu.memory_space<vmem>>, %arg6: memref<1x6xf32, #tpu.memory_space<vmem>>, %arg7: memref<128x6xf32, #tpu.memory_space<vmem>>, %arg8: memref<1x6xf32, #tpu.memory_space<vmem>>, %arg9: memref<1x6xf32, #tpu.memory_space<vmem>>, %arg10: memref<128x6xf32, #tpu.memory_space<vmem>>, %arg11: memref<1x6xf32, #tpu.memory_space<vmem>>, %arg12: memref<1x6xf32, #tpu.memory_space<vmem>>, %arg13: memref<24x64xbf16, #tpu.memory_space<vmem>>, %arg14: memref<128x64xf32, #tpu.memory_space<vmem>>, %arg15: memref<1x2x64xf32, #tpu.memory_space<vmem>>) attributes {dimension_semantics = [#tpu.dimension_semantics<parallel>], iteration_bounds = array<i64: 1>, scalar_prefetch = 0 : i64, scratch_operands = 0 : i64, tpu.core_type = #tpu.core_type<tc>, window_params = [{transform_indices = @transform_0, window_bounds = array<i64: 1, 128, 6>}, {pipeline_mode = #tpu.pipeline_mode<synchronous>, transform_indices = @transform_1, window_bounds = array<i64: 1, 6>}, {pipeline_mode = #tpu.pipeline_mode<synchronous>, transform_indices = @transform_2, window_bounds = array<i64: 1, 6>}, {transform_indices = @transform_3, window_bounds = array<i64: 128, 6>}, {pipeline_mode = #tpu.pipeline_mode<synchronous>, transform_indices = @transform_4, window_bounds = array<i64: 1, 6>}, {pipeline_mode = #tpu.pipeline_mode<synchronous>, transform_indices = @transform_5, window_bounds = array<i64: 1, 6>}, {transform_indices = @transform_6, window_bounds = array<i64: 128, 6>}, {pipeline_mode = #tpu.pipeline_mode<synchronous>, transform_indices = @transform_7, window_bounds = array<i64: 1, 6>}, {pipeline_mode = #tpu.pipeline_mode<synchronous>, transform_indices = @transform_8, window_bounds = array<i64: 1, 6>}, {transform_indices = @transform_9, window_bounds = array<i64: 128, 6>}, {pipeline_mode = #tpu.pipeline_mode<synchronous>, transform_indices = @transform_10, window_bounds = array<i64: 1, 6>}, {pipeline_mode = #tpu.pipeline_mode<synchronous>, transform_indices = @transform_11, window_bounds = array<i64: 1, 6>}, {pipeline_mode = #tpu.pipeline_mode<synchronous>, transform_indices = @transform_12, window_bounds = array<i64: 24, 64>}, {transform_indices = @transform_13, window_bounds = array<i64: 128, 64>}, {transform_indices = @transform_14, window_bounds = array<i64: 1, 2, 64>}]} {
    %c0 = arith.constant 0 : index
    %c0_0 = arith.constant 0 : index
    %0 = vector.load %arg4[%c0, %c0_0] : memref<128x6xf32, #tpu.memory_space<vmem>>, vector<128x6xf32>
    %c0_1 = arith.constant 0 : index
    %c0_2 = arith.constant 0 : index
    %1 = vector.load %arg5[%c0_1, %c0_2] : memref<1x6xf32, #tpu.memory_space<vmem>>, vector<1x6xf32>
    %2 = vector.broadcast %1 : vector<1x6xf32> to vector<128x6xf32>
    %3 = arith.mulf %0, %2 : vector<128x6xf32>
    %c0_3 = arith.constant 0 : index
    %c0_4 = arith.constant 0 : index
    %4 = vector.load %arg6[%c0_3, %c0_4] : memref<1x6xf32, #tpu.memory_space<vmem>>, vector<1x6xf32>
    %5 = vector.broadcast %4 : vector<1x6xf32> to vector<128x6xf32>
    %6 = arith.addf %3, %5 : vector<128x6xf32>
    %cst = arith.constant 0.000000e+00 : f32
    %7 = vector.broadcast %cst : f32 to vector<128x6xf32>
    %8 = arith.maximumf %6, %7 : vector<128x6xf32>
    %c0_5 = arith.constant 0 : index
    %c0_6 = arith.constant 0 : index
    %9 = vector.load %arg7[%c0_5, %c0_6] : memref<128x6xf32, #tpu.memory_space<vmem>>, vector<128x6xf32>
    %c0_7 = arith.constant 0 : index
    %c0_8 = arith.constant 0 : index
    %10 = vector.load %arg8[%c0_7, %c0_8] : memref<1x6xf32, #tpu.memory_space<vmem>>, vector<1x6xf32>
    %11 = vector.broadcast %10 : vector<1x6xf32> to vector<128x6xf32>
    %12 = arith.mulf %9, %11 : vector<128x6xf32>
    %c0_9 = arith.constant 0 : index
    %c0_10 = arith.constant 0 : index
    %13 = vector.load %arg9[%c0_9, %c0_10] : memref<1x6xf32, #tpu.memory_space<vmem>>, vector<1x6xf32>
    %14 = vector.broadcast %13 : vector<1x6xf32> to vector<128x6xf32>
    %15 = arith.addf %12, %14 : vector<128x6xf32>
    %cst_11 = arith.constant 0.000000e+00 : f32
    %16 = vector.broadcast %cst_11 : f32 to vector<128x6xf32>
    %17 = arith.maximumf %15, %16 : vector<128x6xf32>
    %c0_12 = arith.constant 0 : index
    %c0_13 = arith.constant 0 : index
    %18 = vector.load %arg10[%c0_12, %c0_13] : memref<128x6xf32, #tpu.memory_space<vmem>>, vector<128x6xf32>
    %c0_14 = arith.constant 0 : index
    %c0_15 = arith.constant 0 : index
    %19 = vector.load %arg11[%c0_14, %c0_15] : memref<1x6xf32, #tpu.memory_space<vmem>>, vector<1x6xf32>
    %20 = vector.broadcast %19 : vector<1x6xf32> to vector<128x6xf32>
    %21 = arith.mulf %18, %20 : vector<128x6xf32>
    %c0_16 = arith.constant 0 : index
    %c0_17 = arith.constant 0 : index
    %22 = vector.load %arg12[%c0_16, %c0_17] : memref<1x6xf32, #tpu.memory_space<vmem>>, vector<1x6xf32>
    %23 = vector.broadcast %22 : vector<1x6xf32> to vector<128x6xf32>
    %24 = arith.addf %21, %23 : vector<128x6xf32>
    %cst_18 = arith.constant 0.000000e+00 : f32
    %25 = vector.broadcast %cst_18 : f32 to vector<128x6xf32>
    %26 = arith.maximumf %24, %25 : vector<128x6xf32>
    %c0_19 = arith.constant 0 : index
    %c0_20 = arith.constant 0 : index
    %c0_21 = arith.constant 0 : index
    %27 = vector.load %arg1[%c0_19, %c0_20, %c0_21] : memref<1x128x6xf32, #tpu.memory_space<vmem>>, vector<1x128x6xf32>
    %28 = vector.shape_cast %27 : vector<1x128x6xf32> to vector<128x6xf32>
    %c0_22 = arith.constant 0 : index
    %c0_23 = arith.constant 0 : index
    %29 = vector.load %arg2[%c0_22, %c0_23] : memref<1x6xf32, #tpu.memory_space<vmem>>, vector<1x6xf32>
    %30 = vector.broadcast %29 : vector<1x6xf32> to vector<128x6xf32>
    %31 = arith.mulf %28, %30 : vector<128x6xf32>
    %c0_24 = arith.constant 0 : index
    %c0_25 = arith.constant 0 : index
    %32 = vector.load %arg3[%c0_24, %c0_25] : memref<1x6xf32, #tpu.memory_space<vmem>>, vector<1x6xf32>
    %33 = vector.broadcast %32 : vector<1x6xf32> to vector<128x6xf32>
    %34 = arith.addf %31, %33 : vector<128x6xf32>
    %cst_26 = arith.constant 0.000000e+00 : f32
    %35 = vector.broadcast %cst_26 : f32 to vector<128x6xf32>
    %36 = arith.maximumf %34, %35 : vector<128x6xf32>
    %37 = tpu.concatenate %8, %17, %26, %36 in 1 : vector<128x6xf32>, vector<128x6xf32>, vector<128x6xf32>, vector<128x6xf32> -> vector<128x24xf32>
    %38 = arith.truncf %37 : vector<128x24xf32> to vector<128x24xbf16>
    %c0_27 = arith.constant 0 : index
    %c0_28 = arith.constant 0 : index
    %39 = vector.load %arg13[%c0_27, %c0_28] : memref<24x64xbf16, #tpu.memory_space<vmem>>, vector<24x64xbf16>
    %cst_29 = arith.constant dense<0.000000e+00> : vector<128x64xf32>
    %40 = tpu.matmul %38, %39, %cst_29 {dimension_numbers = #tpu.dot_dimension_numbers<[1], [0], [0], [1], [0, 0, 1, 1], [], []>} : vector<128x24xbf16>, vector<24x64xbf16>, vector<128x64xf32> -> vector<128x64xf32>
    %c0_30 = arith.constant 0 : index
    %c0_31 = arith.constant 0 : index
    %41 = vector.load %arg14[%c0_30, %c0_31] : memref<128x64xf32, #tpu.memory_space<vmem>>, vector<128x64xf32>
    tpu.vector_store %arg14[%c0_30, %c0_31], %40 {strides = array<i32>} : memref<128x64xf32, #tpu.memory_space<vmem>>, vector<128x64xf32>,
    %cst_32 = arith.constant dense<0.000000e+00> : vector<64xf32>
    %42 = vector.multi_reduction <add>, %40, %cst_32 [0] : vector<128x64xf32> to vector<64xf32>
    %43 = vector.shape_cast %42 : vector<64xf32> to vector<1x64xf32>
    %c0_33 = arith.constant 0 : index
    %c0_34 = arith.constant 0 : index
    %c0_35 = arith.constant 0 : index
    %44 = vector.load %arg15[%c0_33, %c0_34, %c0_35] : memref<1x2x64xf32, #tpu.memory_space<vmem>>, vector<1x1x64xf32>
    %45 = vector.shape_cast %44 : vector<1x1x64xf32> to vector<1x64xf32>
    %46 = vector.shape_cast %43 : vector<1x64xf32> to vector<1x1x64xf32>
    tpu.vector_store %arg15[%c0_33, %c0_34, %c0_35], %46 {strides = array<i32>} : memref<1x2x64xf32, #tpu.memory_space<vmem>>, vector<1x1x64xf32>,
    %47 = arith.mulf %40, %40 : vector<128x64xf32>
    %cst_36 = arith.constant dense<0.000000e+00> : vector<64xf32>
    %48 = vector.multi_reduction <add>, %47, %cst_36 [0] : vector<128x64xf32> to vector<64xf32>
    %49 = vector.shape_cast %48 : vector<64xf32> to vector<1x64xf32>
    %c0_37 = arith.constant 0 : index
    %c1 = arith.constant 1 : index
    %c0_38 = arith.constant 0 : index
    %50 = vector.load %arg15[%c0_37, %c1, %c0_38] : memref<1x2x64xf32, #tpu.memory_space<vmem>>, vector<1x1x64xf32>
    %51 = vector.shape_cast %50 : vector<1x1x64xf32> to vector<1x64xf32>
    %52 = vector.shape_cast %49 : vector<1x64xf32> to vector<1x1x64xf32>
    tpu.vector_store %arg15[%c0_37, %c1, %c0_38], %52 {strides = array<i32>} : memref<1x2x64xf32, #tpu.memory_space<vmem>>, vector<1x1x64xf32>,
    return
  }
  func.func @transform_0(%arg0: i32) -> (i32, i32, i32) {
    %c3_i32 = arith.constant 3 : i32
    %c0_i32 = arith.constant 0 : i32
    %c0_i32_0 = arith.constant 0 : i32
    return %c3_i32, %arg0, %c0_i32 : i32, i32, i32
  }
  func.func @transform_1(%arg0: i32) -> (i32, i32) {
    %c0_i32 = arith.constant 0 : i32
    %c0_i32_0 = arith.constant 0 : i32
    %c0_i32_1 = arith.constant 0 : i32
    return %c0_i32, %c0_i32_0 : i32, i32
  }
  func.func @transform_2(%arg0: i32) -> (i32, i32) {
    %c0_i32 = arith.constant 0 : i32
    %c0_i32_0 = arith.constant 0 : i32
    %c0_i32_1 = arith.constant 0 : i32
    return %c0_i32, %c0_i32_0 : i32, i32
  }
  func.func @transform_3(%arg0: i32) -> (i32, i32) {
    %c0_i32 = arith.constant 0 : i32
    %c0_i32_0 = arith.constant 0 : i32
    return %arg0, %c0_i32 : i32, i32
  }
  func.func @transform_4(%arg0: i32) -> (i32, i32) {
    %c0_i32 = arith.constant 0 : i32
    %c0_i32_0 = arith.constant 0 : i32
    %c0_i32_1 = arith.constant 0 : i32
    return %c0_i32, %c0_i32_0 : i32, i32
  }
  func.func @transform_5(%arg0: i32) -> (i32, i32) {
    %c0_i32 = arith.constant 0 : i32
    %c0_i32_0 = arith.constant 0 : i32
    %c0_i32_1 = arith.constant 0 : i32
    return %c0_i32, %c0_i32_0 : i32, i32
  }
  func.func @transform_6(%arg0: i32) -> (i32, i32) {
    %c0_i32 = arith.constant 0 : i32
    %c0_i32_0 = arith.constant 0 : i32
    return %arg0, %c0_i32 : i32, i32
  }
  func.func @transform_7(%arg0: i32) -> (i32, i32) {
    %c0_i32 = arith.constant 0 : i32
    %c0_i32_0 = arith.constant 0 : i32
    %c0_i32_1 = arith.constant 0 : i32
    return %c0_i32, %c0_i32_0 : i32, i32
  }
  func.func @transform_8(%arg0: i32) -> (i32, i32) {
    %c0_i32 = arith.constant 0 : i32
    %c0_i32_0 = arith.constant 0 : i32
    %c0_i32_1 = arith.constant 0 : i32
    return %c0_i32, %c0_i32_0 : i32, i32
  }
  func.func @transform_9(%arg0: i32) -> (i32, i32) {
    %c0_i32 = arith.constant 0 : i32
    %c0_i32_0 = arith.constant 0 : i32
    return %arg0, %c0_i32 : i32, i32
  }
  func.func @transform_10(%arg0: i32) -> (i32, i32) {
    %c0_i32 = arith.constant 0 : i32
    %c0_i32_0 = arith.constant 0 : i32
    %c0_i32_1 = arith.constant 0 : i32
    return %c0_i32, %c0_i32_0 : i32, i32
  }
  func.func @transform_11(%arg0: i32) -> (i32, i32) {
    %c0_i32 = arith.constant 0 : i32
    %c0_i32_0 = arith.constant 0 : i32
    %c0_i32_1 = arith.constant 0 : i32
    return %c0_i32, %c0_i32_0 : i32, i32
  }
  func.func @transform_12(%arg0: i32) -> (i32, i32) {
    %c0_i32 = arith.constant 0 : i32
    %c0_i32_0 = arith.constant 0 : i32
    %c0_i32_1 = arith.constant 0 : i32
    return %c0_i32, %c0_i32_0 : i32, i32
  }
  func.func @transform_13(%arg0: i32) -> (i32, i32) {
    %c0_i32 = arith.constant 0 : i32
    %c0_i32_0 = arith.constant 0 : i32
    return %arg0, %c0_i32 : i32, i32
  }
  func.func @transform_14(%arg0: i32) -> (i32, i32, i32) {
    %c0_i32 = arith.constant 0 : i32
    %c0_i32_0 = arith.constant 0 : i32
    %c0_i32_1 = arith.constant 0 : i32
    return %arg0, %c0_i32, %c0_i32_0 : i32, i32, i32
  }
}

module attributes {stable_mosaic.version = 11 : i64} {
  func.func @_bn_res_relu_kernel(%arg0: i32, %arg1: memref<128x64xf32, #tpu.memory_space<vmem>>, %arg2: memref<1x64xf32, #tpu.memory_space<vmem>>, %arg3: memref<1x64xf32, #tpu.memory_space<vmem>>, %arg4: memref<128x64xf32, #tpu.memory_space<vmem>>, %arg5: memref<128x64xf32, #tpu.memory_space<vmem>>) attributes {dimension_semantics = [#tpu.dimension_semantics<parallel>], iteration_bounds = array<i64: 1>, scalar_prefetch = 0 : i64, scratch_operands = 0 : i64, tpu.core_type = #tpu.core_type<tc>, window_params = [{transform_indices = @transform_0, window_bounds = array<i64: 128, 64>}, {pipeline_mode = #tpu.pipeline_mode<synchronous>, transform_indices = @transform_1, window_bounds = array<i64: 1, 64>}, {pipeline_mode = #tpu.pipeline_mode<synchronous>, transform_indices = @transform_2, window_bounds = array<i64: 1, 64>}, {transform_indices = @transform_3, window_bounds = array<i64: 128, 64>}, {transform_indices = @transform_4, window_bounds = array<i64: 128, 64>}]} {
    %c0 = arith.constant 0 : index
    %c0_0 = arith.constant 0 : index
    %0 = vector.load %arg1[%c0, %c0_0] : memref<128x64xf32, #tpu.memory_space<vmem>>, vector<128x64xf32>
    %c0_1 = arith.constant 0 : index
    %c0_2 = arith.constant 0 : index
    %1 = vector.load %arg2[%c0_1, %c0_2] : memref<1x64xf32, #tpu.memory_space<vmem>>, vector<1x64xf32>
    %2 = vector.broadcast %1 : vector<1x64xf32> to vector<128x64xf32>
    %3 = arith.mulf %0, %2 : vector<128x64xf32>
    %c0_3 = arith.constant 0 : index
    %c0_4 = arith.constant 0 : index
    %4 = vector.load %arg3[%c0_3, %c0_4] : memref<1x64xf32, #tpu.memory_space<vmem>>, vector<1x64xf32>
    %5 = vector.broadcast %4 : vector<1x64xf32> to vector<128x64xf32>
    %6 = arith.addf %3, %5 : vector<128x64xf32>
    %c0_5 = arith.constant 0 : index
    %c0_6 = arith.constant 0 : index
    %7 = vector.load %arg4[%c0_5, %c0_6] : memref<128x64xf32, #tpu.memory_space<vmem>>, vector<128x64xf32>
    %8 = arith.addf %6, %7 : vector<128x64xf32>
    %cst = arith.constant 0.000000e+00 : f32
    %9 = vector.broadcast %cst : f32 to vector<128x64xf32>
    %10 = arith.maximumf %8, %9 : vector<128x64xf32>
    %c0_7 = arith.constant 0 : index
    %c0_8 = arith.constant 0 : index
    %11 = vector.load %arg5[%c0_7, %c0_8] : memref<128x64xf32, #tpu.memory_space<vmem>>, vector<128x64xf32>
    tpu.vector_store %arg5[%c0_7, %c0_8], %10 {strides = array<i32>} : memref<128x64xf32, #tpu.memory_space<vmem>>, vector<128x64xf32>,
    return
  }
  func.func @transform_0(%arg0: i32) -> (i32, i32) {
    %c0_i32 = arith.constant 0 : i32
    %c0_i32_0 = arith.constant 0 : i32
    return %arg0, %c0_i32 : i32, i32
  }
  func.func @transform_1(%arg0: i32) -> (i32, i32) {
    %c0_i32 = arith.constant 0 : i32
    %c0_i32_0 = arith.constant 0 : i32
    %c0_i32_1 = arith.constant 0 : i32
    return %c0_i32, %c0_i32_0 : i32, i32
  }
  func.func @transform_2(%arg0: i32) -> (i32, i32) {
    %c0_i32 = arith.constant 0 : i32
    %c0_i32_0 = arith.constant 0 : i32
    %c0_i32_1 = arith.constant 0 : i32
    return %c0_i32, %c0_i32_0 : i32, i32
  }
  func.func @transform_3(%arg0: i32) -> (i32, i32) {
    %c0_i32 = arith.constant 0 : i32
    %c0_i32_0 = arith.constant 0 : i32
    return %arg0, %c0_i32 : i32, i32
  }
  func.func @transform_4(%arg0: i32) -> (i32, i32) {
    %c0_i32 = arith.constant 0 : i32
    %c0_i32_0 = arith.constant 0 : i32
    return %arg0, %c0_i32 : i32, i32
  }
}

</mosaic_0001>

<llo_original>
// kernel: bottle2neck_forward.6
$region0: #{bottle2neck_forward.6}
  #allocation0 [shape = 'u32[]', space=smem, size = 0x4, offset = 0x4, fixed_abs, tag = 'smem constant byte address 0x4 - core index']
  #allocation1 [shape = 'u32[72,128]{1,0:T(1,128)}', space=vmem, size = 0x9000, scoped, tag = 'internal scratch']
  %s0 = inlined_call_operand.vmem [shape: bf16[128,64], index: 0, kind: input, shape index: {}]
  %s1 = inlined_call_operand.vmem [shape: bf16[64,24], index: 1, kind: input, shape index: {}]
  %s2 = inlined_call_operand.vmem [shape: f32[4,128,6], index: 2, kind: output, shape index: {0}]
  %s3 = inlined_call_operand.vmem [shape: f32[1,2,24], index: 3, kind: output, shape index: {1}]
  %4 = xla_tuple %s2, %s3
  %s5 = sld [smem:[#allocation0]]
  $region26: #{bottle2neck_forward.6} parent=0
    _
  %s7 = ssub.s32 1, %s5
  %s8 = scalar_select 0, %s7, %s5
  // Predicated region
  $region2: #{bottle2neck_forward.6} parent=0 // pred_check
    _
  $region3: #{bottle2neck_forward.6} parent=0 // pred_check_branch
    %10 = sbr.rel (0) target = $region5
  $region4: #{bottle2neck_forward.6} parent=0 // pred_region
    _
  $region5: #{bottle2neck_forward.6} parent=0 // pred_fallthru
    _
  // Predicated region
  $region6: #{bottle2neck_forward.6} parent=0 // pred_check
    _
  $region7: #{bottle2neck_forward.6} parent=0 // pred_check_branch
    %12 = sbr.rel (0) target = $region9
  $region8: #{bottle2neck_forward.6} parent=0 // pred_region
    _
  $region9: #{bottle2neck_forward.6} parent=0 // pred_fallthru
    _
  %v14 = vld [vmem:[%s0] sm:$0xf]
  %v15 = vld [vmem:[%s0 + $0x4] sm:$0xf]
  %v16 = vld [vmem:[%s0 + $0x8] sm:$0xf]
  %v17 = vld [vmem:[%s0 + $0xc] sm:$0xf]
  %v18 = vld [vmem:[%s0 + $0x10] sm:$0xf]
  %v19 = vld [vmem:[%s0 + $0x14] sm:$0xf]
  %v20 = vld [vmem:[%s0 + $0x18] sm:$0xf]
  %v21 = vld [vmem:[%s0 + $0x1c] sm:$0xf]
  %v22 = vld [vmem:[%s0 + $0x20] sm:$0xf]
  %v23 = vld [vmem:[%s0 + $0x24] sm:$0xf]
  %v24 = vld [vmem:[%s0 + $0x28] sm:$0xf]
  %v25 = vld [vmem:[%s0 + $0x2c] sm:$0xf]
  %v26 = vld [vmem:[%s0 + $0x30] sm:$0xf]
  %v27 = vld [vmem:[%s0 + $0x34] sm:$0xf]
  %v28 = vld [vmem:[%s0 + $0x38] sm:$0xf]
  %v29 = vld [vmem:[%s0 + $0x3c] sm:$0xf]
  %v30 = vld [vmem:[%s1] sm:$0xf]
  %v31 = vld [vmem:[%s1 + $0x4] sm:$0xf]
  %v32 = vld [vmem:[%s1 + $0x8] sm:$0xf]
  %v33 = vld [vmem:[%s1 + $0xc] sm:$0xf]
  %v34 = vld [vmem:[%s1 + $0x10] sm:$0xf]
  %v35 = vld [vmem:[%s1 + $0x14] sm:$0xf]
  %v36 = vld [vmem:[%s1 + $0x18] sm:$0xf]
  %v37 = vld [vmem:[%s1 + $0x1c] sm:$0xf]
  %v54 = vunpack.c.l.b16 %v14
  %v55 = vunpack.c.l.b16 %v15
  %v56 = vunpack.c.l.b16 %v16
  %v57 = vunpack.c.l.b16 %v17
  %v58 = vunpack.c.l.b16 %v18
  %v59 = vunpack.c.l.b16 %v19
  %v60 = vunpack.c.l.b16 %v20
  %v61 = vunpack.c.l.b16 %v21
  %v62 = vunpack.c.l.b16 %v22
  %v63 = vunpack.c.l.b16 %v23
  %v64 = vunpack.c.l.b16 %v24
  %v65 = vunpack.c.l.b16 %v25
  %v66 = vunpack.c.l.b16 %v26
  %v67 = vunpack.c.l.b16 %v27
  %v68 = vunpack.c.l.b16 %v28
  %v69 = vunpack.c.l.b16 %v29
  %v70 = vpack.c.b16 %v55, %v54
  %v71 = vpack.c.b16 %v57, %v56
  %v72 = vpack.c.b16 %v59, %v58
  %v73 = vpack.c.b16 %v61, %v60
  %v74 = vpack.c.b16 %v63, %v62
  %v75 = vpack.c.b16 %v65, %v64
  %v76 = vpack.c.b16 %v67, %v66
  %v77 = vpack.c.b16 %v69, %v68
  %v86 = vunpack.c.l.b16 %v30
  %v87 = vunpack.c.l.b16 %v31
  %v88 = vunpack.c.l.b16 %v32
  %v89 = vunpack.c.l.b16 %v33
  %v90 = vunpack.c.l.b16 %v34
  %v91 = vunpack.c.l.b16 %v35
  %v92 = vunpack.c.l.b16 %v36
  %v93 = vunpack.c.l.b16 %v37
  %v94 = vpack.c.b16 %v87, %v86
  %v95 = vpack.c.b16 %v89, %v88
  %v96 = vpack.c.b16 %v91, %v90
  %v97 = vpack.c.b16 %v93, %v92
  %vm102 = vcmask 523264
  %v104 = vsel %vm102, %v70, 0
  %v107 = vsel %vm102, %v71, 0
  %v110 = vsel %vm102, %v72, 0
  %v113 = vsel %vm102, %v73, 0
  %v116 = vsel %vm102, %v74, 0
  %v119 = vsel %vm102, %v75, 0
  %v122 = vsel %vm102, %v76, 0
  %v125 = vsel %vm102, %v77, 0
  %127 = vmatpush.bf16.msra.mxu0 0
  %128 = vmatpush.bf16.msra.mxu0 0
  %129 = vmatpush.bf16.msra.mxu0 0
  %130 = vmatpush.bf16.msra.mxu0 0
  %131 = vmatpush.bf16.msra.mxu0 %v97
  %132 = vmatpush.bf16.msra.mxu0 %v96
  %133 = vmatpush.bf16.msra.mxu0 %v95
  %134 = vmatpush.bf16.msra.mxu0 %v94
  %135 = vmatmul.bf16.gmra.mxu0 %v104
  %v136 = vpop.f32.mrf.mxu0
  %v137 = vadd.f32 0.0, %v136
  %v138 = vpop.f32.mrf.mxu0
  %v139 = vadd.f32 0.0, %v138
  %140 = vmatmul.bf16.gmra.mxu0 %v107
  %v141 = vpop.f32.mrf.mxu0
  %v142 = vadd.f32 0.0, %v141
  %v143 = vpop.f32.mrf.mxu0
  %v144 = vadd.f32 0.0, %v143
  %145 = vmatmul.bf16.gmra.mxu0 %v110
  %v146 = vpop.f32.mrf.mxu0
  %v147 = vadd.f32 0.0, %v146
  %v148 = vpop.f32.mrf.mxu0
  %v149 = vadd.f32 0.0, %v148
  %150 = vmatmul.bf16.gmra.mxu0 %v113
  %v151 = vpop.f32.mrf.mxu0
  %v152 = vadd.f32 0.0, %v151
  %v153 = vpop.f32.mrf.mxu0
  %v154 = vadd.f32 0.0, %v153
  %155 = vmatmul.bf16.gmra.mxu0 %v116
  %v156 = vpop.f32.mrf.mxu0
  %v157 = vadd.f32 0.0, %v156
  %v158 = vpop.f32.mrf.mxu0
  %v159 = vadd.f32 0.0, %v158
  %160 = vmatmul.bf16.gmra.mxu0 %v119
  %v161 = vpop.f32.mrf.mxu0
  %v162 = vadd.f32 0.0, %v161
  %v163 = vpop.f32.mrf.mxu0
  %v164 = vadd.f32 0.0, %v163
  %165 = vmatmul.bf16.gmra.mxu0 %v122
  %v166 = vpop.f32.mrf.mxu0
  %v167 = vadd.f32 0.0, %v166
  %v168 = vpop.f32.mrf.mxu0
  %v169 = vadd.f32 0.0, %v168
  %170 = vmatmul.bf16.gmra.mxu0 %v125
  %v171 = vpop.f32.mrf.mxu0
  %v172 = vadd.f32 0.0, %v171
  %v173 = vpop.f32.mrf.mxu0
  %v174 = vadd.f32 0.0, %v173
  %175 = vdwg.mxu0
  %vm176 = vcmask 195584
  %v177 = vsel %vm176, %v137, 0.0
  %v178 = vsel %vm176, %v139, 0.0
  %v179 = vadd.f32 %v177, %v178
  %v180 = vsel %vm176, %v142, 0.0
  %v181 = vadd.f32 %v179, %v180
  %v182 = vsel %vm176, %v144, 0.0
  %v183 = vadd.f32 %v181, %v182
  %v184 = vsel %vm176, %v147, 0.0
  %v185 = vadd.f32 %v183, %v184
  %v186 = vsel %vm176, %v149, 0.0
  %v187 = vadd.f32 %v185, %v186
  %v188 = vsel %vm176, %v152, 0.0
  %v189 = vadd.f32 %v187, %v188
  %v190 = vsel %vm176, %v154, 0.0
  %v191 = vadd.f32 %v189, %v190
  %v192 = vsel %vm176, %v157, 0.0
  %v193 = vadd.f32 %v191, %v192
  %v194 = vsel %vm176, %v159, 0.0
  %v195 = vadd.f32 %v193, %v194
  %v196 = vsel %vm176, %v162, 0.0
  %v197 = vadd.f32 %v195, %v196
  %v198 = vsel %vm176, %v164, 0.0
  %v199 = vadd.f32 %v197, %v198
  %v200 = vsel %vm176, %v167, 0.0
  %v201 = vadd.f32 %v199, %v200
  %v202 = vsel %vm176, %v169, 0.0
  %v203 = vadd.f32 %v201, %v202
  %v204 = vsel %vm176, %v172, 0.0
  %v205 = vadd.f32 %v203, %v204
  %v206 = vsel %vm176, %v174, 0.0
  %v207 = vadd.f32 %v205, %v206
  %v208 = vrot.slane %v207, 4
  %v209 = vadd.f32 %v207, %v208
  %v210 = vrot.slane %v209, 2
  %v211 = vadd.f32 %v209, %v210
  %v212 = vrot.slane %v211, 1
  %v213 = vadd.f32 %v211, %v212
  %vm214 = vcmask 188416
  %215 = vst.msk [vmem:[%s3] sm:$0x1] %vm214, %v213
  %v216 = vmul.f32 %v137, %v137
  %v217 = vmul.f32 %v139, %v139
  %v218 = vmul.f32 %v142, %v142
  %v219 = vmul.f32 %v144, %v144
  %v220 = vmul.f32 %v147, %v147
  %v221 = vmul.f32 %v149, %v149
  %v222 = vmul.f32 %v152, %v152
  %v223 = vmul.f32 %v154, %v154
  %v224 = vmul.f32 %v157, %v157
  %v225 = vmul.f32 %v159, %v159
  %v226 = vmul.f32 %v162, %v162
  %v227 = vmul.f32 %v164, %v164
  %v228 = vmul.f32 %v167, %v167
  %v229 = vmul.f32 %v169, %v169
  %v230 = vmul.f32 %v172, %v172
  %v231 = vmul.f32 %v174, %v174
  %v232 = vsel %vm176, %v216, 0.0
  %v233 = vsel %vm176, %v217, 0.0
  %v234 = vadd.f32 %v232, %v233
  %v235 = vsel %vm176, %v218, 0.0
  %v236 = vadd.f32 %v234, %v235
  %v237 = vsel %vm176, %v219, 0.0
  %v238 = vadd.f32 %v236, %v237
  %v239 = vsel %vm176, %v220, 0.0
  %v240 = vadd.f32 %v238, %v239
  %v241 = vsel %vm176, %v221, 0.0
  %v242 = vadd.f32 %v240, %v241
  %v243 = vsel %vm176, %v222, 0.0
  %v244 = vadd.f32 %v242, %v243
  %v245 = vsel %vm176, %v223, 0.0
  %v246 = vadd.f32 %v244, %v245
  %v247 = vsel %vm176, %v224, 0.0
  %v248 = vadd.f32 %v246, %v247
  %v249 = vsel %vm176, %v225, 0.0
  %v250 = vadd.f32 %v248, %v249
  %v251 = vsel %vm176, %v226, 0.0
  %v252 = vadd.f32 %v250, %v251
  %v253 = vsel %vm176, %v227, 0.0
  %v254 = vadd.f32 %v252, %v253
  %v255 = vsel %vm176, %v228, 0.0
  %v256 = vadd.f32 %v254, %v255
  %v257 = vsel %vm176, %v229, 0.0
  %v258 = vadd.f32 %v256, %v257
  %v259 = vsel %vm176, %v230, 0.0
  %v260 = vadd.f32 %v258, %v259
  %v261 = vsel %vm176, %v231, 0.0
  %v262 = vadd.f32 %v260, %v261
  %v263 = vrot.slane %v262, 4
  %v264 = vadd.f32 %v262, %v263
  %v265 = vrot.slane %v264, 2
  %v266 = vadd.f32 %v264, %v265
  %v267 = vrot.slane %v266, 1
  %v268 = vadd.f32 %v266, %v267
  %269 = vst.msk [vmem:[%s3 + $0x1] sm:$0x1] %vm214, %v268
  %vm270 = vcmask 48128
  %271 = vst.msk [vmem:[%s2] sm:$0xff] %vm270, %v137
  %272 = vst.msk [vmem:[%s2 + $0x8] sm:$0xff] %vm270, %v139
  %273 = vst.msk [vmem:[%s2 + $0x10] sm:$0xff] %vm270, %v142
  %274 = vst.msk [vmem:[%s2 + $0x18] sm:$0xff] %vm270, %v144
  %275 = vst.msk [vmem:[%s2 + $0x20] sm:$0xff] %vm270, %v147
  %276 = vst.msk [vmem:[%s2 + $0x28] sm:$0xff] %vm270, %v149
  %277 = vst.msk [vmem:[%s2 + $0x30] sm:$0xff] %vm270, %v152
  %278 = vst.msk [vmem:[%s2 + $0x38] sm:$0xff] %vm270, %v154
  %279 = vst.msk [vmem:[%s2 + $0x40] sm:$0xff] %vm270, %v157
  %280 = vst.msk [vmem:[%s2 + $0x48] sm:$0xff] %vm270, %v159
  %281 = vst.msk [vmem:[%s2 + $0x50] sm:$0xff] %vm270, %v162
  %282 = vst.msk [vmem:[%s2 + $0x58] sm:$0xff] %vm270, %v164
  %283 = vst.msk [vmem:[%s2 + $0x60] sm:$0xff] %vm270, %v167
  %284 = vst.msk [vmem:[%s2 + $0x68] sm:$0xff] %vm270, %v169
  %285 = vst.msk [vmem:[%s2 + $0x70] sm:$0xff] %vm270, %v172
  %286 = vst.msk [vmem:[%s2 + $0x78] sm:$0xff] %vm270, %v174
  %303 = vrot.lane.b32.xlu0 %v137, 122
  %v304 = vpop.permute.xlu0 %303
  %305 = vrot.lane.b32.xlu0 %v139, 122
  %v306 = vpop.permute.xlu0 %305
  %307 = vrot.lane.b32.xlu0 %v142, 122
  %v308 = vpop.permute.xlu0 %307
  %309 = vrot.lane.b32.xlu0 %v144, 122
  %v310 = vpop.permute.xlu0 %309
  %311 = vrot.lane.b32.xlu0 %v147, 122
  %v312 = vpop.permute.xlu0 %311
  %313 = vrot.lane.b32.xlu0 %v149, 122
  %v314 = vpop.permute.xlu0 %313
  %315 = vrot.lane.b32.xlu0 %v152, 122
  %v316 = vpop.permute.xlu0 %315
  %317 = vrot.lane.b32.xlu0 %v154, 122
  %v318 = vpop.permute.xlu0 %317
  %319 = vrot.lane.b32.xlu0 %v157, 122
  %v320 = vpop.permute.xlu0 %319
  %321 = vrot.lane.b32.xlu0 %v159, 122
  %v322 = vpop.permute.xlu0 %321
  %323 = vrot.lane.b32.xlu0 %v162, 122
  %v324 = vpop.permute.xlu0 %323
  %325 = vrot.lane.b32.xlu0 %v164, 122
  %v326 = vpop.permute.xlu0 %325
  %327 = vrot.lane.b32.xlu0 %v167, 122
  %v328 = vpop.permute.xlu0 %327
  %329 = vrot.lane.b32.xlu0 %v169, 122
  %v330 = vpop.permute.xlu0 %329
  %331 = vrot.lane.b32.xlu0 %v172, 122
  %v332 = vpop.permute.xlu0 %331
  %333 = vrot.lane.b32.xlu0 %v174, 122
  %v334 = vpop.permute.xlu0 %333
  %s351 = scalar_lea.vmem %s2, 128
  %352 = vst.msk [vmem:[%s351] sm:$0xff] %vm270, %v304
  %353 = vst.msk [vmem:[%s351 + $0x8] sm:$0xff] %vm270, %v306
  %354 = vst.msk [vmem:[%s351 + $0x10] sm:$0xff] %vm270, %v308
  %355 = vst.msk [vmem:[%s351 + $0x18] sm:$0xff] %vm270, %v310
  %356 = vst.msk [vmem:[%s351 + $0x20] sm:$0xff] %vm270, %v312
  %357 = vst.msk [vmem:[%s351 + $0x28] sm:$0xff] %vm270, %v314
  %358 = vst.msk [vmem:[%s351 + $0x30] sm:$0xff] %vm270, %v316
  %359 = vst.msk [vmem:[%s351 + $0x38] sm:$0xff] %vm270, %v318
  %360 = vst.msk [vmem:[%s351 + $0x40] sm:$0xff] %vm270, %v320
  %361 = vst.msk [vmem:[%s351 + $0x48] sm:$0xff] %vm270, %v322
  %362 = vst.msk [vmem:[%s351 + $0x50] sm:$0xff] %vm270, %v324
  %363 = vst.msk [vmem:[%s351 + $0x58] sm:$0xff] %vm270, %v326
  %364 = vst.msk [vmem:[%s351 + $0x60] sm:$0xff] %vm270, %v328
  %365 = vst.msk [vmem:[%s351 + $0x68] sm:$0xff] %vm270, %v330
  %366 = vst.msk [vmem:[%s351 + $0x70] sm:$0xff] %vm270, %v332
  %367 = vst.msk [vmem:[%s351 + $0x78] sm:$0xff] %vm270, %v334
  %368 = vrot.lane.b32.xlu0 %v137, 116
  %v369 = vpop.permute.xlu0 %368
  %370 = vrot.lane.b32.xlu0 %v139, 116
  %v371 = vpop.permute.xlu0 %370
  %372 = vrot.lane.b32.xlu0 %v142, 116
  %v373 = vpop.permute.xlu0 %372
  %374 = vrot.lane.b32.xlu0 %v144, 116
  %v375 = vpop.permute.xlu0 %374
  %376 = vrot.lane.b32.xlu0 %v147, 116
  %v377 = vpop.permute.xlu0 %376
  %378 = vrot.lane.b32.xlu0 %v149, 116
  %v379 = vpop.permute.xlu0 %378
  %380 = vrot.lane.b32.xlu0 %v152, 116
  %v381 = vpop.permute.xlu0 %380
  %382 = vrot.lane.b32.xlu0 %v154, 116
  %v383 = vpop.permute.xlu0 %382
  %384 = vrot.lane.b32.xlu0 %v157, 116
  %v385 = vpop.permute.xlu0 %384
  %386 = vrot.lane.b32.xlu0 %v159, 116
  %v387 = vpop.permute.xlu0 %386
  %388 = vrot.lane.b32.xlu0 %v162, 116
  %v389 = vpop.permute.xlu0 %388
  %390 = vrot.lane.b32.xlu0 %v164, 116
  %v391 = vpop.permute.xlu0 %390
  %392 = vrot.lane.b32.xlu0 %v167, 116
  %v393 = vpop.permute.xlu0 %392
  %394 = vrot.lane.b32.xlu0 %v169, 116
  %v395 = vpop.permute.xlu0 %394
  %396 = vrot.lane.b32.xlu0 %v172, 116
  %v397 = vpop.permute.xlu0 %396
  %398 = vrot.lane.b32.xlu0 %v174, 116
  %v399 = vpop.permute.xlu0 %398
  %s416 = scalar_lea.vmem %s2, 256
  %417 = vst.msk [vmem:[%s416] sm:$0xff] %vm270, %v369
  %418 = vst.msk [vmem:[%s416 + $0x8] sm:$0xff] %vm270, %v371
  %419 = vst.msk [vmem:[%s416 + $0x10] sm:$0xff] %vm270, %v373
  %420 = vst.msk [vmem:[%s416 + $0x18] sm:$0xff] %vm270, %v375
  %421 = vst.msk [vmem:[%s416 + $0x20] sm:$0xff] %vm270, %v377
  %422 = vst.msk [vmem:[%s416 + $0x28] sm:$0xff] %vm270, %v379
  %423 = vst.msk [vmem:[%s416 + $0x30] sm:$0xff] %vm270, %v381
  %424 = vst.msk [vmem:[%s416 + $0x38] sm:$0xff] %vm270, %v383
  %425 = vst.msk [vmem:[%s416 + $0x40] sm:$0xff] %vm270, %v385
  %426 = vst.msk [vmem:[%s416 + $0x48] sm:$0xff] %vm270, %v387
  %427 = vst.msk [vmem:[%s416 + $0x50] sm:$0xff] %vm270, %v389
  %428 = vst.msk [vmem:[%s416 + $0x58] sm:$0xff] %vm270, %v391
  %429 = vst.msk [vmem:[%s416 + $0x60] sm:$0xff] %vm270, %v393
  %430 = vst.msk [vmem:[%s416 + $0x68] sm:$0xff] %vm270, %v395
  %431 = vst.msk [vmem:[%s416 + $0x70] sm:$0xff] %vm270, %v397
  %432 = vst.msk [vmem:[%s416 + $0x78] sm:$0xff] %vm270, %v399
  %433 = vrot.lane.b32.xlu0 %v137, 110
  %v434 = vpop.permute.xlu0 %433
  %435 = vrot.lane.b32.xlu0 %v139, 110
  %v436 = vpop.permute.xlu0 %435
  %437 = vrot.lane.b32.xlu0 %v142, 110
  %v438 = vpop.permute.xlu0 %437
  %439 = vrot.lane.b32.xlu0 %v144, 110
  %v440 = vpop.permute.xlu0 %439
  %441 = vrot.lane.b32.xlu0 %v147, 110
  %v442 = vpop.permute.xlu0 %441
  %443 = vrot.lane.b32.xlu0 %v149, 110
  %v444 = vpop.permute.xlu0 %443
  %445 = vrot.lane.b32.xlu0 %v152, 110
  %v446 = vpop.permute.xlu0 %445
  %447 = vrot.lane.b32.xlu0 %v154, 110
  %v448 = vpop.permute.xlu0 %447
  %449 = vrot.lane.b32.xlu0 %v157, 110
  %v450 = vpop.permute.xlu0 %449
  %451 = vrot.lane.b32.xlu0 %v159, 110
  %v452 = vpop.permute.xlu0 %451
  %453 = vrot.lane.b32.xlu0 %v162, 110
  %v454 = vpop.permute.xlu0 %453
  %455 = vrot.lane.b32.xlu0 %v164, 110
  %v456 = vpop.permute.xlu0 %455
  %457 = vrot.lane.b32.xlu0 %v167, 110
  %v458 = vpop.permute.xlu0 %457
  %459 = vrot.lane.b32.xlu0 %v169, 110
  %v460 = vpop.permute.xlu0 %459
  %461 = vrot.lane.b32.xlu0 %v172, 110
  %v462 = vpop.permute.xlu0 %461
  %463 = vrot.lane.b32.xlu0 %v174, 110
  %v464 = vpop.permute.xlu0 %463
  %s481 = scalar_lea.vmem %s2, 384
  %482 = vst.msk [vmem:[%s481] sm:$0xff] %vm270, %v434
  %483 = vst.msk [vmem:[%s481 + $0x8] sm:$0xff] %vm270, %v436
  %484 = vst.msk [vmem:[%s481 + $0x10] sm:$0xff] %vm270, %v438
  %485 = vst.msk [vmem:[%s481 + $0x18] sm:$0xff] %vm270, %v440
  %486 = vst.msk [vmem:[%s481 + $0x20] sm:$0xff] %vm270, %v442
  %487 = vst.msk [vmem:[%s481 + $0x28] sm:$0xff] %vm270, %v444
  %488 = vst.msk [vmem:[%s481 + $0x30] sm:$0xff] %vm270, %v446
  %489 = vst.msk [vmem:[%s481 + $0x38] sm:$0xff] %vm270, %v448
  %490 = vst.msk [vmem:[%s481 + $0x40] sm:$0xff] %vm270, %v450
  %491 = vst.msk [vmem:[%s481 + $0x48] sm:$0xff] %vm270, %v452
  %492 = vst.msk [vmem:[%s481 + $0x50] sm:$0xff] %vm270, %v454
  %493 = vst.msk [vmem:[%s481 + $0x58] sm:$0xff] %vm270, %v456
  %494 = vst.msk [vmem:[%s481 + $0x60] sm:$0xff] %vm270, %v458
  %495 = vst.msk [vmem:[%s481 + $0x68] sm:$0xff] %vm270, %v460
  %496 = vst.msk [vmem:[%s481 + $0x70] sm:$0xff] %vm270, %v462
  %497 = vst.msk [vmem:[%s481 + $0x78] sm:$0xff] %vm270, %v464
  // Predicated region
  $region10: #{bottle2neck_forward.6} parent=0 // pred_check
    _
  $region11: #{bottle2neck_forward.6} parent=0 // pred_check_branch
    %499 = sbr.rel (0) target = $region13
  $region12: #{bottle2neck_forward.6} parent=0 // pred_region
    _
  $region13: #{bottle2neck_forward.6} parent=0 // pred_fallthru
    _
  // Predicated region
  $region14: #{bottle2neck_forward.6} parent=0 // pred_check
    _
  $region15: #{bottle2neck_forward.6} parent=0 // pred_check_branch
    %501 = sbr.rel (0) target = $region17
  $region16: #{bottle2neck_forward.6} parent=0 // pred_region
    _
  $region17: #{bottle2neck_forward.6} parent=0 // pred_fallthru
    _
  // Predicated region
  $region18: #{bottle2neck_forward.6} parent=0 // pred_check
    _
  $region19: #{bottle2neck_forward.6} parent=0 // pred_check_branch
    %503 = sbr.rel (0) target = $region21
  $region20: #{bottle2neck_forward.6} parent=0 // pred_region
    _
  $region21: #{bottle2neck_forward.6} parent=0 // pred_fallthru
    _
  // Predicated region
  $region22: #{bottle2neck_forward.6} parent=0 // pred_check
    _
  $region23: #{bottle2neck_forward.6} parent=0 // pred_check_branch
    %505 = sbr.rel (0) target = $region25
  $region24: #{bottle2neck_forward.6} parent=0 // pred_region
    _
  $region25: #{bottle2neck_forward.6} parent=0 // pred_fallthru
    _

// kernel: bottle2neck_forward.7
$region0: #{bottle2neck_forward.7}
  #allocation0 [shape = 'u32[]', space=smem, size = 0x4, offset = 0x4, fixed_abs, tag = 'smem constant byte address 0x4 - core index']
  #allocation1 [shape = 'u32[72,128]{1,0:T(1,128)}', space=vmem, size = 0x9000, scoped, tag = 'internal scratch']
  #allocation2 [shape = 'f32[10,10,6]{2,1,0:T(8,128)}', space=vmem, size = 0x14000, scoped, tag = 'scratch operand']
  %s0 = inlined_call_operand.vmem [shape: f32[4,2,8,8,6], index: 0, kind: input, shape index: {}]
  %s1 = inlined_call_operand.vmem [shape: f32[1,6], index: 1, kind: input, shape index: {}]
  %s2 = inlined_call_operand.vmem [shape: f32[1,6], index: 2, kind: input, shape index: {}]
  %s3 = inlined_call_operand.vmem [shape: bf16[54,6], index: 3, kind: input, shape index: {}]
  %s4 = inlined_call_operand.vmem [shape: f32[2,8,8,6], index: 4, kind: output, shape index: {0}]
  %s5 = inlined_call_operand.vmem [shape: f32[2,2,6], index: 5, kind: output, shape index: {1}]
  %6 = xla_tuple %s4, %s5
  %s7 = sld [smem:[#allocation0]]
  $region57: #{bottle2neck_forward.7} parent=0
    _
  %s9 = ssub.s32 1, %s7
  %s10 = scalar_select 0, %s9, %s7
  loop: start=0, step=1, limit=4
  $region2: #{bottle2neck_forward.7} parent=0 // loop_pre_header
    _
  $region3: #{bottle2neck_forward.7} parent=0 // loop_header
    %s12 = sphi 0, %s16
    %p13 = scmp.ge.s32.totalorder %s12, 4
    %s22 = sphi 0, %s24
    %s25 = sphi 0, %s22
    %s26 = sphi 0, %s25
    %s42 = sphi 0, %s26
    %s46 = sphi 0, %s46
    %s48 = sphi 0, %s46
    %s49 = sphi 0, %s48
    %s63 = sphi 0, %s49
    %s67 = sphi 0, %s67
    %s69 = sphi 0, %s67
    %s70 = sphi 0, %s69
    %s84 = sphi 0, %s70
    %s88 = sphi 0, %s88
    %s90 = sphi 0, %s88
    %s91 = sphi 0, %s90
    %s105 = sphi 0, %s91
    %s111 = sphi 0, %s113
    %s114 = sphi 0, %s111
    %s115 = sphi 0, %s114
    %s131 = sphi 0, %s115
    %s137 = sphi 0, %s139
    %s140 = sphi 0, %s137
    %s141 = sphi 0, %s140
    %s157 = sphi 0, %s141
  $region4: #{bottle2neck_forward.7} parent=0 // loop_header_branch
    %15 = sbr.rel (%p13) target = $region8
  $region5: #{bottle2neck_forward.7} parent=0 // loop_body
    %s17 = ssub.s32 %s12, 1
    %s18 = ssub.s32 %s12, 2
    %s19 = sadd.s32 %s12, 1
    %s20 = ssub.s32 %s12, %s19
    %p21 = scmp.eq.s32.totalorder %s20, 0
    %s23 = sadd.s32 %s22, 1
    %s24 = scalar_select %p21, %s22, %s23
    %p27 = pneg %p21
    %p28 = scmp.eq.s32.totalorder %s12, 1
    %p29 = por %p27, %p28
    %p30 = scmp.ne.s32.totalorder %s22, %s25
    %p31 = scmp.eq.s32.totalorder %s12, 0
    %p32 = por %p30, %p31
    %p33 = scmp.ne.s32.totalorder %s22, %s25
    %p34 = scmp.eq.s32.totalorder %s17, 1
    %p35 = por %p33, %p34
    %p36 = scmp.ne.s32.totalorder %s25, %s26
    %p37 = scmp.eq.s32.totalorder %s17, 0
    %p38 = por %p36, %p37
    %p39 = scmp.ne.s32.totalorder %s25, %s26
    %p40 = scmp.eq.s32.totalorder %s18, 1
    %p41 = por %p39, %p40
    %p43 = scmp.ne.s32.totalorder %s26, %s42
    %p44 = scmp.eq.s32.totalorder %s18, 0
    %p45 = por %p43, %p44
    %s47 = sadd.s32 %s46, 1
    %p50 = scmp.eq.s32.totalorder %s12, 1
    %p51 = scmp.ne.s32.totalorder %s46, %s48
    %p52 = scmp.eq.s32.totalorder %s12, 0
    %p53 = por %p51, %p52
    %p54 = scmp.ne.s32.totalorder %s46, %s48
    %p55 = scmp.eq.s32.totalorder %s17, 1
    %p56 = por %p54, %p55
    %p57 = scmp.ne.s32.totalorder %s48, %s49
    %p58 = scmp.eq.s32.totalorder %s17, 0
    %p59 = por %p57, %p58
    %p60 = scmp.ne.s32.totalorder %s48, %s49
    %p61 = scmp.eq.s32.totalorder %s18, 1
    %p62 = por %p60, %p61
    %p64 = scmp.ne.s32.totalorder %s49, %s63
    %p65 = scmp.eq.s32.totalorder %s18, 0
    %p66 = por %p64, %p65
    %s68 = sadd.s32 %s67, 1
    %p71 = scmp.eq.s32.totalorder %s12, 1
    %p72 = scmp.ne.s32.totalorder %s67, %s69
    %p73 = scmp.eq.s32.totalorder %s12, 0
    %p74 = por %p72, %p73
    %p75 = scmp.ne.s32.totalorder %s67, %s69
    %p76 = scmp.eq.s32.totalorder %s17, 1
    %p77 = por %p75, %p76
    %p78 = scmp.ne.s32.totalorder %s69, %s70
    %p79 = scmp.eq.s32.totalorder %s17, 0
    %p80 = por %p78, %p79
    %p81 = scmp.ne.s32.totalorder %s69, %s70
    %p82 = scmp.eq.s32.totalorder %s18, 1
    %p83 = por %p81, %p82
    %p85 = scmp.ne.s32.totalorder %s70, %s84
    %p86 = scmp.eq.s32.totalorder %s18, 0
    %p87 = por %p85, %p86
    %s89 = sadd.s32 %s88, 1
    %p92 = scmp.eq.s32.totalorder %s12, 1
    %p93 = scmp.ne.s32.totalorder %s88, %s90
    %p94 = scmp.eq.s32.totalorder %s12, 0
    %p95 = por %p93, %p94
    %p96 = scmp.ne.s32.totalorder %s88, %s90
    %p97 = scmp.eq.s32.totalorder %s17, 1
    %p98 = por %p96, %p97
    %p99 = scmp.ne.s32.totalorder %s90, %s91
    %p100 = scmp.eq.s32.totalorder %s17, 0
    %p101 = por %p99, %p100
    %p102 = scmp.ne.s32.totalorder %s90, %s91
    %p103 = scmp.eq.s32.totalorder %s18, 1
    %p104 = por %p102, %p103
    %p106 = scmp.ne.s32.totalorder %s91, %s105
    %p107 = scmp.eq.s32.totalorder %s18, 0
    %p108 = por %p106, %p107
    %s109 = ssub.s32 %s12, %s19
    %p110 = scmp.eq.s32.totalorder %s109, 0
    %s112 = sadd.s32 %s111, 1
    %s113 = scalar_select %p110, %s111, %s112
    %p116 = pneg %p110
    %p117 = scmp.eq.s32.totalorder %s12, 1
    %p118 = por %p116, %p117
    %p119 = scmp.ne.s32.totalorder %s111, %s114
    %p120 = scmp.eq.s32.totalorder %s12, 0
    %p121 = por %p119, %p120
    %p122 = scmp.ne.s32.totalorder %s111, %s114
    %p123 = scmp.eq.s32.totalorder %s17, 1
    %p124 = por %p122, %p123
    %p125 = scmp.ne.s32.totalorder %s114, %s115
    %p126 = scmp.eq.s32.totalorder %s17, 0
    %p127 = por %p125, %p126
    %p128 = scmp.ne.s32.totalorder %s114, %s115
    %p129 = scmp.eq.s32.totalorder %s18, 1
    %p130 = por %p128, %p129
    %p132 = scmp.ne.s32.totalorder %s115, %s131
    %p133 = scmp.eq.s32.totalorder %s18, 0
    %p134 = por %p132, %p133
    %s135 = ssub.s32 %s12, %s19
    %p136 = scmp.eq.s32.totalorder %s135, 0
    %s138 = sadd.s32 %s137, 1
    %s139 = scalar_select %p136, %s137, %s138
    %p142 = pneg %p136
    %p143 = scmp.eq.s32.totalorder %s12, 1
    %p144 = por %p142, %p143
    %p145 = scmp.ne.s32.totalorder %s137, %s140
    %p146 = scmp.eq.s32.totalorder %s12, 0
    %p147 = por %p145, %p146
    %p148 = scmp.ne.s32.totalorder %s137, %s140
    %p149 = scmp.eq.s32.totalorder %s17, 1
    %p150 = por %p148, %p149
    %p151 = scmp.ne.s32.totalorder %s140, %s141
    %p152 = scmp.eq.s32.totalorder %s17, 0
    %p153 = por %p151, %p152
    %p154 = scmp.ne.s32.totalorder %s140, %s141
    %p155 = scmp.eq.s32.totalorder %s18, 1
    %p156 = por %p154, %p155
    %p158 = scmp.ne.s32.totalorder %s141, %s157
    %p159 = scmp.eq.s32.totalorder %s18, 0
    %p160 = por %p158, %p159
    %p161 = scmp.le.s32.totalorder 1, %s12
    %p162 = scmp.lt.s32.totalorder %s12, 3
    %p163 = pnand %p161, %p162
    %p164 = pneg %p163
    // Predicated region
    $region9: #{bottle2neck_forward.7} parent=5 // pred_check
      _
    $region10: #{bottle2neck_forward.7} parent=5 // pred_check_branch
      %166 = sbr.rel (%p163) target = $region12
    $region11: #{bottle2neck_forward.7} parent=5 // pred_region
      %s167 = ssub.s32 %s12, 1
      // Predicated region
      $region13: #{bottle2neck_forward.7} parent=11 // pred_check
        %p168 = pneg %p59
      $region14: #{bottle2neck_forward.7} parent=11 // pred_check_branch
        %170 = sbr.rel (%p168) target = $region16
      $region15: #{bottle2neck_forward.7} parent=11 // pred_region
        _
      $region16: #{bottle2neck_forward.7} parent=11 // pred_fallthru
        _
      // Predicated region
      $region17: #{bottle2neck_forward.7} parent=11 // pred_check
        %p171 = pneg %p80
      $region18: #{bottle2neck_forward.7} parent=11 // pred_check_branch
        %173 = sbr.rel (%p171) target = $region20
      $region19: #{bottle2neck_forward.7} parent=11 // pred_region
        _
      $region20: #{bottle2neck_forward.7} parent=11 // pred_fallthru
        _
      // Predicated region
      $region21: #{bottle2neck_forward.7} parent=11 // pred_check
        %p174 = pneg %p101
      $region22: #{bottle2neck_forward.7} parent=11 // pred_check_branch
        %176 = sbr.rel (%p174) target = $region24
      $region23: #{bottle2neck_forward.7} parent=11 // pred_region
        _
      $region24: #{bottle2neck_forward.7} parent=11 // pred_fallthru
        _
    $region12: #{bottle2neck_forward.7} parent=5 // pred_fallthru
      _
    %p177 = scmp.lt.s32.totalorder %s12, 2
    // Predicated region
    $region25: #{bottle2neck_forward.7} parent=5 // pred_check
      %p178 = pneg %p177
    $region26: #{bottle2neck_forward.7} parent=5 // pred_check_branch
      %180 = sbr.rel (%p178) target = $region28
    $region27: #{bottle2neck_forward.7} parent=5 // pred_region
      // Predicated region
      $region29: #{bottle2neck_forward.7} parent=27 // pred_check
        %p181 = pneg %p32
      $region30: #{bottle2neck_forward.7} parent=27 // pred_check_branch
        %183 = sbr.rel (%p181) target = $region32
      $region31: #{bottle2neck_forward.7} parent=27 // pred_region
        %p184 = scmp.lt.s32.totalorder %s12, 1
        %s185 = scalar_select %p184, %s12, 1
        %s186 = smul.addr %s185, 8
        %s187 = smul.addr %s186, 8
        %s188 = scalar_lea.vmem %s0, %s187
      $region32: #{bottle2neck_forward.7} parent=27 // pred_fallthru
        _
    $region28: #{bottle2neck_forward.7} parent=5 // pred_fallthru
      _
    %p189 = scmp.le.s32.totalorder 1, %s12
    %p190 = scmp.lt.s32.totalorder %s12, 3
    %p191 = pnand %p189, %p190
    %p192 = pneg %p191
    // Predicated region
    $region33: #{bottle2neck_forward.7} parent=5 // pred_check
      _
    $region34: #{bottle2neck_forward.7} parent=5 // pred_check_branch
      %194 = sbr.rel (%p191) target = $region36
    $region35: #{bottle2neck_forward.7} parent=5 // pred_region
      %s195 = ssub.s32 %s12, 1
      %p196 = scmp.lt.s32.totalorder %s17, 1
      %s197 = scalar_select %p196, %s17, 1
      %s198 = smul.addr %s197, 8
      %s199 = smul.addr %s198, 8
      %s200 = scalar_lea.vmem %s0, %s199
      %p201 = pneg %p38
      %p202 = pneg %p35
      %p203 = pneg %p59
      %p204 = pneg %p56
      %p205 = pneg %p80
      %p206 = pneg %p77
      %p207 = pneg %p101
      %p208 = pneg %p98
      %p209 = pneg %p127
      %p210 = pneg %p124
      %p211 = scmp.lt.s32.totalorder %s17, 1
      %s212 = scalar_select %p211, %s17, 1
      %s213 = smul.addr %s212, 8
      %s214 = smul.addr %s213, 8
      %s215 = scalar_lea.vmem %s4, %s214
      %p216 = pneg %p153
      %p217 = pneg %p150
      %p218 = scmp.lt.s32.totalorder %s17, 1
      %s219 = scalar_select %p218, %s17, 1
      %s220 = smul.addr %s219, 2
      %s221 = scalar_lea.vmem %s5, %s220
      %p222 = scmp.lt.s32.totalorder %s17, 1
      %s223 = scalar_select %p222, %s17, 1
      %s224 = smul.addr %s223, 8
      %s225 = smul.addr %s224, 8
      %s226 = scalar_lea.vmem %s0, %s225
      %p227 = scmp.lt.s32.totalorder %s17, 1
      %s228 = scalar_select %p227, %s17, 1
      %s229 = smul.addr %s228, 8
      %s230 = smul.addr %s229, 8
      %s231 = scalar_lea.vmem %s4, %s230
      %p232 = scmp.lt.s32.totalorder %s17, 1
      %s233 = scalar_select %p232, %s17, 1
      %s234 = smul.addr %s233, 2
      %s235 = scalar_lea.vmem %s5, %s234
      %v237 = vld [vmem:[%s1] sm:$0x1]
      %v238 = vld [vmem:[%s2] sm:$0x1]
      %v239 = vld [vmem:[%s226] sm:$0xff]
      %v240 = vld [vmem:[%s226 + $0x8] sm:$0xff]
      %v241 = vld [vmem:[%s226 + $0x10] sm:$0xff]
      %v242 = vld [vmem:[%s226 + $0x18] sm:$0xff]
      %v243 = vld [vmem:[%s226 + $0x20] sm:$0xff]
      %v244 = vld [vmem:[%s226 + $0x28] sm:$0xff]
      %v245 = vld [vmem:[%s226 + $0x30] sm:$0xff]
      %v246 = vld [vmem:[%s226 + $0x38] sm:$0xff]
      %v248 = vperm.slane %v237, 0
      %v250 = vmul.f32 %v239, %v248
      %v251 = vmul.f32 %v240, %v248
      %v252 = vmul.f32 %v241, %v248
      %v253 = vmul.f32 %v242, %v248
      %v254 = vmul.f32 %v243, %v248
      %v255 = vmul.f32 %v244, %v248
      %v256 = vmul.f32 %v245, %v248
      %v257 = vmul.f32 %v246, %v248
      %v259 = vperm.slane %v238, 0
      %v261 = vadd.f32 %v250, %v259
      %v262 = vadd.f32 %v251, %v259
      %v263 = vadd.f32 %v252, %v259
      %v264 = vadd.f32 %v253, %v259
      %v265 = vadd.f32 %v254, %v259
      %v266 = vadd.f32 %v255, %v259
      %v267 = vadd.f32 %v256, %v259
      %v268 = vadd.f32 %v257, %v259
      %v269 = vmax.f32 %v261, 0.0
      %v270 = vmax.f32 %v262, 0.0
      %v271 = vmax.f32 %v263, 0.0
      %v272 = vmax.f32 %v264, 0.0
      %v273 = vmax.f32 %v265, 0.0
      %v274 = vmax.f32 %v266, 0.0
      %v275 = vmax.f32 %v267, 0.0
      %v276 = vmax.f32 %v268, 0.0
      %vm277 = vcmask 48128
      %278 = vst.msk [vmem:[#allocation2] sm:$0xff] %vm277, 0.0
      %vm279 = vcmask 41984
      %280 = vst.msk [vmem:[#allocation2 + $0x8] sm:$0x3] %vm279, 0.0
      %s281 = scalar_lea.vmem [#allocation2], 144
      %282 = vst.msk [vmem:[%s281] sm:$0xff] %vm277, 0.0
      %283 = vst.msk [vmem:[%s281 + $0x8] sm:$0x3] %vm279, 0.0
      %s284 = scalar_lea.vmem [#allocation2], 16
      %vm285 = vcmask 40960
      %286 = vst.msk [vmem:[%s284] sm:$0x1] %vm285, 0.0
      %287 = vst.msk [vmem:[%s284 + $0x10] sm:$0x1] %vm285, 0.0
      %288 = vst.msk [vmem:[%s284 + $0x20] sm:$0x1] %vm285, 0.0
      %289 = vst.msk [vmem:[%s284 + $0x30] sm:$0x1] %vm285, 0.0
      %290 = vst.msk [vmem:[%s284 + $0x40] sm:$0x1] %vm285, 0.0
      %291 = vst.msk [vmem:[%s284 + $0x50] sm:$0x1] %vm285, 0.0
      %292 = vst.msk [vmem:[%s284 + $0x60] sm:$0x1] %vm285, 0.0
      %293 = vst.msk [vmem:[%s284 + $0x70] sm:$0x1] %vm285, 0.0
      %294 = vst.msk [vmem:[%s284 + $0x9] sm:$0x1] %vm285, 0.0
      %295 = vst.msk [vmem:[%s284 + $0x19] sm:$0x1] %vm285, 0.0
      %296 = vst.msk [vmem:[%s284 + $0x29] sm:$0x1] %vm285, 0.0
      %297 = vst.msk [vmem:[%s284 + $0x39] sm:$0x1] %vm285, 0.0
      %298 = vst.msk [vmem:[%s284 + $0x49] sm:$0x1] %vm285, 0.0
      %299 = vst.msk [vmem:[%s284 + $0x59] sm:$0x1] %vm285, 0.0
      %300 = vst.msk [vmem:[%s284 + $0x69] sm:$0x1] %vm285, 0.0
      %301 = vst.msk [vmem:[%s284 + $0x79] sm:$0x1] %vm285, 0.0
      %302 = vst.msk [vmem:[%s284 + $0x1] sm:$0xff] %vm277, %v269
      %303 = vst.msk [vmem:[%s284 + $0x11] sm:$0xff] %vm277, %v270
      %304 = vst.msk [vmem:[%s284 + $0x21] sm:$0xff] %vm277, %v271
      %305 = vst.msk [vmem:[%s284 + $0x31] sm:$0xff] %vm277, %v272
      %306 = vst.msk [vmem:[%s284 + $0x41] sm:$0xff] %vm277, %v273
      %307 = vst.msk [vmem:[%s284 + $0x51] sm:$0xff] %vm277, %v274
      %308 = vst.msk [vmem:[%s284 + $0x61] sm:$0xff] %vm277, %v275
      %309 = vst.msk [vmem:[%s284 + $0x71] sm:$0xff] %vm277, %v276
      %v310 = vld [vmem:[#allocation2] sm:$0xff]
      %v311 = vld [vmem:[#allocation2 + $0x10] sm:$0xff]
      %v312 = vld [vmem:[#allocation2 + $0x20] sm:$0xff]
      %v313 = vld [vmem:[#allocation2 + $0x30] sm:$0xff]
      %v314 = vld [vmem:[#allocation2 + $0x40] sm:$0xff]
      %v315 = vld [vmem:[#allocation2 + $0x50] sm:$0xff]
      %v316 = vld [vmem:[#allocation2 + $0x60] sm:$0xff]
      %v317 = vld [vmem:[#allocation2 + $0x70] sm:$0xff]
      %v318 = vld [vmem:[#allocation2 + $0x1] sm:$0xff]
      %v319 = vld [vmem:[#allocation2 + $0x11] sm:$0xff]
      %v320 = vld [vmem:[#allocation2 + $0x21] sm:$0xff]
      %v321 = vld [vmem:[#allocation2 + $0x31] sm:$0xff]
      %v322 = vld [vmem:[#allocation2 + $0x41] sm:$0xff]
      %v323 = vld [vmem:[#allocation2 + $0x51] sm:$0xff]
      %v324 = vld [vmem:[#allocation2 + $0x61] sm:$0xff]
      %v325 = vld [vmem:[#allocation2 + $0x71] sm:$0xff]
      %v326 = vld [vmem:[#allocation2 + $0x2] sm:$0xff]
      %v327 = vld [vmem:[#allocation2 + $0x12] sm:$0xff]
      %v328 = vld [vmem:[#allocation2 + $0x22] sm:$0xff]
      %v329 = vld [vmem:[#allocation2 + $0x32] sm:$0xff]
      %v330 = vld [vmem:[#allocation2 + $0x42] sm:$0xff]
      %v331 = vld [vmem:[#allocation2 + $0x52] sm:$0xff]
      %v332 = vld [vmem:[#allocation2 + $0x62] sm:$0xff]
      %v333 = vld [vmem:[#allocation2 + $0x72] sm:$0xff]
      %v334 = vld [vmem:[%s284] sm:$0xff]
      %v335 = vld [vmem:[%s284 + $0x10] sm:$0xff]
      %v336 = vld [vmem:[%s284 + $0x20] sm:$0xff]
      %v337 = vld [vmem:[%s284 + $0x30] sm:$0xff]
      %v338 = vld [vmem:[%s284 + $0x40] sm:$0xff]
      %v339 = vld [vmem:[%s284 + $0x50] sm:$0xff]
      %v340 = vld [vmem:[%s284 + $0x60] sm:$0xff]
      %v341 = vld [vmem:[%s284 + $0x70] sm:$0xff]
      %v342 = vld [vmem:[%s284 + $0x1] sm:$0xff]
      %v343 = vld [vmem:[%s284 + $0x11] sm:$0xff]
      %v344 = vld [vmem:[%s284 + $0x21] sm:$0xff]
      %v345 = vld [vmem:[%s284 + $0x31] sm:$0xff]
      %v346 = vld [vmem:[%s284 + $0x41] sm:$0xff]
      %v347 = vld [vmem:[%s284 + $0x51] sm:$0xff]
      %v348 = vld [vmem:[%s284 + $0x61] sm:$0xff]
      %v349 = vld [vmem:[%s284 + $0x71] sm:$0xff]
      %v350 = vld [vmem:[%s284 + $0x2] sm:$0xff]
      %v351 = vld [vmem:[%s284 + $0x12] sm:$0xff]
      %v352 = vld [vmem:[%s284 + $0x22] sm:$0xff]
      %v353 = vld [vmem:[%s284 + $0x32] sm:$0xff]
      %v354 = vld [vmem:[%s284 + $0x42] sm:$0xff]
      %v355 = vld [vmem:[%s284 + $0x52] sm:$0xff]
      %v356 = vld [vmem:[%s284 + $0x62] sm:$0xff]
      %v357 = vld [vmem:[%s284 + $0x72] sm:$0xff]
      %s358 = scalar_lea.vmem [#allocation2], 32
      %v359 = vld [vmem:[%s358] sm:$0xff]
      %v360 = vld [vmem:[%s358 + $0x10] sm:$0xff]
      %v361 = vld [vmem:[%s358 + $0x20] sm:$0xff]
      %v362 = vld [vmem:[%s358 + $0x30] sm:$0xff]
      %v363 = vld [vmem:[%s358 + $0x40] sm:$0xff]
      %v364 = vld [vmem:[%s358 + $0x50] sm:$0xff]
      %v365 = vld [vmem:[%s358 + $0x60] sm:$0xff]
      %v366 = vld [vmem:[%s358 + $0x70] sm:$0xff]
      %v367 = vld [vmem:[%s358 + $0x1] sm:$0xff]
      %v368 = vld [vmem:[%s358 + $0x11] sm:$0xff]
      %v369 = vld [vmem:[%s358 + $0x21] sm:$0xff]
      %v370 = vld [vmem:[%s358 + $0x31] sm:$0xff]
      %v371 = vld [vmem:[%s358 + $0x41] sm:$0xff]
      %v372 = vld [vmem:[%s358 + $0x51] sm:$0xff]
      %v373 = vld [vmem:[%s358 + $0x61] sm:$0xff]
      %v374 = vld [vmem:[%s358 + $0x71] sm:$0xff]
      %v375 = vld [vmem:[%s358 + $0x2] sm:$0xff]
      %v376 = vld [vmem:[%s358 + $0x12] sm:$0xff]
      %v377 = vld [vmem:[%s358 + $0x22] sm:$0xff]
      %v378 = vld [vmem:[%s358 + $0x32] sm:$0xff]
      %v379 = vld [vmem:[%s358 + $0x42] sm:$0xff]
      %v380 = vld [vmem:[%s358 + $0x52] sm:$0xff]
      %v381 = vld [vmem:[%s358 + $0x62] sm:$0xff]
      %v382 = vld [vmem:[%s358 + $0x72] sm:$0xff]
      %391 = vrot.lane.b32.xlu0 %v318, 6
      %v392 = vpop.permute.xlu0 %391
      %393 = vrot.lane.b32.xlu0 %v319, 6
      %v394 = vpop.permute.xlu0 %393
      %395 = vrot.lane.b32.xlu0 %v320, 6
      %v396 = vpop.permute.xlu0 %395
      %397 = vrot.lane.b32.xlu0 %v321, 6
      %v398 = vpop.permute.xlu0 %397
      %399 = vrot.lane.b32.xlu0 %v322, 6
      %v400 = vpop.permute.xlu0 %399
      %401 = vrot.lane.b32.xlu0 %v323, 6
      %v402 = vpop.permute.xlu0 %401
      %403 = vrot.lane.b32.xlu0 %v324, 6
      %v404 = vpop.permute.xlu0 %403
      %405 = vrot.lane.b32.xlu0 %v325, 6
      %v406 = vpop.permute.xlu0 %405
      %423 = vrot.lane.b32.xlu0 %v326, 12
      %v424 = vpop.permute.xlu0 %423
      %425 = vrot.lane.b32.xlu0 %v327, 12
      %v426 = vpop.permute.xlu0 %425
      %427 = vrot.lane.b32.xlu0 %v328, 12
      %v428 = vpop.permute.xlu0 %427
      %429 = vrot.lane.b32.xlu0 %v329, 12
      %v430 = vpop.permute.xlu0 %429
      %431 = vrot.lane.b32.xlu0 %v330, 12
      %v432 = vpop.permute.xlu0 %431
      %433 = vrot.lane.b32.xlu0 %v331, 12
      %v434 = vpop.permute.xlu0 %433
      %435 = vrot.lane.b32.xlu0 %v332, 12
      %v436 = vpop.permute.xlu0 %435
      %437 = vrot.lane.b32.xlu0 %v333, 12
      %v438 = vpop.permute.xlu0 %437
      %455 = vrot.lane.b32.xlu0 %v334, 18
      %v456 = vpop.permute.xlu0 %455
      %457 = vrot.lane.b32.xlu0 %v335, 18
      %v458 = vpop.permute.xlu0 %457
      %459 = vrot.lane.b32.xlu0 %v336, 18
      %v460 = vpop.permute.xlu0 %459
      %461 = vrot.lane.b32.xlu0 %v337, 18
      %v462 = vpop.permute.xlu0 %461
      %463 = vrot.lane.b32.xlu0 %v338, 18
      %v464 = vpop.permute.xlu0 %463
      %465 = vrot.lane.b32.xlu0 %v339, 18
      %v466 = vpop.permute.xlu0 %465
      %467 = vrot.lane.b32.xlu0 %v340, 18
      %v468 = vpop.permute.xlu0 %467
      %469 = vrot.lane.b32.xlu0 %v341, 18
      %v470 = vpop.permute.xlu0 %469
      %487 = vrot.lane.b32.xlu0 %v342, 24
      %v488 = vpop.permute.xlu0 %487
      %489 = vrot.lane.b32.xlu0 %v343, 24
      %v490 = vpop.permute.xlu0 %489
      %491 = vrot.lane.b32.xlu0 %v344, 24
      %v492 = vpop.permute.xlu0 %491
      %493 = vrot.lane.b32.xlu0 %v345, 24
      %v494 = vpop.permute.xlu0 %493
      %495 = vrot.lane.b32.xlu0 %v346, 24
      %v496 = vpop.permute.xlu0 %495
      %497 = vrot.lane.b32.xlu0 %v347, 24
      %v498 = vpop.permute.xlu0 %497
      %499 = vrot.lane.b32.xlu0 %v348, 24
      %v500 = vpop.permute.xlu0 %499
      %501 = vrot.lane.b32.xlu0 %v349, 24
      %v502 = vpop.permute.xlu0 %501
      %519 = vrot.lane.b32.xlu0 %v350, 30
      %v520 = vpop.permute.xlu0 %519
      %521 = vrot.lane.b32.xlu0 %v351, 30
      %v522 = vpop.permute.xlu0 %521
      %523 = vrot.lane.b32.xlu0 %v352, 30
      %v524 = vpop.permute.xlu0 %523
      %525 = vrot.lane.b32.xlu0 %v353, 30
      %v526 = vpop.permute.xlu0 %525
      %527 = vrot.lane.b32.xlu0 %v354, 30
      %v528 = vpop.permute.xlu0 %527
      %529 = vrot.lane.b32.xlu0 %v355, 30
      %v530 = vpop.permute.xlu0 %529
      %531 = vrot.lane.b32.xlu0 %v356, 30
      %v532 = vpop.permute.xlu0 %531
      %533 = vrot.lane.b32.xlu0 %v357, 30
      %v534 = vpop.permute.xlu0 %533
      %551 = vrot.lane.b32.xlu0 %v359, 36
      %v552 = vpop.permute.xlu0 %551
      %553 = vrot.lane.b32.xlu0 %v360, 36
      %v554 = vpop.permute.xlu0 %553
      %555 = vrot.lane.b32.xlu0 %v361, 36
      %v556 = vpop.permute.xlu0 %555
      %557 = vrot.lane.b32.xlu0 %v362, 36
      %v558 = vpop.permute.xlu0 %557
      %559 = vrot.lane.b32.xlu0 %v363, 36
      %v560 = vpop.permute.xlu0 %559
      %561 = vrot.lane.b32.xlu0 %v364, 36
      %v562 = vpop.permute.xlu0 %561
      %563 = vrot.lane.b32.xlu0 %v365, 36
      %v564 = vpop.permute.xlu0 %563
      %565 = vrot.lane.b32.xlu0 %v366, 36
      %v566 = vpop.permute.xlu0 %565
      %583 = vrot.lane.b32.xlu0 %v367, 42
      %v584 = vpop.permute.xlu0 %583
      %585 = vrot.lane.b32.xlu0 %v368, 42
      %v586 = vpop.permute.xlu0 %585
      %587 = vrot.lane.b32.xlu0 %v369, 42
      %v588 = vpop.permute.xlu0 %587
      %589 = vrot.lane.b32.xlu0 %v370, 42
      %v590 = vpop.permute.xlu0 %589
      %591 = vrot.lane.b32.xlu0 %v371, 42
      %v592 = vpop.permute.xlu0 %591
      %593 = vrot.lane.b32.xlu0 %v372, 42
      %v594 = vpop.permute.xlu0 %593
      %595 = vrot.lane.b32.xlu0 %v373, 42
      %v596 = vpop.permute.xlu0 %595
      %597 = vrot.lane.b32.xlu0 %v374, 42
      %v598 = vpop.permute.xlu0 %597
      %615 = vrot.lane.b32.xlu0 %v375, 48
      %v616 = vpop.permute.xlu0 %615
      %617 = vrot.lane.b32.xlu0 %v376, 48
      %v618 = vpop.permute.xlu0 %617
      %619 = vrot.lane.b32.xlu0 %v377, 48
      %v620 = vpop.permute.xlu0 %619
      %621 = vrot.lane.b32.xlu0 %v378, 48
      %v622 = vpop.permute.xlu0 %621
      %623 = vrot.lane.b32.xlu0 %v379, 48
      %v624 = vpop.permute.xlu0 %623
      %625 = vrot.lane.b32.xlu0 %v380, 48
      %v626 = vpop.permute.xlu0 %625
      %627 = vrot.lane.b32.xlu0 %v381, 48
      %v628 = vpop.permute.xlu0 %627
      %629 = vrot.lane.b32.xlu0 %v382, 48
      %v630 = vpop.permute.xlu0 %629
      %v639 = vsel %vm277, %v310, %v392
      %v640 = vsel %vm277, %v311, %v394
      %v641 = vsel %vm277, %v312, %v396
      %v642 = vsel %vm277, %v313, %v398
      %v643 = vsel %vm277, %v314, %v400
      %v644 = vsel %vm277, %v315, %v402
      %v645 = vsel %vm277, %v316, %v404
      %v646 = vsel %vm277, %v317, %v406
      %vm647 = vcmask 97280
      %v648 = vsel %vm647, %v639, %v424
      %v649 = vsel %vm647, %v640, %v426
      %v650 = vsel %vm647, %v641, %v428
      %v651 = vsel %vm647, %v642, %v430
      %v652 = vsel %vm647, %v643, %v432
      %v653 = vsel %vm647, %v644, %v434
      %v654 = vsel %vm647, %v645, %v436
      %v655 = vsel %vm647, %v646, %v438
      %vm656 = vcmask 146432
      %v657 = vsel %vm656, %v648, %v456
      %v658 = vsel %vm656, %v649, %v458
      %v659 = vsel %vm656, %v650, %v460
      %v660 = vsel %vm656, %v651, %v462
      %v661 = vsel %vm656, %v652, %v464
      %v662 = vsel %vm656, %v653, %v466
      %v663 = vsel %vm656, %v654, %v468
      %v664 = vsel %vm656, %v655, %v470
      %vm665 = vcmask 195584
      %v666 = vsel %vm665, %v657, %v488
      %v667 = vsel %vm665, %v658, %v490
      %v668 = vsel %vm665, %v659, %v492
      %v669 = vsel %vm665, %v660, %v494
      %v670 = vsel %vm665, %v661, %v496
      %v671 = vsel %vm665, %v662, %v498
      %v672 = vsel %vm665, %v663, %v500
      %v673 = vsel %vm665, %v664, %v502
      %vm674 = vcmask 244736
      %v675 = vsel %vm674, %v666, %v520
      %v676 = vsel %vm674, %v667, %v522
      %v677 = vsel %vm674, %v668, %v524
      %v678 = vsel %vm674, %v669, %v526
      %v679 = vsel %vm674, %v670, %v528
      %v680 = vsel %vm674, %v671, %v530
      %v681 = vsel %vm674, %v672, %v532
      %v682 = vsel %vm674, %v673, %v534
      %vm683 = vcmask 293888
      %v684 = vsel %vm683, %v675, %v552
      %v685 = vsel %vm683, %v676, %v554
      %v686 = vsel %vm683, %v677, %v556
      %v687 = vsel %vm683, %v678, %v558
      %v688 = vsel %vm683, %v679, %v560
      %v689 = vsel %vm683, %v680, %v562
      %v690 = vsel %vm683, %v681, %v564
      %v691 = vsel %vm683, %v682, %v566
      %vm692 = vcmask 343040
      %v693 = vsel %vm692, %v684, %v584
      %v694 = vsel %vm692, %v685, %v586
      %v695 = vsel %vm692, %v686, %v588
      %v696 = vsel %vm692, %v687, %v590
      %v697 = vsel %vm692, %v688, %v592
      %v698 = vsel %vm692, %v689, %v594
      %v699 = vsel %vm692, %v690, %v596
      %v700 = vsel %vm692, %v691, %v598
      %vm701 = vcmask 392192
      %v702 = vsel %vm701, %v693, %v616
      %v703 = vsel %vm701, %v694, %v618
      %v704 = vsel %vm701, %v695, %v620
      %v705 = vsel %vm701, %v696, %v622
      %v706 = vsel %vm701, %v697, %v624
      %v707 = vsel %vm701, %v698, %v626
      %v708 = vsel %vm701, %v699, %v628
      %v709 = vsel %vm701, %v700, %v630
      %v710 = vpack.c.bf16 %v703, %v702
      %v711 = vpack.c.bf16 %v705, %v704
      %v712 = vpack.c.bf16 %v707, %v706
      %v713 = vpack.c.bf16 %v709, %v708
      %v714 = vld [vmem:[%s3] sm:$0xf]
      %v715 = vld [vmem:[%s3 + $0x4] sm:$0xf]
      %v716 = vld [vmem:[%s3 + $0x8] sm:$0xf]
      %v717 = vld [vmem:[%s3 + $0xc] sm:$0xf]
      %v718 = vld [vmem:[%s3 + $0x10] sm:$0xf]
      %v719 = vld [vmem:[%s3 + $0x14] sm:$0xf]
      %v720 = vld [vmem:[%s3 + $0x18] sm:$0x7]
      %v728 = vunpack.c.l.b16 %v714
      %v729 = vunpack.c.l.b16 %v715
      %v730 = vunpack.c.l.b16 %v716
      %v731 = vunpack.c.l.b16 %v717
      %v732 = vunpack.c.l.b16 %v718
      %v733 = vunpack.c.l.b16 %v719
      %v734 = vunpack.c.l.b16 %v720
      %v735 = vpack.c.b16 %v729, %v728
      %v736 = vpack.c.b16 %v731, %v730
      %v737 = vpack.c.b16 %v733, %v732
      %v738 = vpack.c.b16 %v734, %v734
      %vm742 = vcmask 441344
      %v744 = vsel %vm742, %v710, 0
      %v747 = vsel %vm742, %v711, 0
      %v750 = vsel %vm742, %v712, 0
      %v753 = vsel %vm742, %v713, 0
      %vm755 = vcmask 1042432
      %v757 = vsel %vm755, %v738, 0
      %759 = vmatpush.bf16.msra.mxu0 0
      %760 = vmatpush.bf16.msra.mxu0 0
      %761 = vmatpush.bf16.msra.mxu0 0
      %762 = vmatpush.bf16.msra.mxu0 0
      %763 = vmatpush.bf16.msra.mxu0 %v757
      %764 = vmatpush.bf16.msra.mxu0 %v737
      %765 = vmatpush.bf16.msra.mxu0 %v736
      %766 = vmatpush.bf16.msra.mxu0 %v735
      %767 = vmatmul.bf16.gmra.mxu0 %v744
      %v768 = vpop.f32.mrf.mxu0
      %v769 = vadd.f32 0.0, %v768
      %v770 = vpop.f32.mrf.mxu0
      %v771 = vadd.f32 0.0, %v770
      %772 = vmatmul.bf16.gmra.mxu0 %v747
      %v773 = vpop.f32.mrf.mxu0
      %v774 = vadd.f32 0.0, %v773
      %v775 = vpop.f32.mrf.mxu0
      %v776 = vadd.f32 0.0, %v775
      %777 = vmatmul.bf16.gmra.mxu0 %v750
      %v778 = vpop.f32.mrf.mxu0
      %v779 = vadd.f32 0.0, %v778
      %v780 = vpop.f32.mrf.mxu0
      %v781 = vadd.f32 0.0, %v780
      %782 = vmatmul.bf16.gmra.mxu0 %v753
      %v783 = vpop.f32.mrf.mxu0
      %v784 = vadd.f32 0.0, %v783
      %v785 = vpop.f32.mrf.mxu0
      %v786 = vadd.f32 0.0, %v785
      %787 = vdwg.mxu0
      %788 = vst.msk [vmem:[%s231] sm:$0xff] %vm277, %v769
      %789 = vst.msk [vmem:[%s231 + $0x8] sm:$0xff] %vm277, %v771
      %790 = vst.msk [vmem:[%s231 + $0x10] sm:$0xff] %vm277, %v774
      %791 = vst.msk [vmem:[%s231 + $0x18] sm:$0xff] %vm277, %v776
      %792 = vst.msk [vmem:[%s231 + $0x20] sm:$0xff] %vm277, %v779
      %793 = vst.msk [vmem:[%s231 + $0x28] sm:$0xff] %vm277, %v781
      %794 = vst.msk [vmem:[%s231 + $0x30] sm:$0xff] %vm277, %v784
      %795 = vst.msk [vmem:[%s231 + $0x38] sm:$0xff] %vm277, %v786
      %v796 = vsel %vm277, %v769, 0.0
      %v797 = vsel %vm277, %v771, 0.0
      %v798 = vadd.f32 %v796, %v797
      %v799 = vsel %vm277, %v774, 0.0
      %v800 = vadd.f32 %v798, %v799
      %v801 = vsel %vm277, %v776, 0.0
      %v802 = vadd.f32 %v800, %v801
      %v803 = vsel %vm277, %v779, 0.0
      %v804 = vadd.f32 %v802, %v803
      %v805 = vsel %vm277, %v781, 0.0
      %v806 = vadd.f32 %v804, %v805
      %v807 = vsel %vm277, %v784, 0.0
      %v808 = vadd.f32 %v806, %v807
      %v809 = vsel %vm277, %v786, 0.0
      %v810 = vadd.f32 %v808, %v809
      %v811 = vrot.slane %v810, 4
      %v812 = vadd.f32 %v810, %v811
      %v813 = vrot.slane %v812, 2
      %v814 = vadd.f32 %v812, %v813
      %v815 = vrot.slane %v814, 1
      %v816 = vadd.f32 %v814, %v815
      %817 = vst.msk [vmem:[%s235] sm:$0x1] %vm285, %v816
      %v818 = vmul.f32 %v769, %v769
      %v819 = vmul.f32 %v771, %v771
      %v820 = vmul.f32 %v774, %v774
      %v821 = vmul.f32 %v776, %v776
      %v822 = vmul.f32 %v779, %v779
      %v823 = vmul.f32 %v781, %v781
      %v824 = vmul.f32 %v784, %v784
      %v825 = vmul.f32 %v786, %v786
      %v826 = vsel %vm277, %v818, 0.0
      %v827 = vsel %vm277, %v819, 0.0
      %v828 = vadd.f32 %v826, %v827
      %v829 = vsel %vm277, %v820, 0.0
      %v830 = vadd.f32 %v828, %v829
      %v831 = vsel %vm277, %v821, 0.0
      %v832 = vadd.f32 %v830, %v831
      %v833 = vsel %vm277, %v822, 0.0
      %v834 = vadd.f32 %v832, %v833
      %v835 = vsel %vm277, %v823, 0.0
      %v836 = vadd.f32 %v834, %v835
      %v837 = vsel %vm277, %v824, 0.0
      %v838 = vadd.f32 %v836, %v837
      %v839 = vsel %vm277, %v825, 0.0
      %v840 = vadd.f32 %v838, %v839
      %v841 = vrot.slane %v840, 4
      %v842 = vadd.f32 %v840, %v841
      %v843 = vrot.slane %v842, 2
      %v844 = vadd.f32 %v842, %v843
      %v845 = vrot.slane %v844, 1
      %v846 = vadd.f32 %v844, %v845
      %847 = vst.msk [vmem:[%s235 + $0x1] sm:$0x1] %vm285, %v846
      %p848 = scmp.lt.s32.totalorder %s17, 1
      %s849 = scalar_select %p848, %s17, 1
      %s850 = smul.addr %s849, 8
      %s851 = smul.addr %s850, 8
      %s852 = scalar_lea.vmem %s4, %s851
      %p853 = scmp.lt.s32.totalorder %s17, 1
      %s854 = scalar_select %p853, %s17, 1
      %s855 = smul.addr %s854, 2
      %s856 = scalar_lea.vmem %s5, %s855
      // Predicated region
      $region37: #{bottle2neck_forward.7} parent=35 // pred_check
        %p857 = pneg %p124
      $region38: #{bottle2neck_forward.7} parent=35 // pred_check_branch
        %859 = sbr.rel (%p857) target = $region40
      $region39: #{bottle2neck_forward.7} parent=35 // pred_region
        _
      $region40: #{bottle2neck_forward.7} parent=35 // pred_fallthru
        _
      // Predicated region
      $region41: #{bottle2neck_forward.7} parent=35 // pred_check
        %p860 = pneg %p150
      $region42: #{bottle2neck_forward.7} parent=35 // pred_check_branch
        %862 = sbr.rel (%p860) target = $region44
      $region43: #{bottle2neck_forward.7} parent=35 // pred_region
        _
      $region44: #{bottle2neck_forward.7} parent=35 // pred_fallthru
        _
    $region36: #{bottle2neck_forward.7} parent=5 // pred_fallthru
      _
    %p863 = scmp.le.s32.totalorder 2, %s12
    // Predicated region
    $region45: #{bottle2neck_forward.7} parent=5 // pred_check
      %p864 = pneg %p863
    $region46: #{bottle2neck_forward.7} parent=5 // pred_check_branch
      %866 = sbr.rel (%p864) target = $region48
    $region47: #{bottle2neck_forward.7} parent=5 // pred_region
      %s867 = ssub.s32 %s12, 2
      // Predicated region
      $region49: #{bottle2neck_forward.7} parent=47 // pred_check
        %p868 = pneg %p130
      $region50: #{bottle2neck_forward.7} parent=47 // pred_check_branch
        %870 = sbr.rel (%p868) target = $region52
      $region51: #{bottle2neck_forward.7} parent=47 // pred_region
        %p871 = scmp.lt.s32.totalorder %s18, 1
        %s872 = scalar_select %p871, %s18, 1
        %s873 = smul.addr %s872, 8
        %s874 = smul.addr %s873, 8
        %s875 = scalar_lea.vmem %s4, %s874
      $region52: #{bottle2neck_forward.7} parent=47 // pred_fallthru
        _
      // Predicated region
      $region53: #{bottle2neck_forward.7} parent=47 // pred_check
        %p876 = pneg %p156
      $region54: #{bottle2neck_forward.7} parent=47 // pred_check_branch
        %878 = sbr.rel (%p876) target = $region56
      $region55: #{bottle2neck_forward.7} parent=47 // pred_region
        %p879 = scmp.lt.s32.totalorder %s18, 1
        %s880 = scalar_select %p879, %s18, 1
        %s881 = smul.addr %s880, 2
        %s882 = scalar_lea.vmem %s5, %s881
      $region56: #{bottle2neck_forward.7} parent=47 // pred_fallthru
        _
    $region48: #{bottle2neck_forward.7} parent=5 // pred_fallthru
      _
  $region6: #{bottle2neck_forward.7} parent=0 // loop_footer
    %s16 = sadd.s32 1, %s12
  $region7: #{bottle2neck_forward.7} parent=0 // loop_footer_branch
    %11 = sbr.rel target = $region3
  $region8: #{bottle2neck_forward.7} parent=0 // loop_exit
    _

// kernel: bottle2neck_forward.8
$region0: #{bottle2neck_forward.8}
  #allocation0 [shape = 'u32[]', space=smem, size = 0x4, offset = 0x4, fixed_abs, tag = 'smem constant byte address 0x4 - core index']
  #allocation1 [shape = 'u32[72,128]{1,0:T(1,128)}', space=vmem, size = 0x9000, scoped, tag = 'internal scratch']
  #allocation2 [shape = 'f32[10,10,6]{2,1,0:T(8,128)}', space=vmem, size = 0x14000, scoped, tag = 'scratch operand']
  %s0 = inlined_call_operand.vmem [shape: f32[4,2,8,8,6], index: 0, kind: input, shape index: {}]
  %s1 = inlined_call_operand.vmem [shape: f32[1,6], index: 1, kind: input, shape index: {}]
  %s2 = inlined_call_operand.vmem [shape: f32[1,6], index: 2, kind: input, shape index: {}]
  %s3 = inlined_call_operand.vmem [shape: f32[2,8,8,6], index: 3, kind: input, shape index: {}]
  %s4 = inlined_call_operand.vmem [shape: f32[1,6], index: 4, kind: input, shape index: {}]
  %s5 = inlined_call_operand.vmem [shape: f32[1,6], index: 5, kind: input, shape index: {}]
  %s6 = inlined_call_operand.vmem [shape: bf16[54,6], index: 6, kind: input, shape index: {}]
  %s7 = inlined_call_operand.vmem [shape: f32[2,8,8,6], index: 7, kind: output, shape index: {0}]
  %s8 = inlined_call_operand.vmem [shape: f32[2,2,6], index: 8, kind: output, shape index: {1}]
  %9 = xla_tuple %s7, %s8
  %s10 = sld [smem:[#allocation0]]
  $region69: #{bottle2neck_forward.8} parent=0
    _
  %s12 = ssub.s32 1, %s10
  %s13 = scalar_select 0, %s12, %s10
  loop: start=0, step=1, limit=4
  $region2: #{bottle2neck_forward.8} parent=0 // loop_pre_header
    _
  $region3: #{bottle2neck_forward.8} parent=0 // loop_header
    %s15 = sphi 0, %s19
    %p16 = scmp.ge.s32.totalorder %s15, 4
    %s25 = sphi 0, %s27
    %s28 = sphi 0, %s25
    %s29 = sphi 0, %s28
    %s45 = sphi 0, %s29
    %s49 = sphi 0, %s49
    %s51 = sphi 0, %s49
    %s52 = sphi 0, %s51
    %s66 = sphi 0, %s52
    %s70 = sphi 0, %s70
    %s72 = sphi 0, %s70
    %s73 = sphi 0, %s72
    %s87 = sphi 0, %s73
    %s93 = sphi 0, %s95
    %s96 = sphi 0, %s93
    %s97 = sphi 0, %s96
    %s113 = sphi 0, %s97
    %s117 = sphi 0, %s117
    %s119 = sphi 0, %s117
    %s120 = sphi 0, %s119
    %s134 = sphi 0, %s120
    %s138 = sphi 0, %s138
    %s140 = sphi 0, %s138
    %s141 = sphi 0, %s140
    %s155 = sphi 0, %s141
    %s159 = sphi 0, %s159
    %s161 = sphi 0, %s159
    %s162 = sphi 0, %s161
    %s176 = sphi 0, %s162
    %s182 = sphi 0, %s184
    %s185 = sphi 0, %s182
    %s186 = sphi 0, %s185
    %s202 = sphi 0, %s186
    %s208 = sphi 0, %s210
    %s211 = sphi 0, %s208
    %s212 = sphi 0, %s211
    %s228 = sphi 0, %s212
  $region4: #{bottle2neck_forward.8} parent=0 // loop_header_branch
    %18 = sbr.rel (%p16) target = $region8
  $region5: #{bottle2neck_forward.8} parent=0 // loop_body
    %s20 = ssub.s32 %s15, 1
    %s21 = ssub.s32 %s15, 2
    %s22 = sadd.s32 %s15, 1
    %s23 = ssub.s32 %s15, %s22
    %p24 = scmp.eq.s32.totalorder %s23, 0
    %s26 = sadd.s32 %s25, 1
    %s27 = scalar_select %p24, %s25, %s26
    %p30 = pneg %p24
    %p31 = scmp.eq.s32.totalorder %s15, 1
    %p32 = por %p30, %p31
    %p33 = scmp.ne.s32.totalorder %s25, %s28
    %p34 = scmp.eq.s32.totalorder %s15, 0
    %p35 = por %p33, %p34
    %p36 = scmp.ne.s32.totalorder %s25, %s28
    %p37 = scmp.eq.s32.totalorder %s20, 1
    %p38 = por %p36, %p37
    %p39 = scmp.ne.s32.totalorder %s28, %s29
    %p40 = scmp.eq.s32.totalorder %s20, 0
    %p41 = por %p39, %p40
    %p42 = scmp.ne.s32.totalorder %s28, %s29
    %p43 = scmp.eq.s32.totalorder %s21, 1
    %p44 = por %p42, %p43
    %p46 = scmp.ne.s32.totalorder %s29, %s45
    %p47 = scmp.eq.s32.totalorder %s21, 0
    %p48 = por %p46, %p47
    %s50 = sadd.s32 %s49, 1
    %p53 = scmp.eq.s32.totalorder %s15, 1
    %p54 = scmp.ne.s32.totalorder %s49, %s51
    %p55 = scmp.eq.s32.totalorder %s15, 0
    %p56 = por %p54, %p55
    %p57 = scmp.ne.s32.totalorder %s49, %s51
    %p58 = scmp.eq.s32.totalorder %s20, 1
    %p59 = por %p57, %p58
    %p60 = scmp.ne.s32.totalorder %s51, %s52
    %p61 = scmp.eq.s32.totalorder %s20, 0
    %p62 = por %p60, %p61
    %p63 = scmp.ne.s32.totalorder %s51, %s52
    %p64 = scmp.eq.s32.totalorder %s21, 1
    %p65 = por %p63, %p64
    %p67 = scmp.ne.s32.totalorder %s52, %s66
    %p68 = scmp.eq.s32.totalorder %s21, 0
    %p69 = por %p67, %p68
    %s71 = sadd.s32 %s70, 1
    %p74 = scmp.eq.s32.totalorder %s15, 1
    %p75 = scmp.ne.s32.totalorder %s70, %s72
    %p76 = scmp.eq.s32.totalorder %s15, 0
    %p77 = por %p75, %p76
    %p78 = scmp.ne.s32.totalorder %s70, %s72
    %p79 = scmp.eq.s32.totalorder %s20, 1
    %p80 = por %p78, %p79
    %p81 = scmp.ne.s32.totalorder %s72, %s73
    %p82 = scmp.eq.s32.totalorder %s20, 0
    %p83 = por %p81, %p82
    %p84 = scmp.ne.s32.totalorder %s72, %s73
    %p85 = scmp.eq.s32.totalorder %s21, 1
    %p86 = por %p84, %p85
    %p88 = scmp.ne.s32.totalorder %s73, %s87
    %p89 = scmp.eq.s32.totalorder %s21, 0
    %p90 = por %p88, %p89
    %s91 = ssub.s32 %s15, %s22
    %p92 = scmp.eq.s32.totalorder %s91, 0
    %s94 = sadd.s32 %s93, 1
    %s95 = scalar_select %p92, %s93, %s94
    %p98 = pneg %p92
    %p99 = scmp.eq.s32.totalorder %s15, 1
    %p100 = por %p98, %p99
    %p101 = scmp.ne.s32.totalorder %s93, %s96
    %p102 = scmp.eq.s32.totalorder %s15, 0
    %p103 = por %p101, %p102
    %p104 = scmp.ne.s32.totalorder %s93, %s96
    %p105 = scmp.eq.s32.totalorder %s20, 1
    %p106 = por %p104, %p105
    %p107 = scmp.ne.s32.totalorder %s96, %s97
    %p108 = scmp.eq.s32.totalorder %s20, 0
    %p109 = por %p107, %p108
    %p110 = scmp.ne.s32.totalorder %s96, %s97
    %p111 = scmp.eq.s32.totalorder %s21, 1
    %p112 = por %p110, %p111
    %p114 = scmp.ne.s32.totalorder %s97, %s113
    %p115 = scmp.eq.s32.totalorder %s21, 0
    %p116 = por %p114, %p115
    %s118 = sadd.s32 %s117, 1
    %p121 = scmp.eq.s32.totalorder %s15, 1
    %p122 = scmp.ne.s32.totalorder %s117, %s119
    %p123 = scmp.eq.s32.totalorder %s15, 0
    %p124 = por %p122, %p123
    %p125 = scmp.ne.s32.totalorder %s117, %s119
    %p126 = scmp.eq.s32.totalorder %s20, 1
    %p127 = por %p125, %p126
    %p128 = scmp.ne.s32.totalorder %s119, %s120
    %p129 = scmp.eq.s32.totalorder %s20, 0
    %p130 = por %p128, %p129
    %p131 = scmp.ne.s32.totalorder %s119, %s120
    %p132 = scmp.eq.s32.totalorder %s21, 1
    %p133 = por %p131, %p132
    %p135 = scmp.ne.s32.totalorder %s120, %s134
    %p136 = scmp.eq.s32.totalorder %s21, 0
    %p137 = por %p135, %p136
    %s139 = sadd.s32 %s138, 1
    %p142 = scmp.eq.s32.totalorder %s15, 1
    %p143 = scmp.ne.s32.totalorder %s138, %s140
    %p144 = scmp.eq.s32.totalorder %s15, 0
    %p145 = por %p143, %p144
    %p146 = scmp.ne.s32.totalorder %s138, %s140
    %p147 = scmp.eq.s32.totalorder %s20, 1
    %p148 = por %p146, %p147
    %p149 = scmp.ne.s32.totalorder %s140, %s141
    %p150 = scmp.eq.s32.totalorder %s20, 0
    %p151 = por %p149, %p150
    %p152 = scmp.ne.s32.totalorder %s140, %s141
    %p153 = scmp.eq.s32.totalorder %s21, 1
    %p154 = por %p152, %p153
    %p156 = scmp.ne.s32.totalorder %s141, %s155
    %p157 = scmp.eq.s32.totalorder %s21, 0
    %p158 = por %p156, %p157
    %s160 = sadd.s32 %s159, 1
    %p163 = scmp.eq.s32.totalorder %s15, 1
    %p164 = scmp.ne.s32.totalorder %s159, %s161
    %p165 = scmp.eq.s32.totalorder %s15, 0
    %p166 = por %p164, %p165
    %p167 = scmp.ne.s32.totalorder %s159, %s161
    %p168 = scmp.eq.s32.totalorder %s20, 1
    %p169 = por %p167, %p168
    %p170 = scmp.ne.s32.totalorder %s161, %s162
    %p171 = scmp.eq.s32.totalorder %s20, 0
    %p172 = por %p170, %p171
    %p173 = scmp.ne.s32.totalorder %s161, %s162
    %p174 = scmp.eq.s32.totalorder %s21, 1
    %p175 = por %p173, %p174
    %p177 = scmp.ne.s32.totalorder %s162, %s176
    %p178 = scmp.eq.s32.totalorder %s21, 0
    %p179 = por %p177, %p178
    %s180 = ssub.s32 %s15, %s22
    %p181 = scmp.eq.s32.totalorder %s180, 0
    %s183 = sadd.s32 %s182, 1
    %s184 = scalar_select %p181, %s182, %s183
    %p187 = pneg %p181
    %p188 = scmp.eq.s32.totalorder %s15, 1
    %p189 = por %p187, %p188
    %p190 = scmp.ne.s32.totalorder %s182, %s185
    %p191 = scmp.eq.s32.totalorder %s15, 0
    %p192 = por %p190, %p191
    %p193 = scmp.ne.s32.totalorder %s182, %s185
    %p194 = scmp.eq.s32.totalorder %s20, 1
    %p195 = por %p193, %p194
    %p196 = scmp.ne.s32.totalorder %s185, %s186
    %p197 = scmp.eq.s32.totalorder %s20, 0
    %p198 = por %p196, %p197
    %p199 = scmp.ne.s32.totalorder %s185, %s186
    %p200 = scmp.eq.s32.totalorder %s21, 1
    %p201 = por %p199, %p200
    %p203 = scmp.ne.s32.totalorder %s186, %s202
    %p204 = scmp.eq.s32.totalorder %s21, 0
    %p205 = por %p203, %p204
    %s206 = ssub.s32 %s15, %s22
    %p207 = scmp.eq.s32.totalorder %s206, 0
    %s209 = sadd.s32 %s208, 1
    %s210 = scalar_select %p207, %s208, %s209
    %p213 = pneg %p207
    %p214 = scmp.eq.s32.totalorder %s15, 1
    %p215 = por %p213, %p214
    %p216 = scmp.ne.s32.totalorder %s208, %s211
    %p217 = scmp.eq.s32.totalorder %s15, 0
    %p218 = por %p216, %p217
    %p219 = scmp.ne.s32.totalorder %s208, %s211
    %p220 = scmp.eq.s32.totalorder %s20, 1
    %p221 = por %p219, %p220
    %p222 = scmp.ne.s32.totalorder %s211, %s212
    %p223 = scmp.eq.s32.totalorder %s20, 0
    %p224 = por %p222, %p223
    %p225 = scmp.ne.s32.totalorder %s211, %s212
    %p226 = scmp.eq.s32.totalorder %s21, 1
    %p227 = por %p225, %p226
    %p229 = scmp.ne.s32.totalorder %s212, %s228
    %p230 = scmp.eq.s32.totalorder %s21, 0
    %p231 = por %p229, %p230
    %p232 = scmp.le.s32.totalorder 1, %s15
    %p233 = scmp.lt.s32.totalorder %s15, 3
    %p234 = pnand %p232, %p233
    %p235 = pneg %p234
    // Predicated region
    $region9: #{bottle2neck_forward.8} parent=5 // pred_check
      _
    $region10: #{bottle2neck_forward.8} parent=5 // pred_check_branch
      %237 = sbr.rel (%p234) target = $region12
    $region11: #{bottle2neck_forward.8} parent=5 // pred_region
      %s238 = ssub.s32 %s15, 1
      // Predicated region
      $region13: #{bottle2neck_forward.8} parent=11 // pred_check
        %p239 = pneg %p62
      $region14: #{bottle2neck_forward.8} parent=11 // pred_check_branch
        %241 = sbr.rel (%p239) target = $region16
      $region15: #{bottle2neck_forward.8} parent=11 // pred_region
        _
      $region16: #{bottle2neck_forward.8} parent=11 // pred_fallthru
        _
      // Predicated region
      $region17: #{bottle2neck_forward.8} parent=11 // pred_check
        %p242 = pneg %p83
      $region18: #{bottle2neck_forward.8} parent=11 // pred_check_branch
        %244 = sbr.rel (%p242) target = $region20
      $region19: #{bottle2neck_forward.8} parent=11 // pred_region
        _
      $region20: #{bottle2neck_forward.8} parent=11 // pred_fallthru
        _
      // Predicated region
      $region21: #{bottle2neck_forward.8} parent=11 // pred_check
        %p245 = pneg %p130
      $region22: #{bottle2neck_forward.8} parent=11 // pred_check_branch
        %247 = sbr.rel (%p245) target = $region24
      $region23: #{bottle2neck_forward.8} parent=11 // pred_region
        _
      $region24: #{bottle2neck_forward.8} parent=11 // pred_fallthru
        _
      // Predicated region
      $region25: #{bottle2neck_forward.8} parent=11 // pred_check
        %p248 = pneg %p151
      $region26: #{bottle2neck_forward.8} parent=11 // pred_check_branch
        %250 = sbr.rel (%p248) target = $region28
      $region27: #{bottle2neck_forward.8} parent=11 // pred_region
        _
      $region28: #{bottle2neck_forward.8} parent=11 // pred_fallthru
        _
      // Predicated region
      $region29: #{bottle2neck_forward.8} parent=11 // pred_check
        %p251 = pneg %p172
      $region30: #{bottle2neck_forward.8} parent=11 // pred_check_branch
        %253 = sbr.rel (%p251) target = $region32
      $region31: #{bottle2neck_forward.8} parent=11 // pred_region
        _
      $region32: #{bottle2neck_forward.8} parent=11 // pred_fallthru
        _
    $region12: #{bottle2neck_forward.8} parent=5 // pred_fallthru
      _
    %p254 = scmp.lt.s32.totalorder %s15, 2
    // Predicated region
    $region33: #{bottle2neck_forward.8} parent=5 // pred_check
      %p255 = pneg %p254
    $region34: #{bottle2neck_forward.8} parent=5 // pred_check_branch
      %257 = sbr.rel (%p255) target = $region36
    $region35: #{bottle2neck_forward.8} parent=5 // pred_region
      // Predicated region
      $region37: #{bottle2neck_forward.8} parent=35 // pred_check
        %p258 = pneg %p35
      $region38: #{bottle2neck_forward.8} parent=35 // pred_check_branch
        %260 = sbr.rel (%p258) target = $region40
      $region39: #{bottle2neck_forward.8} parent=35 // pred_region
        %p261 = scmp.lt.s32.totalorder %s15, 1
        %s262 = scalar_select %p261, %s15, 1
        %s263 = smul.addr %s262, 8
        %s264 = sadd.s32 %s263, 16
        %s265 = smul.addr %s264, 8
        %s266 = scalar_lea.vmem %s0, %s265
      $region40: #{bottle2neck_forward.8} parent=35 // pred_fallthru
        _
      // Predicated region
      $region41: #{bottle2neck_forward.8} parent=35 // pred_check
        %p267 = pneg %p103
      $region42: #{bottle2neck_forward.8} parent=35 // pred_check_branch
        %269 = sbr.rel (%p267) target = $region44
      $region43: #{bottle2neck_forward.8} parent=35 // pred_region
        %p270 = scmp.lt.s32.totalorder %s15, 1
        %s271 = scalar_select %p270, %s15, 1
        %s272 = smul.addr %s271, 8
        %s273 = smul.addr %s272, 8
        %s274 = scalar_lea.vmem %s3, %s273
      $region44: #{bottle2neck_forward.8} parent=35 // pred_fallthru
        _
    $region36: #{bottle2neck_forward.8} parent=5 // pred_fallthru
      _
    %p275 = scmp.le.s32.totalorder 1, %s15
    %p276 = scmp.lt.s32.totalorder %s15, 3
    %p277 = pnand %p275, %p276
    %p278 = pneg %p277
    // Predicated region
    $region45: #{bottle2neck_forward.8} parent=5 // pred_check
      _
    $region46: #{bottle2neck_forward.8} parent=5 // pred_check_branch
      %280 = sbr.rel (%p277) target = $region48
    $region47: #{bottle2neck_forward.8} parent=5 // pred_region
      %s281 = ssub.s32 %s15, 1
      %p282 = scmp.lt.s32.totalorder %s20, 1
      %s283 = scalar_select %p282, %s20, 1
      %s284 = smul.addr %s283, 8
      %s285 = sadd.s32 %s284, 16
      %s286 = smul.addr %s285, 8
      %s287 = scalar_lea.vmem %s0, %s286
      %p288 = pneg %p41
      %p289 = pneg %p38
      %p290 = pneg %p62
      %p291 = pneg %p59
      %p292 = pneg %p83
      %p293 = pneg %p80
      %p294 = scmp.lt.s32.totalorder %s20, 1
      %s295 = scalar_select %p294, %s20, 1
      %s296 = smul.addr %s295, 8
      %s297 = smul.addr %s296, 8
      %s298 = scalar_lea.vmem %s3, %s297
      %p299 = pneg %p109
      %p300 = pneg %p106
      %p301 = pneg %p130
      %p302 = pneg %p127
      %p303 = pneg %p151
      %p304 = pneg %p148
      %p305 = pneg %p172
      %p306 = pneg %p169
      %p307 = pneg %p198
      %p308 = pneg %p195
      %p309 = scmp.lt.s32.totalorder %s20, 1
      %s310 = scalar_select %p309, %s20, 1
      %s311 = smul.addr %s310, 8
      %s312 = smul.addr %s311, 8
      %s313 = scalar_lea.vmem %s7, %s312
      %p314 = pneg %p224
      %p315 = pneg %p221
      %p316 = scmp.lt.s32.totalorder %s20, 1
      %s317 = scalar_select %p316, %s20, 1
      %s318 = smul.addr %s317, 2
      %s319 = scalar_lea.vmem %s8, %s318
      %p320 = scmp.lt.s32.totalorder %s20, 1
      %s321 = scalar_select %p320, %s20, 1
      %s322 = smul.addr %s321, 8
      %s323 = sadd.s32 %s322, 16
      %s324 = smul.addr %s323, 8
      %s325 = scalar_lea.vmem %s0, %s324
      %p326 = scmp.lt.s32.totalorder %s20, 1
      %s327 = scalar_select %p326, %s20, 1
      %s328 = smul.addr %s327, 8
      %s329 = smul.addr %s328, 8
      %s330 = scalar_lea.vmem %s3, %s329
      %p331 = scmp.lt.s32.totalorder %s20, 1
      %s332 = scalar_select %p331, %s20, 1
      %s333 = smul.addr %s332, 8
      %s334 = smul.addr %s333, 8
      %s335 = scalar_lea.vmem %s7, %s334
      %p336 = scmp.lt.s32.totalorder %s20, 1
      %s337 = scalar_select %p336, %s20, 1
      %s338 = smul.addr %s337, 2
      %s339 = scalar_lea.vmem %s8, %s338
      %v341 = vld [vmem:[%s1] sm:$0x1]
      %v342 = vld [vmem:[%s2] sm:$0x1]
      %v343 = vld [vmem:[%s325] sm:$0xff]
      %v344 = vld [vmem:[%s325 + $0x8] sm:$0xff]
      %v345 = vld [vmem:[%s325 + $0x10] sm:$0xff]
      %v346 = vld [vmem:[%s325 + $0x18] sm:$0xff]
      %v347 = vld [vmem:[%s325 + $0x20] sm:$0xff]
      %v348 = vld [vmem:[%s325 + $0x28] sm:$0xff]
      %v349 = vld [vmem:[%s325 + $0x30] sm:$0xff]
      %v350 = vld [vmem:[%s325 + $0x38] sm:$0xff]
      %v352 = vperm.slane %v341, 0
      %v354 = vmul.f32 %v343, %v352
      %v355 = vmul.f32 %v344, %v352
      %v356 = vmul.f32 %v345, %v352
      %v357 = vmul.f32 %v346, %v352
      %v358 = vmul.f32 %v347, %v352
      %v359 = vmul.f32 %v348, %v352
      %v360 = vmul.f32 %v349, %v352
      %v361 = vmul.f32 %v350, %v352
      %v363 = vperm.slane %v342, 0
      %v365 = vadd.f32 %v354, %v363
      %v366 = vadd.f32 %v355, %v363
      %v367 = vadd.f32 %v356, %v363
      %v368 = vadd.f32 %v357, %v363
      %v369 = vadd.f32 %v358, %v363
      %v370 = vadd.f32 %v359, %v363
      %v371 = vadd.f32 %v360, %v363
      %v372 = vadd.f32 %v361, %v363
      %v373 = vmax.f32 %v365, 0.0
      %v374 = vmax.f32 %v366, 0.0
      %v375 = vmax.f32 %v367, 0.0
      %v376 = vmax.f32 %v368, 0.0
      %v377 = vmax.f32 %v369, 0.0
      %v378 = vmax.f32 %v370, 0.0
      %v379 = vmax.f32 %v371, 0.0
      %v380 = vmax.f32 %v372, 0.0
      %v381 = vld [vmem:[%s4] sm:$0x1]
      %v382 = vld [vmem:[%s5] sm:$0x1]
      %v383 = vld [vmem:[%s330] sm:$0xff]
      %v384 = vld [vmem:[%s330 + $0x8] sm:$0xff]
      %v385 = vld [vmem:[%s330 + $0x10] sm:$0xff]
      %v386 = vld [vmem:[%s330 + $0x18] sm:$0xff]
      %v387 = vld [vmem:[%s330 + $0x20] sm:$0xff]
      %v388 = vld [vmem:[%s330 + $0x28] sm:$0xff]
      %v389 = vld [vmem:[%s330 + $0x30] sm:$0xff]
      %v390 = vld [vmem:[%s330 + $0x38] sm:$0xff]
      %v392 = vperm.slane %v381, 0
      %v394 = vmul.f32 %v383, %v392
      %v395 = vmul.f32 %v384, %v392
      %v396 = vmul.f32 %v385, %v392
      %v397 = vmul.f32 %v386, %v392
      %v398 = vmul.f32 %v387, %v392
      %v399 = vmul.f32 %v388, %v392
      %v400 = vmul.f32 %v389, %v392
      %v401 = vmul.f32 %v390, %v392
      %v403 = vperm.slane %v382, 0
      %v405 = vadd.f32 %v394, %v403
      %v406 = vadd.f32 %v395, %v403
      %v407 = vadd.f32 %v396, %v403
      %v408 = vadd.f32 %v397, %v403
      %v409 = vadd.f32 %v398, %v403
      %v410 = vadd.f32 %v399, %v403
      %v411 = vadd.f32 %v400, %v403
      %v412 = vadd.f32 %v401, %v403
      %v413 = vmax.f32 %v405, 0.0
      %v414 = vmax.f32 %v406, 0.0
      %v415 = vmax.f32 %v407, 0.0
      %v416 = vmax.f32 %v408, 0.0
      %v417 = vmax.f32 %v409, 0.0
      %v418 = vmax.f32 %v410, 0.0
      %v419 = vmax.f32 %v411, 0.0
      %v420 = vmax.f32 %v412, 0.0
      %v421 = vadd.f32 %v373, %v413
      %v422 = vadd.f32 %v374, %v414
      %v423 = vadd.f32 %v375, %v415
      %v424 = vadd.f32 %v376, %v416
      %v425 = vadd.f32 %v377, %v417
      %v426 = vadd.f32 %v378, %v418
      %v427 = vadd.f32 %v379, %v419
      %v428 = vadd.f32 %v380, %v420
      %vm429 = vcmask 48128
      %430 = vst.msk [vmem:[#allocation2] sm:$0xff] %vm429, 0.0
      %vm431 = vcmask 41984
      %432 = vst.msk [vmem:[#allocation2 + $0x8] sm:$0x3] %vm431, 0.0
      %s433 = scalar_lea.vmem [#allocation2], 144
      %434 = vst.msk [vmem:[%s433] sm:$0xff] %vm429, 0.0
      %435 = vst.msk [vmem:[%s433 + $0x8] sm:$0x3] %vm431, 0.0
      %s436 = scalar_lea.vmem [#allocation2], 16
      %vm437 = vcmask 40960
      %438 = vst.msk [vmem:[%s436] sm:$0x1] %vm437, 0.0
      %439 = vst.msk [vmem:[%s436 + $0x10] sm:$0x1] %vm437, 0.0
      %440 = vst.msk [vmem:[%s436 + $0x20] sm:$0x1] %vm437, 0.0
      %441 = vst.msk [vmem:[%s436 + $0x30] sm:$0x1] %vm437, 0.0
      %442 = vst.msk [vmem:[%s436 + $0x40] sm:$0x1] %vm437, 0.0
      %443 = vst.msk [vmem:[%s436 + $0x50] sm:$0x1] %vm437, 0.0
      %444 = vst.msk [vmem:[%s436 + $0x60] sm:$0x1] %vm437, 0.0
      %445 = vst.msk [vmem:[%s436 + $0x70] sm:$0x1] %vm437, 0.0
      %446 = vst.msk [vmem:[%s436 + $0x9] sm:$0x1] %vm437, 0.0
      %447 = vst.msk [vmem:[%s436 + $0x19] sm:$0x1] %vm437, 0.0
      %448 = vst.msk [vmem:[%s436 + $0x29] sm:$0x1] %vm437, 0.0
      %449 = vst.msk [vmem:[%s436 + $0x39] sm:$0x1] %vm437, 0.0
      %450 = vst.msk [vmem:[%s436 + $0x49] sm:$0x1] %vm437, 0.0
      %451 = vst.msk [vmem:[%s436 + $0x59] sm:$0x1] %vm437, 0.0
      %452 = vst.msk [vmem:[%s436 + $0x69] sm:$0x1] %vm437, 0.0
      %453 = vst.msk [vmem:[%s436 + $0x79] sm:$0x1] %vm437, 0.0
      %454 = vst.msk [vmem:[%s436 + $0x1] sm:$0xff] %vm429, %v421
      %455 = vst.msk [vmem:[%s436 + $0x11] sm:$0xff] %vm429, %v422
      %456 = vst.msk [vmem:[%s436 + $0x21] sm:$0xff] %vm429, %v423
      %457 = vst.msk [vmem:[%s436 + $0x31] sm:$0xff] %vm429, %v424
      %458 = vst.msk [vmem:[%s436 + $0x41] sm:$0xff] %vm429, %v425
      %459 = vst.msk [vmem:[%s436 + $0x51] sm:$0xff] %vm429, %v426
      %460 = vst.msk [vmem:[%s436 + $0x61] sm:$0xff] %vm429, %v427
      %461 = vst.msk [vmem:[%s436 + $0x71] sm:$0xff] %vm429, %v428
      %v462 = vld [vmem:[#allocation2] sm:$0xff]
      %v463 = vld [vmem:[#allocation2 + $0x10] sm:$0xff]
      %v464 = vld [vmem:[#allocation2 + $0x20] sm:$0xff]
      %v465 = vld [vmem:[#allocation2 + $0x30] sm:$0xff]
      %v466 = vld [vmem:[#allocation2 + $0x40] sm:$0xff]
      %v467 = vld [vmem:[#allocation2 + $0x50] sm:$0xff]
      %v468 = vld [vmem:[#allocation2 + $0x60] sm:$0xff]
      %v469 = vld [vmem:[#allocation2 + $0x70] sm:$0xff]
      %v470 = vld [vmem:[#allocation2 + $0x1] sm:$0xff]
      %v471 = vld [vmem:[#allocation2 + $0x11] sm:$0xff]
      %v472 = vld [vmem:[#allocation2 + $0x21] sm:$0xff]
      %v473 = vld [vmem:[#allocation2 + $0x31] sm:$0xff]
      %v474 = vld [vmem:[#allocation2 + $0x41] sm:$0xff]
      %v475 = vld [vmem:[#allocation2 + $0x51] sm:$0xff]
      %v476 = vld [vmem:[#allocation2 + $0x61] sm:$0xff]
      %v477 = vld [vmem:[#allocation2 + $0x71] sm:$0xff]
      %v478 = vld [vmem:[#allocation2 + $0x2] sm:$0xff]
      %v479 = vld [vmem:[#allocation2 + $0x12] sm:$0xff]
      %v480 = vld [vmem:[#allocation2 + $0x22] sm:$0xff]
      %v481 = vld [vmem:[#allocation2 + $0x32] sm:$0xff]
      %v482 = vld [vmem:[#allocation2 + $0x42] sm:$0xff]
      %v483 = vld [vmem:[#allocation2 + $0x52] sm:$0xff]
      %v484 = vld [vmem:[#allocation2 + $0x62] sm:$0xff]
      %v485 = vld [vmem:[#allocation2 + $0x72] sm:$0xff]
      %v486 = vld [vmem:[%s436] sm:$0xff]
      %v487 = vld [vmem:[%s436 + $0x10] sm:$0xff]
      %v488 = vld [vmem:[%s436 + $0x20] sm:$0xff]
      %v489 = vld [vmem:[%s436 + $0x30] sm:$0xff]
      %v490 = vld [vmem:[%s436 + $0x40] sm:$0xff]
      %v491 = vld [vmem:[%s436 + $0x50] sm:$0xff]
      %v492 = vld [vmem:[%s436 + $0x60] sm:$0xff]
      %v493 = vld [vmem:[%s436 + $0x70] sm:$0xff]
      %v494 = vld [vmem:[%s436 + $0x1] sm:$0xff]
      %v495 = vld [vmem:[%s436 + $0x11] sm:$0xff]
      %v496 = vld [vmem:[%s436 + $0x21] sm:$0xff]
      %v497 = vld [vmem:[%s436 + $0x31] sm:$0xff]
      %v498 = vld [vmem:[%s436 + $0x41] sm:$0xff]
      %v499 = vld [vmem:[%s436 + $0x51] sm:$0xff]
      %v500 = vld [vmem:[%s436 + $0x61] sm:$0xff]
      %v501 = vld [vmem:[%s436 + $0x71] sm:$0xff]
      %v502 = vld [vmem:[%s436 + $0x2] sm:$0xff]
      %v503 = vld [vmem:[%s436 + $0x12] sm:$0xff]
      %v504 = vld [vmem:[%s436 + $0x22] sm:$0xff]
      %v505 = vld [vmem:[%s436 + $0x32] sm:$0xff]
      %v506 = vld [vmem:[%s436 + $0x42] sm:$0xff]
      %v507 = vld [vmem:[%s436 + $0x52] sm:$0xff]
      %v508 = vld [vmem:[%s436 + $0x62] sm:$0xff]
      %v509 = vld [vmem:[%s436 + $0x72] sm:$0xff]
      %s510 = scalar_lea.vmem [#allocation2], 32
      %v511 = vld [vmem:[%s510] sm:$0xff]
      %v512 = vld [vmem:[%s510 + $0x10] sm:$0xff]
      %v513 = vld [vmem:[%s510 + $0x20] sm:$0xff]
      %v514 = vld [vmem:[%s510 + $0x30] sm:$0xff]
      %v515 = vld [vmem:[%s510 + $0x40] sm:$0xff]
      %v516 = vld [vmem:[%s510 + $0x50] sm:$0xff]
      %v517 = vld [vmem:[%s510 + $0x60] sm:$0xff]
      %v518 = vld [vmem:[%s510 + $0x70] sm:$0xff]
      %v519 = vld [vmem:[%s510 + $0x1] sm:$0xff]
      %v520 = vld [vmem:[%s510 + $0x11] sm:$0xff]
      %v521 = vld [vmem:[%s510 + $0x21] sm:$0xff]
      %v522 = vld [vmem:[%s510 + $0x31] sm:$0xff]
      %v523 = vld [vmem:[%s510 + $0x41] sm:$0xff]
      %v524 = vld [vmem:[%s510 + $0x51] sm:$0xff]
      %v525 = vld [vmem:[%s510 + $0x61] sm:$0xff]
      %v526 = vld [vmem:[%s510 + $0x71] sm:$0xff]
      %v527 = vld [vmem:[%s510 + $0x2] sm:$0xff]
      %v528 = vld [vmem:[%s510 + $0x12] sm:$0xff]
      %v529 = vld [vmem:[%s510 + $0x22] sm:$0xff]
      %v530 = vld [vmem:[%s510 + $0x32] sm:$0xff]
      %v531 = vld [vmem:[%s510 + $0x42] sm:$0xff]
      %v532 = vld [vmem:[%s510 + $0x52] sm:$0xff]
      %v533 = vld [vmem:[%s510 + $0x62] sm:$0xff]
      %v534 = vld [vmem:[%s510 + $0x72] sm:$0xff]
      %543 = vrot.lane.b32.xlu0 %v470, 6
      %v544 = vpop.permute.xlu0 %543
      %545 = vrot.lane.b32.xlu0 %v471, 6
      %v546 = vpop.permute.xlu0 %545
      %547 = vrot.lane.b32.xlu0 %v472, 6
      %v548 = vpop.permute.xlu0 %547
      %549 = vrot.lane.b32.xlu0 %v473, 6
      %v550 = vpop.permute.xlu0 %549
      %551 = vrot.lane.b32.xlu0 %v474, 6
      %v552 = vpop.permute.xlu0 %551
      %553 = vrot.lane.b32.xlu0 %v475, 6
      %v554 = vpop.permute.xlu0 %553
      %555 = vrot.lane.b32.xlu0 %v476, 6
      %v556 = vpop.permute.xlu0 %555
      %557 = vrot.lane.b32.xlu0 %v477, 6
      %v558 = vpop.permute.xlu0 %557
      %575 = vrot.lane.b32.xlu0 %v478, 12
      %v576 = vpop.permute.xlu0 %575
      %577 = vrot.lane.b32.xlu0 %v479, 12
      %v578 = vpop.permute.xlu0 %577
      %579 = vrot.lane.b32.xlu0 %v480, 12
      %v580 = vpop.permute.xlu0 %579
      %581 = vrot.lane.b32.xlu0 %v481, 12
      %v582 = vpop.permute.xlu0 %581
      %583 = vrot.lane.b32.xlu0 %v482, 12
      %v584 = vpop.permute.xlu0 %583
      %585 = vrot.lane.b32.xlu0 %v483, 12
      %v586 = vpop.permute.xlu0 %585
      %587 = vrot.lane.b32.xlu0 %v484, 12
      %v588 = vpop.permute.xlu0 %587
      %589 = vrot.lane.b32.xlu0 %v485, 12
      %v590 = vpop.permute.xlu0 %589
      %607 = vrot.lane.b32.xlu0 %v486, 18
      %v608 = vpop.permute.xlu0 %607
      %609 = vrot.lane.b32.xlu0 %v487, 18
      %v610 = vpop.permute.xlu0 %609
      %611 = vrot.lane.b32.xlu0 %v488, 18
      %v612 = vpop.permute.xlu0 %611
      %613 = vrot.lane.b32.xlu0 %v489, 18
      %v614 = vpop.permute.xlu0 %613
      %615 = vrot.lane.b32.xlu0 %v490, 18
      %v616 = vpop.permute.xlu0 %615
      %617 = vrot.lane.b32.xlu0 %v491, 18
      %v618 = vpop.permute.xlu0 %617
      %619 = vrot.lane.b32.xlu0 %v492, 18
      %v620 = vpop.permute.xlu0 %619
      %621 = vrot.lane.b32.xlu0 %v493, 18
      %v622 = vpop.permute.xlu0 %621
      %639 = vrot.lane.b32.xlu0 %v494, 24
      %v640 = vpop.permute.xlu0 %639
      %641 = vrot.lane.b32.xlu0 %v495, 24
      %v642 = vpop.permute.xlu0 %641
      %643 = vrot.lane.b32.xlu0 %v496, 24
      %v644 = vpop.permute.xlu0 %643
      %645 = vrot.lane.b32.xlu0 %v497, 24
      %v646 = vpop.permute.xlu0 %645
      %647 = vrot.lane.b32.xlu0 %v498, 24
      %v648 = vpop.permute.xlu0 %647
      %649 = vrot.lane.b32.xlu0 %v499, 24
      %v650 = vpop.permute.xlu0 %649
      %651 = vrot.lane.b32.xlu0 %v500, 24
      %v652 = vpop.permute.xlu0 %651
      %653 = vrot.lane.b32.xlu0 %v501, 24
      %v654 = vpop.permute.xlu0 %653
      %671 = vrot.lane.b32.xlu0 %v502, 30
      %v672 = vpop.permute.xlu0 %671
      %673 = vrot.lane.b32.xlu0 %v503, 30
      %v674 = vpop.permute.xlu0 %673
      %675 = vrot.lane.b32.xlu0 %v504, 30
      %v676 = vpop.permute.xlu0 %675
      %677 = vrot.lane.b32.xlu0 %v505, 30
      %v678 = vpop.permute.xlu0 %677
      %679 = vrot.lane.b32.xlu0 %v506, 30
      %v680 = vpop.permute.xlu0 %679
      %681 = vrot.lane.b32.xlu0 %v507, 30
      %v682 = vpop.permute.xlu0 %681
      %683 = vrot.lane.b32.xlu0 %v508, 30
      %v684 = vpop.permute.xlu0 %683
      %685 = vrot.lane.b32.xlu0 %v509, 30
      %v686 = vpop.permute.xlu0 %685
      %703 = vrot.lane.b32.xlu0 %v511, 36
      %v704 = vpop.permute.xlu0 %703
      %705 = vrot.lane.b32.xlu0 %v512, 36
      %v706 = vpop.permute.xlu0 %705
      %707 = vrot.lane.b32.xlu0 %v513, 36
      %v708 = vpop.permute.xlu0 %707
      %709 = vrot.lane.b32.xlu0 %v514, 36
      %v710 = vpop.permute.xlu0 %709
      %711 = vrot.lane.b32.xlu0 %v515, 36
      %v712 = vpop.permute.xlu0 %711
      %713 = vrot.lane.b32.xlu0 %v516, 36
      %v714 = vpop.permute.xlu0 %713
      %715 = vrot.lane.b32.xlu0 %v517, 36
      %v716 = vpop.permute.xlu0 %715
      %717 = vrot.lane.b32.xlu0 %v518, 36
      %v718 = vpop.permute.xlu0 %717
      %735 = vrot.lane.b32.xlu0 %v519, 42
      %v736 = vpop.permute.xlu0 %735
      %737 = vrot.lane.b32.xlu0 %v520, 42
      %v738 = vpop.permute.xlu0 %737
      %739 = vrot.lane.b32.xlu0 %v521, 42
      %v740 = vpop.permute.xlu0 %739
      %741 = vrot.lane.b32.xlu0 %v522, 42
      %v742 = vpop.permute.xlu0 %741
      %743 = vrot.lane.b32.xlu0 %v523, 42
      %v744 = vpop.permute.xlu0 %743
      %745 = vrot.lane.b32.xlu0 %v524, 42
      %v746 = vpop.permute.xlu0 %745
      %747 = vrot.lane.b32.xlu0 %v525, 42
      %v748 = vpop.permute.xlu0 %747
      %749 = vrot.lane.b32.xlu0 %v526, 42
      %v750 = vpop.permute.xlu0 %749
      %767 = vrot.lane.b32.xlu0 %v527, 48
      %v768 = vpop.permute.xlu0 %767
      %769 = vrot.lane.b32.xlu0 %v528, 48
      %v770 = vpop.permute.xlu0 %769
      %771 = vrot.lane.b32.xlu0 %v529, 48
      %v772 = vpop.permute.xlu0 %771
      %773 = vrot.lane.b32.xlu0 %v530, 48
      %v774 = vpop.permute.xlu0 %773
      %775 = vrot.lane.b32.xlu0 %v531, 48
      %v776 = vpop.permute.xlu0 %775
      %777 = vrot.lane.b32.xlu0 %v532, 48
      %v778 = vpop.permute.xlu0 %777
      %779 = vrot.lane.b32.xlu0 %v533, 48
      %v780 = vpop.permute.xlu0 %779
      %781 = vrot.lane.b32.xlu0 %v534, 48
      %v782 = vpop.permute.xlu0 %781
      %v791 = vsel %vm429, %v462, %v544
      %v792 = vsel %vm429, %v463, %v546
      %v793 = vsel %vm429, %v464, %v548
      %v794 = vsel %vm429, %v465, %v550
      %v795 = vsel %vm429, %v466, %v552
      %v796 = vsel %vm429, %v467, %v554
      %v797 = vsel %vm429, %v468, %v556
      %v798 = vsel %vm429, %v469, %v558
      %vm799 = vcmask 97280
      %v800 = vsel %vm799, %v791, %v576
      %v801 = vsel %vm799, %v792, %v578
      %v802 = vsel %vm799, %v793, %v580
      %v803 = vsel %vm799, %v794, %v582
      %v804 = vsel %vm799, %v795, %v584
      %v805 = vsel %vm799, %v796, %v586
      %v806 = vsel %vm799, %v797, %v588
      %v807 = vsel %vm799, %v798, %v590
      %vm808 = vcmask 146432
      %v809 = vsel %vm808, %v800, %v608
      %v810 = vsel %vm808, %v801, %v610
      %v811 = vsel %vm808, %v802, %v612
      %v812 = vsel %vm808, %v803, %v614
      %v813 = vsel %vm808, %v804, %v616
      %v814 = vsel %vm808, %v805, %v618
      %v815 = vsel %vm808, %v806, %v620
      %v816 = vsel %vm808, %v807, %v622
      %vm817 = vcmask 195584
      %v818 = vsel %vm817, %v809, %v640
      %v819 = vsel %vm817, %v810, %v642
      %v820 = vsel %vm817, %v811, %v644
      %v821 = vsel %vm817, %v812, %v646
      %v822 = vsel %vm817, %v813, %v648
      %v823 = vsel %vm817, %v814, %v650
      %v824 = vsel %vm817, %v815, %v652
      %v825 = vsel %vm817, %v816, %v654
      %vm826 = vcmask 244736
      %v827 = vsel %vm826, %v818, %v672
      %v828 = vsel %vm826, %v819, %v674
      %v829 = vsel %vm826, %v820, %v676
      %v830 = vsel %vm826, %v821, %v678
      %v831 = vsel %vm826, %v822, %v680
      %v832 = vsel %vm826, %v823, %v682
      %v833 = vsel %vm826, %v824, %v684
      %v834 = vsel %vm826, %v825, %v686
      %vm835 = vcmask 293888
      %v836 = vsel %vm835, %v827, %v704
      %v837 = vsel %vm835, %v828, %v706
      %v838 = vsel %vm835, %v829, %v708
      %v839 = vsel %vm835, %v830, %v710
      %v840 = vsel %vm835, %v831, %v712
      %v841 = vsel %vm835, %v832, %v714
      %v842 = vsel %vm835, %v833, %v716
      %v843 = vsel %vm835, %v834, %v718
      %vm844 = vcmask 343040
      %v845 = vsel %vm844, %v836, %v736
      %v846 = vsel %vm844, %v837, %v738
      %v847 = vsel %vm844, %v838, %v740
      %v848 = vsel %vm844, %v839, %v742
      %v849 = vsel %vm844, %v840, %v744
      %v850 = vsel %vm844, %v841, %v746
      %v851 = vsel %vm844, %v842, %v748
      %v852 = vsel %vm844, %v843, %v750
      %vm853 = vcmask 392192
      %v854 = vsel %vm853, %v845, %v768
      %v855 = vsel %vm853, %v846, %v770
      %v856 = vsel %vm853, %v847, %v772
      %v857 = vsel %vm853, %v848, %v774
      %v858 = vsel %vm853, %v849, %v776
      %v859 = vsel %vm853, %v850, %v778
      %v860 = vsel %vm853, %v851, %v780
      %v861 = vsel %vm853, %v852, %v782
      %v862 = vpack.c.bf16 %v855, %v854
      %v863 = vpack.c.bf16 %v857, %v856
      %v864 = vpack.c.bf16 %v859, %v858
      %v865 = vpack.c.bf16 %v861, %v860
      %v866 = vld [vmem:[%s6] sm:$0xf]
      %v867 = vld [vmem:[%s6 + $0x4] sm:$0xf]
      %v868 = vld [vmem:[%s6 + $0x8] sm:$0xf]
      %v869 = vld [vmem:[%s6 + $0xc] sm:$0xf]
      %v870 = vld [vmem:[%s6 + $0x10] sm:$0xf]
      %v871 = vld [vmem:[%s6 + $0x14] sm:$0xf]
      %v872 = vld [vmem:[%s6 + $0x18] sm:$0x7]
      %v880 = vunpack.c.l.b16 %v866
      %v881 = vunpack.c.l.b16 %v867
      %v882 = vunpack.c.l.b16 %v868
      %v883 = vunpack.c.l.b16 %v869
      %v884 = vunpack.c.l.b16 %v870
      %v885 = vunpack.c.l.b16 %v871
      %v886 = vunpack.c.l.b16 %v872
      %v887 = vpack.c.b16 %v881, %v880
      %v888 = vpack.c.b16 %v883, %v882
      %v889 = vpack.c.b16 %v885, %v884
      %v890 = vpack.c.b16 %v886, %v886
      %vm894 = vcmask 441344
      %v896 = vsel %vm894, %v862, 0
      %v899 = vsel %vm894, %v863, 0
      %v902 = vsel %vm894, %v864, 0
      %v905 = vsel %vm894, %v865, 0
      %vm907 = vcmask 1042432
      %v909 = vsel %vm907, %v890, 0
      %911 = vmatpush.bf16.msra.mxu0 0
      %912 = vmatpush.bf16.msra.mxu0 0
      %913 = vmatpush.bf16.msra.mxu0 0
      %914 = vmatpush.bf16.msra.mxu0 0
      %915 = vmatpush.bf16.msra.mxu0 %v909
      %916 = vmatpush.bf16.msra.mxu0 %v889
      %917 = vmatpush.bf16.msra.mxu0 %v888
      %918 = vmatpush.bf16.msra.mxu0 %v887
      %919 = vmatmul.bf16.gmra.mxu0 %v896
      %v920 = vpop.f32.mrf.mxu0
      %v921 = vadd.f32 0.0, %v920
      %v922 = vpop.f32.mrf.mxu0
      %v923 = vadd.f32 0.0, %v922
      %924 = vmatmul.bf16.gmra.mxu0 %v899
      %v925 = vpop.f32.mrf.mxu0
      %v926 = vadd.f32 0.0, %v925
      %v927 = vpop.f32.mrf.mxu0
      %v928 = vadd.f32 0.0, %v927
      %929 = vmatmul.bf16.gmra.mxu0 %v902
      %v930 = vpop.f32.mrf.mxu0
      %v931 = vadd.f32 0.0, %v930
      %v932 = vpop.f32.mrf.mxu0
      %v933 = vadd.f32 0.0, %v932
      %934 = vmatmul.bf16.gmra.mxu0 %v905
      %v935 = vpop.f32.mrf.mxu0
      %v936 = vadd.f32 0.0, %v935
      %v937 = vpop.f32.mrf.mxu0
      %v938 = vadd.f32 0.0, %v937
      %939 = vdwg.mxu0
      %940 = vst.msk [vmem:[%s335] sm:$0xff] %vm429, %v921
      %941 = vst.msk [vmem:[%s335 + $0x8] sm:$0xff] %vm429, %v923
      %942 = vst.msk [vmem:[%s335 + $0x10] sm:$0xff] %vm429, %v926
      %943 = vst.msk [vmem:[%s335 + $0x18] sm:$0xff] %vm429, %v928
      %944 = vst.msk [vmem:[%s335 + $0x20] sm:$0xff] %vm429, %v931
      %945 = vst.msk [vmem:[%s335 + $0x28] sm:$0xff] %vm429, %v933
      %946 = vst.msk [vmem:[%s335 + $0x30] sm:$0xff] %vm429, %v936
      %947 = vst.msk [vmem:[%s335 + $0x38] sm:$0xff] %vm429, %v938
      %v948 = vsel %vm429, %v921, 0.0
      %v949 = vsel %vm429, %v923, 0.0
      %v950 = vadd.f32 %v948, %v949
      %v951 = vsel %vm429, %v926, 0.0
      %v952 = vadd.f32 %v950, %v951
      %v953 = vsel %vm429, %v928, 0.0
      %v954 = vadd.f32 %v952, %v953
      %v955 = vsel %vm429, %v931, 0.0
      %v956 = vadd.f32 %v954, %v955
      %v957 = vsel %vm429, %v933, 0.0
      %v958 = vadd.f32 %v956, %v957
      %v959 = vsel %vm429, %v936, 0.0
      %v960 = vadd.f32 %v958, %v959
      %v961 = vsel %vm429, %v938, 0.0
      %v962 = vadd.f32 %v960, %v961
      %v963 = vrot.slane %v962, 4
      %v964 = vadd.f32 %v962, %v963
      %v965 = vrot.slane %v964, 2
      %v966 = vadd.f32 %v964, %v965
      %v967 = vrot.slane %v966, 1
      %v968 = vadd.f32 %v966, %v967
      %969 = vst.msk [vmem:[%s339] sm:$0x1] %vm437, %v968
      %v970 = vmul.f32 %v921, %v921
      %v971 = vmul.f32 %v923, %v923
      %v972 = vmul.f32 %v926, %v926
      %v973 = vmul.f32 %v928, %v928
      %v974 = vmul.f32 %v931, %v931
      %v975 = vmul.f32 %v933, %v933
      %v976 = vmul.f32 %v936, %v936
      %v977 = vmul.f32 %v938, %v938
      %v978 = vsel %vm429, %v970, 0.0
      %v979 = vsel %vm429, %v971, 0.0
      %v980 = vadd.f32 %v978, %v979
      %v981 = vsel %vm429, %v972, 0.0
      %v982 = vadd.f32 %v980, %v981
      %v983 = vsel %vm429, %v973, 0.0
      %v984 = vadd.f32 %v982, %v983
      %v985 = vsel %vm429, %v974, 0.0
      %v986 = vadd.f32 %v984, %v985
      %v987 = vsel %vm429, %v975, 0.0
      %v988 = vadd.f32 %v986, %v987
      %v989 = vsel %vm429, %v976, 0.0
      %v990 = vadd.f32 %v988, %v989
      %v991 = vsel %vm429, %v977, 0.0
      %v992 = vadd.f32 %v990, %v991
      %v993 = vrot.slane %v992, 4
      %v994 = vadd.f32 %v992, %v993
      %v995 = vrot.slane %v994, 2
      %v996 = vadd.f32 %v994, %v995
      %v997 = vrot.slane %v996, 1
      %v998 = vadd.f32 %v996, %v997
      %999 = vst.msk [vmem:[%s339 + $0x1] sm:$0x1] %vm437, %v998
      %p1000 = scmp.lt.s32.totalorder %s20, 1
      %s1001 = scalar_select %p1000, %s20, 1
      %s1002 = smul.addr %s1001, 8
      %s1003 = smul.addr %s1002, 8
      %s1004 = scalar_lea.vmem %s7, %s1003
      %p1005 = scmp.lt.s32.totalorder %s20, 1
      %s1006 = scalar_select %p1005, %s20, 1
      %s1007 = smul.addr %s1006, 2
      %s1008 = scalar_lea.vmem %s8, %s1007
      // Predicated region
      $region49: #{bottle2neck_forward.8} parent=47 // pred_check
        %p1009 = pneg %p195
      $region50: #{bottle2neck_forward.8} parent=47 // pred_check_branch
        %1011 = sbr.rel (%p1009) target = $region52
      $region51: #{bottle2neck_forward.8} parent=47 // pred_region
        _
      $region52: #{bottle2neck_forward.8} parent=47 // pred_fallthru
        _
      // Predicated region
      $region53: #{bottle2neck_forward.8} parent=47 // pred_check
        %p1012 = pneg %p221
      $region54: #{bottle2neck_forward.8} parent=47 // pred_check_branch
        %1014 = sbr.rel (%p1012) target = $region56
      $region55: #{bottle2neck_forward.8} parent=47 // pred_region
        _
      $region56: #{bottle2neck_forward.8} parent=47 // pred_fallthru
        _
    $region48: #{bottle2neck_forward.8} parent=5 // pred_fallthru
      _
    %p1015 = scmp.le.s32.totalorder 2, %s15
    // Predicated region
    $region57: #{bottle2neck_forward.8} parent=5 // pred_check
      %p1016 = pneg %p1015
    $region58: #{bottle2neck_forward.8} parent=5 // pred_check_branch
      %1018 = sbr.rel (%p1016) target = $region60
    $region59: #{bottle2neck_forward.8} parent=5 // pred_region
      %s1019 = ssub.s32 %s15, 2
      // Predicated region
      $region61: #{bottle2neck_forward.8} parent=59 // pred_check
        %p1020 = pneg %p201
      $region62: #{bottle2neck_forward.8} parent=59 // pred_check_branch
        %1022 = sbr.rel (%p1020) target = $region64
      $region63: #{bottle2neck_forward.8} parent=59 // pred_region
        %p1023 = scmp.lt.s32.totalorder %s21, 1
        %s1024 = scalar_select %p1023, %s21, 1
        %s1025 = smul.addr %s1024, 8
        %s1026 = smul.addr %s1025, 8
        %s1027 = scalar_lea.vmem %s7, %s1026
      $region64: #{bottle2neck_forward.8} parent=59 // pred_fallthru
        _
      // Predicated region
      $region65: #{bottle2neck_forward.8} parent=59 // pred_check
        %p1028 = pneg %p227
      $region66: #{bottle2neck_forward.8} parent=59 // pred_check_branch
        %1030 = sbr.rel (%p1028) target = $region68
      $region67: #{bottle2neck_forward.8} parent=59 // pred_region
        %p1031 = scmp.lt.s32.totalorder %s21, 1
        %s1032 = scalar_select %p1031, %s21, 1
        %s1033 = smul.addr %s1032, 2
        %s1034 = scalar_lea.vmem %s8, %s1033
      $region68: #{bottle2neck_forward.8} parent=59 // pred_fallthru
        _
    $region60: #{bottle2neck_forward.8} parent=5 // pred_fallthru
      _
  $region6: #{bottle2neck_forward.8} parent=0 // loop_footer
    %s19 = sadd.s32 1, %s15
  $region7: #{bottle2neck_forward.8} parent=0 // loop_footer_branch
    %14 = sbr.rel target = $region3
  $region8: #{bottle2neck_forward.8} parent=0 // loop_exit
    _

// kernel: bottle2neck_forward.9
$region0: #{bottle2neck_forward.9}
  #allocation0 [shape = 'u32[]', space=smem, size = 0x4, offset = 0x4, fixed_abs, tag = 'smem constant byte address 0x4 - core index']
  #allocation1 [shape = 'u32[72,128]{1,0:T(1,128)}', space=vmem, size = 0x9000, scoped, tag = 'internal scratch']
  #allocation2 [shape = 'f32[10,10,6]{2,1,0:T(8,128)}', space=vmem, size = 0x14000, scoped, tag = 'scratch operand']
  %s0 = inlined_call_operand.vmem [shape: f32[4,2,8,8,6], index: 0, kind: input, shape index: {}]
  %s1 = inlined_call_operand.vmem [shape: f32[1,6], index: 1, kind: input, shape index: {}]
  %s2 = inlined_call_operand.vmem [shape: f32[1,6], index: 2, kind: input, shape index: {}]
  %s3 = inlined_call_operand.vmem [shape: f32[2,8,8,6], index: 3, kind: input, shape index: {}]
  %s4 = inlined_call_operand.vmem [shape: f32[1,6], index: 4, kind: input, shape index: {}]
  %s5 = inlined_call_operand.vmem [shape: f32[1,6], index: 5, kind: input, shape index: {}]
  %s6 = inlined_call_operand.vmem [shape: bf16[54,6], index: 6, kind: input, shape index: {}]
  %s7 = inlined_call_operand.vmem [shape: f32[2,8,8,6], index: 7, kind: output, shape index: {0}]
  %s8 = inlined_call_operand.vmem [shape: f32[2,2,6], index: 8, kind: output, shape index: {1}]
  %9 = xla_tuple %s7, %s8
  %s10 = sld [smem:[#allocation0]]
  $region69: #{bottle2neck_forward.9} parent=0
    _
  %s12 = ssub.s32 1, %s10
  %s13 = scalar_select 0, %s12, %s10
  loop: start=0, step=1, limit=4
  $region2: #{bottle2neck_forward.9} parent=0 // loop_pre_header
    _
  $region3: #{bottle2neck_forward.9} parent=0 // loop_header
    %s15 = sphi 0, %s19
    %p16 = scmp.ge.s32.totalorder %s15, 4
    %s25 = sphi 0, %s27
    %s28 = sphi 0, %s25
    %s29 = sphi 0, %s28
    %s45 = sphi 0, %s29
    %s49 = sphi 0, %s49
    %s51 = sphi 0, %s49
    %s52 = sphi 0, %s51
    %s66 = sphi 0, %s52
    %s70 = sphi 0, %s70
    %s72 = sphi 0, %s70
    %s73 = sphi 0, %s72
    %s87 = sphi 0, %s73
    %s93 = sphi 0, %s95
    %s96 = sphi 0, %s93
    %s97 = sphi 0, %s96
    %s113 = sphi 0, %s97
    %s117 = sphi 0, %s117
    %s119 = sphi 0, %s117
    %s120 = sphi 0, %s119
    %s134 = sphi 0, %s120
    %s138 = sphi 0, %s138
    %s140 = sphi 0, %s138
    %s141 = sphi 0, %s140
    %s155 = sphi 0, %s141
    %s159 = sphi 0, %s159
    %s161 = sphi 0, %s159
    %s162 = sphi 0, %s161
    %s176 = sphi 0, %s162
    %s182 = sphi 0, %s184
    %s185 = sphi 0, %s182
    %s186 = sphi 0, %s185
    %s202 = sphi 0, %s186
    %s208 = sphi 0, %s210
    %s211 = sphi 0, %s208
    %s212 = sphi 0, %s211
    %s228 = sphi 0, %s212
  $region4: #{bottle2neck_forward.9} parent=0 // loop_header_branch
    %18 = sbr.rel (%p16) target = $region8
  $region5: #{bottle2neck_forward.9} parent=0 // loop_body
    %s20 = ssub.s32 %s15, 1
    %s21 = ssub.s32 %s15, 2
    %s22 = sadd.s32 %s15, 1
    %s23 = ssub.s32 %s15, %s22
    %p24 = scmp.eq.s32.totalorder %s23, 0
    %s26 = sadd.s32 %s25, 1
    %s27 = scalar_select %p24, %s25, %s26
    %p30 = pneg %p24
    %p31 = scmp.eq.s32.totalorder %s15, 1
    %p32 = por %p30, %p31
    %p33 = scmp.ne.s32.totalorder %s25, %s28
    %p34 = scmp.eq.s32.totalorder %s15, 0
    %p35 = por %p33, %p34
    %p36 = scmp.ne.s32.totalorder %s25, %s28
    %p37 = scmp.eq.s32.totalorder %s20, 1
    %p38 = por %p36, %p37
    %p39 = scmp.ne.s32.totalorder %s28, %s29
    %p40 = scmp.eq.s32.totalorder %s20, 0
    %p41 = por %p39, %p40
    %p42 = scmp.ne.s32.totalorder %s28, %s29
    %p43 = scmp.eq.s32.totalorder %s21, 1
    %p44 = por %p42, %p43
    %p46 = scmp.ne.s32.totalorder %s29, %s45
    %p47 = scmp.eq.s32.totalorder %s21, 0
    %p48 = por %p46, %p47
    %s50 = sadd.s32 %s49, 1
    %p53 = scmp.eq.s32.totalorder %s15, 1
    %p54 = scmp.ne.s32.totalorder %s49, %s51
    %p55 = scmp.eq.s32.totalorder %s15, 0
    %p56 = por %p54, %p55
    %p57 = scmp.ne.s32.totalorder %s49, %s51
    %p58 = scmp.eq.s32.totalorder %s20, 1
    %p59 = por %p57, %p58
    %p60 = scmp.ne.s32.totalorder %s51, %s52
    %p61 = scmp.eq.s32.totalorder %s20, 0
    %p62 = por %p60, %p61
    %p63 = scmp.ne.s32.totalorder %s51, %s52
    %p64 = scmp.eq.s32.totalorder %s21, 1
    %p65 = por %p63, %p64
    %p67 = scmp.ne.s32.totalorder %s52, %s66
    %p68 = scmp.eq.s32.totalorder %s21, 0
    %p69 = por %p67, %p68
    %s71 = sadd.s32 %s70, 1
    %p74 = scmp.eq.s32.totalorder %s15, 1
    %p75 = scmp.ne.s32.totalorder %s70, %s72
    %p76 = scmp.eq.s32.totalorder %s15, 0
    %p77 = por %p75, %p76
    %p78 = scmp.ne.s32.totalorder %s70, %s72
    %p79 = scmp.eq.s32.totalorder %s20, 1
    %p80 = por %p78, %p79
    %p81 = scmp.ne.s32.totalorder %s72, %s73
    %p82 = scmp.eq.s32.totalorder %s20, 0
    %p83 = por %p81, %p82
    %p84 = scmp.ne.s32.totalorder %s72, %s73
    %p85 = scmp.eq.s32.totalorder %s21, 1
    %p86 = por %p84, %p85
    %p88 = scmp.ne.s32.totalorder %s73, %s87
    %p89 = scmp.eq.s32.totalorder %s21, 0
    %p90 = por %p88, %p89
    %s91 = ssub.s32 %s15, %s22
    %p92 = scmp.eq.s32.totalorder %s91, 0
    %s94 = sadd.s32 %s93, 1
    %s95 = scalar_select %p92, %s93, %s94
    %p98 = pneg %p92
    %p99 = scmp.eq.s32.totalorder %s15, 1
    %p100 = por %p98, %p99
    %p101 = scmp.ne.s32.totalorder %s93, %s96
    %p102 = scmp.eq.s32.totalorder %s15, 0
    %p103 = por %p101, %p102
    %p104 = scmp.ne.s32.totalorder %s93, %s96
    %p105 = scmp.eq.s32.totalorder %s20, 1
    %p106 = por %p104, %p105
    %p107 = scmp.ne.s32.totalorder %s96, %s97
    %p108 = scmp.eq.s32.totalorder %s20, 0
    %p109 = por %p107, %p108
    %p110 = scmp.ne.s32.totalorder %s96, %s97
    %p111 = scmp.eq.s32.totalorder %s21, 1
    %p112 = por %p110, %p111
    %p114 = scmp.ne.s32.totalorder %s97, %s113
    %p115 = scmp.eq.s32.totalorder %s21, 0
    %p116 = por %p114, %p115
    %s118 = sadd.s32 %s117, 1
    %p121 = scmp.eq.s32.totalorder %s15, 1
    %p122 = scmp.ne.s32.totalorder %s117, %s119
    %p123 = scmp.eq.s32.totalorder %s15, 0
    %p124 = por %p122, %p123
    %p125 = scmp.ne.s32.totalorder %s117, %s119
    %p126 = scmp.eq.s32.totalorder %s20, 1
    %p127 = por %p125, %p126
    %p128 = scmp.ne.s32.totalorder %s119, %s120
    %p129 = scmp.eq.s32.totalorder %s20, 0
    %p130 = por %p128, %p129
    %p131 = scmp.ne.s32.totalorder %s119, %s120
    %p132 = scmp.eq.s32.totalorder %s21, 1
    %p133 = por %p131, %p132
    %p135 = scmp.ne.s32.totalorder %s120, %s134
    %p136 = scmp.eq.s32.totalorder %s21, 0
    %p137 = por %p135, %p136
    %s139 = sadd.s32 %s138, 1
    %p142 = scmp.eq.s32.totalorder %s15, 1
    %p143 = scmp.ne.s32.totalorder %s138, %s140
    %p144 = scmp.eq.s32.totalorder %s15, 0
    %p145 = por %p143, %p144
    %p146 = scmp.ne.s32.totalorder %s138, %s140
    %p147 = scmp.eq.s32.totalorder %s20, 1
    %p148 = por %p146, %p147
    %p149 = scmp.ne.s32.totalorder %s140, %s141
    %p150 = scmp.eq.s32.totalorder %s20, 0
    %p151 = por %p149, %p150
    %p152 = scmp.ne.s32.totalorder %s140, %s141
    %p153 = scmp.eq.s32.totalorder %s21, 1
    %p154 = por %p152, %p153
    %p156 = scmp.ne.s32.totalorder %s141, %s155
    %p157 = scmp.eq.s32.totalorder %s21, 0
    %p158 = por %p156, %p157
    %s160 = sadd.s32 %s159, 1
    %p163 = scmp.eq.s32.totalorder %s15, 1
    %p164 = scmp.ne.s32.totalorder %s159, %s161
    %p165 = scmp.eq.s32.totalorder %s15, 0
    %p166 = por %p164, %p165
    %p167 = scmp.ne.s32.totalorder %s159, %s161
    %p168 = scmp.eq.s32.totalorder %s20, 1
    %p169 = por %p167, %p168
    %p170 = scmp.ne.s32.totalorder %s161, %s162
    %p171 = scmp.eq.s32.totalorder %s20, 0
    %p172 = por %p170, %p171
    %p173 = scmp.ne.s32.totalorder %s161, %s162
    %p174 = scmp.eq.s32.totalorder %s21, 1
    %p175 = por %p173, %p174
    %p177 = scmp.ne.s32.totalorder %s162, %s176
    %p178 = scmp.eq.s32.totalorder %s21, 0
    %p179 = por %p177, %p178
    %s180 = ssub.s32 %s15, %s22
    %p181 = scmp.eq.s32.totalorder %s180, 0
    %s183 = sadd.s32 %s182, 1
    %s184 = scalar_select %p181, %s182, %s183
    %p187 = pneg %p181
    %p188 = scmp.eq.s32.totalorder %s15, 1
    %p189 = por %p187, %p188
    %p190 = scmp.ne.s32.totalorder %s182, %s185
    %p191 = scmp.eq.s32.totalorder %s15, 0
    %p192 = por %p190, %p191
    %p193 = scmp.ne.s32.totalorder %s182, %s185
    %p194 = scmp.eq.s32.totalorder %s20, 1
    %p195 = por %p193, %p194
    %p196 = scmp.ne.s32.totalorder %s185, %s186
    %p197 = scmp.eq.s32.totalorder %s20, 0
    %p198 = por %p196, %p197
    %p199 = scmp.ne.s32.totalorder %s185, %s186
    %p200 = scmp.eq.s32.totalorder %s21, 1
    %p201 = por %p199, %p200
    %p203 = scmp.ne.s32.totalorder %s186, %s202
    %p204 = scmp.eq.s32.totalorder %s21, 0
    %p205 = por %p203, %p204
    %s206 = ssub.s32 %s15, %s22
    %p207 = scmp.eq.s32.totalorder %s206, 0
    %s209 = sadd.s32 %s208, 1
    %s210 = scalar_select %p207, %s208, %s209
    %p213 = pneg %p207
    %p214 = scmp.eq.s32.totalorder %s15, 1
    %p215 = por %p213, %p214
    %p216 = scmp.ne.s32.totalorder %s208, %s211
    %p217 = scmp.eq.s32.totalorder %s15, 0
    %p218 = por %p216, %p217
    %p219 = scmp.ne.s32.totalorder %s208, %s211
    %p220 = scmp.eq.s32.totalorder %s20, 1
    %p221 = por %p219, %p220
    %p222 = scmp.ne.s32.totalorder %s211, %s212
    %p223 = scmp.eq.s32.totalorder %s20, 0
    %p224 = por %p222, %p223
    %p225 = scmp.ne.s32.totalorder %s211, %s212
    %p226 = scmp.eq.s32.totalorder %s21, 1
    %p227 = por %p225, %p226
    %p229 = scmp.ne.s32.totalorder %s212, %s228
    %p230 = scmp.eq.s32.totalorder %s21, 0
    %p231 = por %p229, %p230
    %p232 = scmp.le.s32.totalorder 1, %s15
    %p233 = scmp.lt.s32.totalorder %s15, 3
    %p234 = pnand %p232, %p233
    %p235 = pneg %p234
    // Predicated region
    $region9: #{bottle2neck_forward.9} parent=5 // pred_check
      _
    $region10: #{bottle2neck_forward.9} parent=5 // pred_check_branch
      %237 = sbr.rel (%p234) target = $region12
    $region11: #{bottle2neck_forward.9} parent=5 // pred_region
      %s238 = ssub.s32 %s15, 1
      // Predicated region
      $region13: #{bottle2neck_forward.9} parent=11 // pred_check
        %p239 = pneg %p62
      $region14: #{bottle2neck_forward.9} parent=11 // pred_check_branch
        %241 = sbr.rel (%p239) target = $region16
      $region15: #{bottle2neck_forward.9} parent=11 // pred_region
        _
      $region16: #{bottle2neck_forward.9} parent=11 // pred_fallthru
        _
      // Predicated region
      $region17: #{bottle2neck_forward.9} parent=11 // pred_check
        %p242 = pneg %p83
      $region18: #{bottle2neck_forward.9} parent=11 // pred_check_branch
        %244 = sbr.rel (%p242) target = $region20
      $region19: #{bottle2neck_forward.9} parent=11 // pred_region
        _
      $region20: #{bottle2neck_forward.9} parent=11 // pred_fallthru
        _
      // Predicated region
      $region21: #{bottle2neck_forward.9} parent=11 // pred_check
        %p245 = pneg %p130
      $region22: #{bottle2neck_forward.9} parent=11 // pred_check_branch
        %247 = sbr.rel (%p245) target = $region24
      $region23: #{bottle2neck_forward.9} parent=11 // pred_region
        _
      $region24: #{bottle2neck_forward.9} parent=11 // pred_fallthru
        _
      // Predicated region
      $region25: #{bottle2neck_forward.9} parent=11 // pred_check
        %p248 = pneg %p151
      $region26: #{bottle2neck_forward.9} parent=11 // pred_check_branch
        %250 = sbr.rel (%p248) target = $region28
      $region27: #{bottle2neck_forward.9} parent=11 // pred_region
        _
      $region28: #{bottle2neck_forward.9} parent=11 // pred_fallthru
        _
      // Predicated region
      $region29: #{bottle2neck_forward.9} parent=11 // pred_check
        %p251 = pneg %p172
      $region30: #{bottle2neck_forward.9} parent=11 // pred_check_branch
        %253 = sbr.rel (%p251) target = $region32
      $region31: #{bottle2neck_forward.9} parent=11 // pred_region
        _
      $region32: #{bottle2neck_forward.9} parent=11 // pred_fallthru
        _
    $region12: #{bottle2neck_forward.9} parent=5 // pred_fallthru
      _
    %p254 = scmp.lt.s32.totalorder %s15, 2
    // Predicated region
    $region33: #{bottle2neck_forward.9} parent=5 // pred_check
      %p255 = pneg %p254
    $region34: #{bottle2neck_forward.9} parent=5 // pred_check_branch
      %257 = sbr.rel (%p255) target = $region36
    $region35: #{bottle2neck_forward.9} parent=5 // pred_region
      // Predicated region
      $region37: #{bottle2neck_forward.9} parent=35 // pred_check
        %p258 = pneg %p35
      $region38: #{bottle2neck_forward.9} parent=35 // pred_check_branch
        %260 = sbr.rel (%p258) target = $region40
      $region39: #{bottle2neck_forward.9} parent=35 // pred_region
        %p261 = scmp.lt.s32.totalorder %s15, 1
        %s262 = scalar_select %p261, %s15, 1
        %s263 = smul.addr %s262, 8
        %s264 = sadd.s32 %s263, 32
        %s265 = smul.addr %s264, 8
        %s266 = scalar_lea.vmem %s0, %s265
      $region40: #{bottle2neck_forward.9} parent=35 // pred_fallthru
        _
      // Predicated region
      $region41: #{bottle2neck_forward.9} parent=35 // pred_check
        %p267 = pneg %p103
      $region42: #{bottle2neck_forward.9} parent=35 // pred_check_branch
        %269 = sbr.rel (%p267) target = $region44
      $region43: #{bottle2neck_forward.9} parent=35 // pred_region
        %p270 = scmp.lt.s32.totalorder %s15, 1
        %s271 = scalar_select %p270, %s15, 1
        %s272 = smul.addr %s271, 8
        %s273 = smul.addr %s272, 8
        %s274 = scalar_lea.vmem %s3, %s273
      $region44: #{bottle2neck_forward.9} parent=35 // pred_fallthru
        _
    $region36: #{bottle2neck_forward.9} parent=5 // pred_fallthru
      _
    %p275 = scmp.le.s32.totalorder 1, %s15
    %p276 = scmp.lt.s32.totalorder %s15, 3
    %p277 = pnand %p275, %p276
    %p278 = pneg %p277
    // Predicated region
    $region45: #{bottle2neck_forward.9} parent=5 // pred_check
      _
    $region46: #{bottle2neck_forward.9} parent=5 // pred_check_branch
      %280 = sbr.rel (%p277) target = $region48
    $region47: #{bottle2neck_forward.9} parent=5 // pred_region
      %s281 = ssub.s32 %s15, 1
      %p282 = scmp.lt.s32.totalorder %s20, 1
      %s283 = scalar_select %p282, %s20, 1
      %s284 = smul.addr %s283, 8
      %s285 = sadd.s32 %s284, 32
      %s286 = smul.addr %s285, 8
      %s287 = scalar_lea.vmem %s0, %s286
      %p288 = pneg %p41
      %p289 = pneg %p38
      %p290 = pneg %p62
      %p291 = pneg %p59
      %p292 = pneg %p83
      %p293 = pneg %p80
      %p294 = scmp.lt.s32.totalorder %s20, 1
      %s295 = scalar_select %p294, %s20, 1
      %s296 = smul.addr %s295, 8
      %s297 = smul.addr %s296, 8
      %s298 = scalar_lea.vmem %s3, %s297
      %p299 = pneg %p109
      %p300 = pneg %p106
      %p301 = pneg %p130
      %p302 = pneg %p127
      %p303 = pneg %p151
      %p304 = pneg %p148
      %p305 = pneg %p172
      %p306 = pneg %p169
      %p307 = pneg %p198
      %p308 = pneg %p195
      %p309 = scmp.lt.s32.totalorder %s20, 1
      %s310 = scalar_select %p309, %s20, 1
      %s311 = smul.addr %s310, 8
      %s312 = smul.addr %s311, 8
      %s313 = scalar_lea.vmem %s7, %s312
      %p314 = pneg %p224
      %p315 = pneg %p221
      %p316 = scmp.lt.s32.totalorder %s20, 1
      %s317 = scalar_select %p316, %s20, 1
      %s318 = smul.addr %s317, 2
      %s319 = scalar_lea.vmem %s8, %s318
      %p320 = scmp.lt.s32.totalorder %s20, 1
      %s321 = scalar_select %p320, %s20, 1
      %s322 = smul.addr %s321, 8
      %s323 = sadd.s32 %s322, 32
      %s324 = smul.addr %s323, 8
      %s325 = scalar_lea.vmem %s0, %s324
      %p326 = scmp.lt.s32.totalorder %s20, 1
      %s327 = scalar_select %p326, %s20, 1
      %s328 = smul.addr %s327, 8
      %s329 = smul.addr %s328, 8
      %s330 = scalar_lea.vmem %s3, %s329
      %p331 = scmp.lt.s32.totalorder %s20, 1
      %s332 = scalar_select %p331, %s20, 1
      %s333 = smul.addr %s332, 8
      %s334 = smul.addr %s333, 8
      %s335 = scalar_lea.vmem %s7, %s334
      %p336 = scmp.lt.s32.totalorder %s20, 1
      %s337 = scalar_select %p336, %s20, 1
      %s338 = smul.addr %s337, 2
      %s339 = scalar_lea.vmem %s8, %s338
      %v341 = vld [vmem:[%s1] sm:$0x1]
      %v342 = vld [vmem:[%s2] sm:$0x1]
      %v343 = vld [vmem:[%s325] sm:$0xff]
      %v344 = vld [vmem:[%s325 + $0x8] sm:$0xff]
      %v345 = vld [vmem:[%s325 + $0x10] sm:$0xff]
      %v346 = vld [vmem:[%s325 + $0x18] sm:$0xff]
      %v347 = vld [vmem:[%s325 + $0x20] sm:$0xff]
      %v348 = vld [vmem:[%s325 + $0x28] sm:$0xff]
      %v349 = vld [vmem:[%s325 + $0x30] sm:$0xff]
      %v350 = vld [vmem:[%s325 + $0x38] sm:$0xff]
      %v352 = vperm.slane %v341, 0
      %v354 = vmul.f32 %v343, %v352
      %v355 = vmul.f32 %v344, %v352
      %v356 = vmul.f32 %v345, %v352
      %v357 = vmul.f32 %v346, %v352
      %v358 = vmul.f32 %v347, %v352
      %v359 = vmul.f32 %v348, %v352
      %v360 = vmul.f32 %v349, %v352
      %v361 = vmul.f32 %v350, %v352
      %v363 = vperm.slane %v342, 0
      %v365 = vadd.f32 %v354, %v363
      %v366 = vadd.f32 %v355, %v363
      %v367 = vadd.f32 %v356, %v363
      %v368 = vadd.f32 %v357, %v363
      %v369 = vadd.f32 %v358, %v363
      %v370 = vadd.f32 %v359, %v363
      %v371 = vadd.f32 %v360, %v363
      %v372 = vadd.f32 %v361, %v363
      %v373 = vmax.f32 %v365, 0.0
      %v374 = vmax.f32 %v366, 0.0
      %v375 = vmax.f32 %v367, 0.0
      %v376 = vmax.f32 %v368, 0.0
      %v377 = vmax.f32 %v369, 0.0
      %v378 = vmax.f32 %v370, 0.0
      %v379 = vmax.f32 %v371, 0.0
      %v380 = vmax.f32 %v372, 0.0
      %v381 = vld [vmem:[%s4] sm:$0x1]
      %v382 = vld [vmem:[%s5] sm:$0x1]
      %v383 = vld [vmem:[%s330] sm:$0xff]
      %v384 = vld [vmem:[%s330 + $0x8] sm:$0xff]
      %v385 = vld [vmem:[%s330 + $0x10] sm:$0xff]
      %v386 = vld [vmem:[%s330 + $0x18] sm:$0xff]
      %v387 = vld [vmem:[%s330 + $0x20] sm:$0xff]
      %v388 = vld [vmem:[%s330 + $0x28] sm:$0xff]
      %v389 = vld [vmem:[%s330 + $0x30] sm:$0xff]
      %v390 = vld [vmem:[%s330 + $0x38] sm:$0xff]
      %v392 = vperm.slane %v381, 0
      %v394 = vmul.f32 %v383, %v392
      %v395 = vmul.f32 %v384, %v392
      %v396 = vmul.f32 %v385, %v392
      %v397 = vmul.f32 %v386, %v392
      %v398 = vmul.f32 %v387, %v392
      %v399 = vmul.f32 %v388, %v392
      %v400 = vmul.f32 %v389, %v392
      %v401 = vmul.f32 %v390, %v392
      %v403 = vperm.slane %v382, 0
      %v405 = vadd.f32 %v394, %v403
      %v406 = vadd.f32 %v395, %v403
      %v407 = vadd.f32 %v396, %v403
      %v408 = vadd.f32 %v397, %v403
      %v409 = vadd.f32 %v398, %v403
      %v410 = vadd.f32 %v399, %v403
      %v411 = vadd.f32 %v400, %v403
      %v412 = vadd.f32 %v401, %v403
      %v413 = vmax.f32 %v405, 0.0
      %v414 = vmax.f32 %v406, 0.0
      %v415 = vmax.f32 %v407, 0.0
      %v416 = vmax.f32 %v408, 0.0
      %v417 = vmax.f32 %v409, 0.0
      %v418 = vmax.f32 %v410, 0.0
      %v419 = vmax.f32 %v411, 0.0
      %v420 = vmax.f32 %v412, 0.0
      %v421 = vadd.f32 %v373, %v413
      %v422 = vadd.f32 %v374, %v414
      %v423 = vadd.f32 %v375, %v415
      %v424 = vadd.f32 %v376, %v416
      %v425 = vadd.f32 %v377, %v417
      %v426 = vadd.f32 %v378, %v418
      %v427 = vadd.f32 %v379, %v419
      %v428 = vadd.f32 %v380, %v420
      %vm429 = vcmask 48128
      %430 = vst.msk [vmem:[#allocation2] sm:$0xff] %vm429, 0.0
      %vm431 = vcmask 41984
      %432 = vst.msk [vmem:[#allocation2 + $0x8] sm:$0x3] %vm431, 0.0
      %s433 = scalar_lea.vmem [#allocation2], 144
      %434 = vst.msk [vmem:[%s433] sm:$0xff] %vm429, 0.0
      %435 = vst.msk [vmem:[%s433 + $0x8] sm:$0x3] %vm431, 0.0
      %s436 = scalar_lea.vmem [#allocation2], 16
      %vm437 = vcmask 40960
      %438 = vst.msk [vmem:[%s436] sm:$0x1] %vm437, 0.0
      %439 = vst.msk [vmem:[%s436 + $0x10] sm:$0x1] %vm437, 0.0
      %440 = vst.msk [vmem:[%s436 + $0x20] sm:$0x1] %vm437, 0.0
      %441 = vst.msk [vmem:[%s436 + $0x30] sm:$0x1] %vm437, 0.0
      %442 = vst.msk [vmem:[%s436 + $0x40] sm:$0x1] %vm437, 0.0
      %443 = vst.msk [vmem:[%s436 + $0x50] sm:$0x1] %vm437, 0.0
      %444 = vst.msk [vmem:[%s436 + $0x60] sm:$0x1] %vm437, 0.0
      %445 = vst.msk [vmem:[%s436 + $0x70] sm:$0x1] %vm437, 0.0
      %446 = vst.msk [vmem:[%s436 + $0x9] sm:$0x1] %vm437, 0.0
      %447 = vst.msk [vmem:[%s436 + $0x19] sm:$0x1] %vm437, 0.0
      %448 = vst.msk [vmem:[%s436 + $0x29] sm:$0x1] %vm437, 0.0
      %449 = vst.msk [vmem:[%s436 + $0x39] sm:$0x1] %vm437, 0.0
      %450 = vst.msk [vmem:[%s436 + $0x49] sm:$0x1] %vm437, 0.0
      %451 = vst.msk [vmem:[%s436 + $0x59] sm:$0x1] %vm437, 0.0
      %452 = vst.msk [vmem:[%s436 + $0x69] sm:$0x1] %vm437, 0.0
      %453 = vst.msk [vmem:[%s436 + $0x79] sm:$0x1] %vm437, 0.0
      %454 = vst.msk [vmem:[%s436 + $0x1] sm:$0xff] %vm429, %v421
      %455 = vst.msk [vmem:[%s436 + $0x11] sm:$0xff] %vm429, %v422
      %456 = vst.msk [vmem:[%s436 + $0x21] sm:$0xff] %vm429, %v423
      %457 = vst.msk [vmem:[%s436 + $0x31] sm:$0xff] %vm429, %v424
      %458 = vst.msk [vmem:[%s436 + $0x41] sm:$0xff] %vm429, %v425
      %459 = vst.msk [vmem:[%s436 + $0x51] sm:$0xff] %vm429, %v426
      %460 = vst.msk [vmem:[%s436 + $0x61] sm:$0xff] %vm429, %v427
      %461 = vst.msk [vmem:[%s436 + $0x71] sm:$0xff] %vm429, %v428
      %v462 = vld [vmem:[#allocation2] sm:$0xff]
      %v463 = vld [vmem:[#allocation2 + $0x10] sm:$0xff]
      %v464 = vld [vmem:[#allocation2 + $0x20] sm:$0xff]
      %v465 = vld [vmem:[#allocation2 + $0x30] sm:$0xff]
      %v466 = vld [vmem:[#allocation2 + $0x40] sm:$0xff]
      %v467 = vld [vmem:[#allocation2 + $0x50] sm:$0xff]
      %v468 = vld [vmem:[#allocation2 + $0x60] sm:$0xff]
      %v469 = vld [vmem:[#allocation2 + $0x70] sm:$0xff]
      %v470 = vld [vmem:[#allocation2 + $0x1] sm:$0xff]
      %v471 = vld [vmem:[#allocation2 + $0x11] sm:$0xff]
      %v472 = vld [vmem:[#allocation2 + $0x21] sm:$0xff]
      %v473 = vld [vmem:[#allocation2 + $0x31] sm:$0xff]
      %v474 = vld [vmem:[#allocation2 + $0x41] sm:$0xff]
      %v475 = vld [vmem:[#allocation2 + $0x51] sm:$0xff]
      %v476 = vld [vmem:[#allocation2 + $0x61] sm:$0xff]
      %v477 = vld [vmem:[#allocation2 + $0x71] sm:$0xff]
      %v478 = vld [vmem:[#allocation2 + $0x2] sm:$0xff]
      %v479 = vld [vmem:[#allocation2 + $0x12] sm:$0xff]
      %v480 = vld [vmem:[#allocation2 + $0x22] sm:$0xff]
      %v481 = vld [vmem:[#allocation2 + $0x32] sm:$0xff]
      %v482 = vld [vmem:[#allocation2 + $0x42] sm:$0xff]
      %v483 = vld [vmem:[#allocation2 + $0x52] sm:$0xff]
      %v484 = vld [vmem:[#allocation2 + $0x62] sm:$0xff]
      %v485 = vld [vmem:[#allocation2 + $0x72] sm:$0xff]
      %v486 = vld [vmem:[%s436] sm:$0xff]
      %v487 = vld [vmem:[%s436 + $0x10] sm:$0xff]
      %v488 = vld [vmem:[%s436 + $0x20] sm:$0xff]
      %v489 = vld [vmem:[%s436 + $0x30] sm:$0xff]
      %v490 = vld [vmem:[%s436 + $0x40] sm:$0xff]
      %v491 = vld [vmem:[%s436 + $0x50] sm:$0xff]
      %v492 = vld [vmem:[%s436 + $0x60] sm:$0xff]
      %v493 = vld [vmem:[%s436 + $0x70] sm:$0xff]
      %v494 = vld [vmem:[%s436 + $0x1] sm:$0xff]
      %v495 = vld [vmem:[%s436 + $0x11] sm:$0xff]
      %v496 = vld [vmem:[%s436 + $0x21] sm:$0xff]
      %v497 = vld [vmem:[%s436 + $0x31] sm:$0xff]
      %v498 = vld [vmem:[%s436 + $0x41] sm:$0xff]
      %v499 = vld [vmem:[%s436 + $0x51] sm:$0xff]
      %v500 = vld [vmem:[%s436 + $0x61] sm:$0xff]
      %v501 = vld [vmem:[%s436 + $0x71] sm:$0xff]
      %v502 = vld [vmem:[%s436 + $0x2] sm:$0xff]
      %v503 = vld [vmem:[%s436 + $0x12] sm:$0xff]
      %v504 = vld [vmem:[%s436 + $0x22] sm:$0xff]
      %v505 = vld [vmem:[%s436 + $0x32] sm:$0xff]
      %v506 = vld [vmem:[%s436 + $0x42] sm:$0xff]
      %v507 = vld [vmem:[%s436 + $0x52] sm:$0xff]
      %v508 = vld [vmem:[%s436 + $0x62] sm:$0xff]
      %v509 = vld [vmem:[%s436 + $0x72] sm:$0xff]
      %s510 = scalar_lea.vmem [#allocation2], 32
      %v511 = vld [vmem:[%s510] sm:$0xff]
      %v512 = vld [vmem:[%s510 + $0x10] sm:$0xff]
      %v513 = vld [vmem:[%s510 + $0x20] sm:$0xff]
      %v514 = vld [vmem:[%s510 + $0x30] sm:$0xff]
      %v515 = vld [vmem:[%s510 + $0x40] sm:$0xff]
      %v516 = vld [vmem:[%s510 + $0x50] sm:$0xff]
      %v517 = vld [vmem:[%s510 + $0x60] sm:$0xff]
      %v518 = vld [vmem:[%s510 + $0x70] sm:$0xff]
      %v519 = vld [vmem:[%s510 + $0x1] sm:$0xff]
      %v520 = vld [vmem:[%s510 + $0x11] sm:$0xff]
      %v521 = vld [vmem:[%s510 + $0x21] sm:$0xff]
      %v522 = vld [vmem:[%s510 + $0x31] sm:$0xff]
      %v523 = vld [vmem:[%s510 + $0x41] sm:$0xff]
      %v524 = vld [vmem:[%s510 + $0x51] sm:$0xff]
      %v525 = vld [vmem:[%s510 + $0x61] sm:$0xff]
      %v526 = vld [vmem:[%s510 + $0x71] sm:$0xff]
      %v527 = vld [vmem:[%s510 + $0x2] sm:$0xff]
      %v528 = vld [vmem:[%s510 + $0x12] sm:$0xff]
      %v529 = vld [vmem:[%s510 + $0x22] sm:$0xff]
      %v530 = vld [vmem:[%s510 + $0x32] sm:$0xff]
      %v531 = vld [vmem:[%s510 + $0x42] sm:$0xff]
      %v532 = vld [vmem:[%s510 + $0x52] sm:$0xff]
      %v533 = vld [vmem:[%s510 + $0x62] sm:$0xff]
      %v534 = vld [vmem:[%s510 + $0x72] sm:$0xff]
      %543 = vrot.lane.b32.xlu0 %v470, 6
      %v544 = vpop.permute.xlu0 %543
      %545 = vrot.lane.b32.xlu0 %v471, 6
      %v546 = vpop.permute.xlu0 %545
      %547 = vrot.lane.b32.xlu0 %v472, 6
      %v548 = vpop.permute.xlu0 %547
      %549 = vrot.lane.b32.xlu0 %v473, 6
      %v550 = vpop.permute.xlu0 %549
      %551 = vrot.lane.b32.xlu0 %v474, 6
      %v552 = vpop.permute.xlu0 %551
      %553 = vrot.lane.b32.xlu0 %v475, 6
      %v554 = vpop.permute.xlu0 %553
      %555 = vrot.lane.b32.xlu0 %v476, 6
      %v556 = vpop.permute.xlu0 %555
      %557 = vrot.lane.b32.xlu0 %v477, 6
      %v558 = vpop.permute.xlu0 %557
      %575 = vrot.lane.b32.xlu0 %v478, 12
      %v576 = vpop.permute.xlu0 %575
      %577 = vrot.lane.b32.xlu0 %v479, 12
      %v578 = vpop.permute.xlu0 %577
      %579 = vrot.lane.b32.xlu0 %v480, 12
      %v580 = vpop.permute.xlu0 %579
      %581 = vrot.lane.b32.xlu0 %v481, 12
      %v582 = vpop.permute.xlu0 %581
      %583 = vrot.lane.b32.xlu0 %v482, 12
      %v584 = vpop.permute.xlu0 %583
      %585 = vrot.lane.b32.xlu0 %v483, 12
      %v586 = vpop.permute.xlu0 %585
      %587 = vrot.lane.b32.xlu0 %v484, 12
      %v588 = vpop.permute.xlu0 %587
      %589 = vrot.lane.b32.xlu0 %v485, 12
      %v590 = vpop.permute.xlu0 %589
      %607 = vrot.lane.b32.xlu0 %v486, 18
      %v608 = vpop.permute.xlu0 %607
      %609 = vrot.lane.b32.xlu0 %v487, 18
      %v610 = vpop.permute.xlu0 %609
      %611 = vrot.lane.b32.xlu0 %v488, 18
      %v612 = vpop.permute.xlu0 %611
      %613 = vrot.lane.b32.xlu0 %v489, 18
      %v614 = vpop.permute.xlu0 %613
      %615 = vrot.lane.b32.xlu0 %v490, 18
      %v616 = vpop.permute.xlu0 %615
      %617 = vrot.lane.b32.xlu0 %v491, 18
      %v618 = vpop.permute.xlu0 %617
      %619 = vrot.lane.b32.xlu0 %v492, 18
      %v620 = vpop.permute.xlu0 %619
      %621 = vrot.lane.b32.xlu0 %v493, 18
      %v622 = vpop.permute.xlu0 %621
      %639 = vrot.lane.b32.xlu0 %v494, 24
      %v640 = vpop.permute.xlu0 %639
      %641 = vrot.lane.b32.xlu0 %v495, 24
      %v642 = vpop.permute.xlu0 %641
      %643 = vrot.lane.b32.xlu0 %v496, 24
      %v644 = vpop.permute.xlu0 %643
      %645 = vrot.lane.b32.xlu0 %v497, 24
      %v646 = vpop.permute.xlu0 %645
      %647 = vrot.lane.b32.xlu0 %v498, 24
      %v648 = vpop.permute.xlu0 %647
      %649 = vrot.lane.b32.xlu0 %v499, 24
      %v650 = vpop.permute.xlu0 %649
      %651 = vrot.lane.b32.xlu0 %v500, 24
      %v652 = vpop.permute.xlu0 %651
      %653 = vrot.lane.b32.xlu0 %v501, 24
      %v654 = vpop.permute.xlu0 %653
      %671 = vrot.lane.b32.xlu0 %v502, 30
      %v672 = vpop.permute.xlu0 %671
      %673 = vrot.lane.b32.xlu0 %v503, 30
      %v674 = vpop.permute.xlu0 %673
      %675 = vrot.lane.b32.xlu0 %v504, 30
      %v676 = vpop.permute.xlu0 %675
      %677 = vrot.lane.b32.xlu0 %v505, 30
      %v678 = vpop.permute.xlu0 %677
      %679 = vrot.lane.b32.xlu0 %v506, 30
      %v680 = vpop.permute.xlu0 %679
      %681 = vrot.lane.b32.xlu0 %v507, 30
      %v682 = vpop.permute.xlu0 %681
      %683 = vrot.lane.b32.xlu0 %v508, 30
      %v684 = vpop.permute.xlu0 %683
      %685 = vrot.lane.b32.xlu0 %v509, 30
      %v686 = vpop.permute.xlu0 %685
      %703 = vrot.lane.b32.xlu0 %v511, 36
      %v704 = vpop.permute.xlu0 %703
      %705 = vrot.lane.b32.xlu0 %v512, 36
      %v706 = vpop.permute.xlu0 %705
      %707 = vrot.lane.b32.xlu0 %v513, 36
      %v708 = vpop.permute.xlu0 %707
      %709 = vrot.lane.b32.xlu0 %v514, 36
      %v710 = vpop.permute.xlu0 %709
      %711 = vrot.lane.b32.xlu0 %v515, 36
      %v712 = vpop.permute.xlu0 %711
      %713 = vrot.lane.b32.xlu0 %v516, 36
      %v714 = vpop.permute.xlu0 %713
      %715 = vrot.lane.b32.xlu0 %v517, 36
      %v716 = vpop.permute.xlu0 %715
      %717 = vrot.lane.b32.xlu0 %v518, 36
      %v718 = vpop.permute.xlu0 %717
      %735 = vrot.lane.b32.xlu0 %v519, 42
      %v736 = vpop.permute.xlu0 %735
      %737 = vrot.lane.b32.xlu0 %v520, 42
      %v738 = vpop.permute.xlu0 %737
      %739 = vrot.lane.b32.xlu0 %v521, 42
      %v740 = vpop.permute.xlu0 %739
      %741 = vrot.lane.b32.xlu0 %v522, 42
      %v742 = vpop.permute.xlu0 %741
      %743 = vrot.lane.b32.xlu0 %v523, 42
      %v744 = vpop.permute.xlu0 %743
      %745 = vrot.lane.b32.xlu0 %v524, 42
      %v746 = vpop.permute.xlu0 %745
      %747 = vrot.lane.b32.xlu0 %v525, 42
      %v748 = vpop.permute.xlu0 %747
      %749 = vrot.lane.b32.xlu0 %v526, 42
      %v750 = vpop.permute.xlu0 %749
      %767 = vrot.lane.b32.xlu0 %v527, 48
      %v768 = vpop.permute.xlu0 %767
      %769 = vrot.lane.b32.xlu0 %v528, 48
      %v770 = vpop.permute.xlu0 %769
      %771 = vrot.lane.b32.xlu0 %v529, 48
      %v772 = vpop.permute.xlu0 %771
      %773 = vrot.lane.b32.xlu0 %v530, 48
      %v774 = vpop.permute.xlu0 %773
      %775 = vrot.lane.b32.xlu0 %v531, 48
      %v776 = vpop.permute.xlu0 %775
      %777 = vrot.lane.b32.xlu0 %v532, 48
      %v778 = vpop.permute.xlu0 %777
      %779 = vrot.lane.b32.xlu0 %v533, 48
      %v780 = vpop.permute.xlu0 %779
      %781 = vrot.lane.b32.xlu0 %v534, 48
      %v782 = vpop.permute.xlu0 %781
      %v791 = vsel %vm429, %v462, %v544
      %v792 = vsel %vm429, %v463, %v546
      %v793 = vsel %vm429, %v464, %v548
      %v794 = vsel %vm429, %v465, %v550
      %v795 = vsel %vm429, %v466, %v552
      %v796 = vsel %vm429, %v467, %v554
      %v797 = vsel %vm429, %v468, %v556
      %v798 = vsel %vm429, %v469, %v558
      %vm799 = vcmask 97280
      %v800 = vsel %vm799, %v791, %v576
      %v801 = vsel %vm799, %v792, %v578
      %v802 = vsel %vm799, %v793, %v580
      %v803 = vsel %vm799, %v794, %v582
      %v804 = vsel %vm799, %v795, %v584
      %v805 = vsel %vm799, %v796, %v586
      %v806 = vsel %vm799, %v797, %v588
      %v807 = vsel %vm799, %v798, %v590
      %vm808 = vcmask 146432
      %v809 = vsel %vm808, %v800, %v608
      %v810 = vsel %vm808, %v801, %v610
      %v811 = vsel %vm808, %v802, %v612
      %v812 = vsel %vm808, %v803, %v614
      %v813 = vsel %vm808, %v804, %v616
      %v814 = vsel %vm808, %v805, %v618
      %v815 = vsel %vm808, %v806, %v620
      %v816 = vsel %vm808, %v807, %v622
      %vm817 = vcmask 195584
      %v818 = vsel %vm817, %v809, %v640
      %v819 = vsel %vm817, %v810, %v642
      %v820 = vsel %vm817, %v811, %v644
      %v821 = vsel %vm817, %v812, %v646
      %v822 = vsel %vm817, %v813, %v648
      %v823 = vsel %vm817, %v814, %v650
      %v824 = vsel %vm817, %v815, %v652
      %v825 = vsel %vm817, %v816, %v654
      %vm826 = vcmask 244736
      %v827 = vsel %vm826, %v818, %v672
      %v828 = vsel %vm826, %v819, %v674
      %v829 = vsel %vm826, %v820, %v676
      %v830 = vsel %vm826, %v821, %v678
      %v831 = vsel %vm826, %v822, %v680
      %v832 = vsel %vm826, %v823, %v682
      %v833 = vsel %vm826, %v824, %v684
      %v834 = vsel %vm826, %v825, %v686
      %vm835 = vcmask 293888
      %v836 = vsel %vm835, %v827, %v704
      %v837 = vsel %vm835, %v828, %v706
      %v838 = vsel %vm835, %v829, %v708
      %v839 = vsel %vm835, %v830, %v710
      %v840 = vsel %vm835, %v831, %v712
      %v841 = vsel %vm835, %v832, %v714
      %v842 = vsel %vm835, %v833, %v716
      %v843 = vsel %vm835, %v834, %v718
      %vm844 = vcmask 343040
      %v845 = vsel %vm844, %v836, %v736
      %v846 = vsel %vm844, %v837, %v738
      %v847 = vsel %vm844, %v838, %v740
      %v848 = vsel %vm844, %v839, %v742
      %v849 = vsel %vm844, %v840, %v744
      %v850 = vsel %vm844, %v841, %v746
      %v851 = vsel %vm844, %v842, %v748
      %v852 = vsel %vm844, %v843, %v750
      %vm853 = vcmask 392192
      %v854 = vsel %vm853, %v845, %v768
      %v855 = vsel %vm853, %v846, %v770
      %v856 = vsel %vm853, %v847, %v772
      %v857 = vsel %vm853, %v848, %v774
      %v858 = vsel %vm853, %v849, %v776
      %v859 = vsel %vm853, %v850, %v778
      %v860 = vsel %vm853, %v851, %v780
      %v861 = vsel %vm853, %v852, %v782
      %v862 = vpack.c.bf16 %v855, %v854
      %v863 = vpack.c.bf16 %v857, %v856
      %v864 = vpack.c.bf16 %v859, %v858
      %v865 = vpack.c.bf16 %v861, %v860
      %v866 = vld [vmem:[%s6] sm:$0xf]
      %v867 = vld [vmem:[%s6 + $0x4] sm:$0xf]
      %v868 = vld [vmem:[%s6 + $0x8] sm:$0xf]
      %v869 = vld [vmem:[%s6 + $0xc] sm:$0xf]
      %v870 = vld [vmem:[%s6 + $0x10] sm:$0xf]
      %v871 = vld [vmem:[%s6 + $0x14] sm:$0xf]
      %v872 = vld [vmem:[%s6 + $0x18] sm:$0x7]
      %v880 = vunpack.c.l.b16 %v866
      %v881 = vunpack.c.l.b16 %v867
      %v882 = vunpack.c.l.b16 %v868
      %v883 = vunpack.c.l.b16 %v869
      %v884 = vunpack.c.l.b16 %v870
      %v885 = vunpack.c.l.b16 %v871
      %v886 = vunpack.c.l.b16 %v872
      %v887 = vpack.c.b16 %v881, %v880
      %v888 = vpack.c.b16 %v883, %v882
      %v889 = vpack.c.b16 %v885, %v884
      %v890 = vpack.c.b16 %v886, %v886
      %vm894 = vcmask 441344
      %v896 = vsel %vm894, %v862, 0
      %v899 = vsel %vm894, %v863, 0
      %v902 = vsel %vm894, %v864, 0
      %v905 = vsel %vm894, %v865, 0
      %vm907 = vcmask 1042432
      %v909 = vsel %vm907, %v890, 0
      %911 = vmatpush.bf16.msra.mxu0 0
      %912 = vmatpush.bf16.msra.mxu0 0
      %913 = vmatpush.bf16.msra.mxu0 0
      %914 = vmatpush.bf16.msra.mxu0 0
      %915 = vmatpush.bf16.msra.mxu0 %v909
      %916 = vmatpush.bf16.msra.mxu0 %v889
      %917 = vmatpush.bf16.msra.mxu0 %v888
      %918 = vmatpush.bf16.msra.mxu0 %v887
      %919 = vmatmul.bf16.gmra.mxu0 %v896
      %v920 = vpop.f32.mrf.mxu0
      %v921 = vadd.f32 0.0, %v920
      %v922 = vpop.f32.mrf.mxu0
      %v923 = vadd.f32 0.0, %v922
      %924 = vmatmul.bf16.gmra.mxu0 %v899
      %v925 = vpop.f32.mrf.mxu0
      %v926 = vadd.f32 0.0, %v925
      %v927 = vpop.f32.mrf.mxu0
      %v928 = vadd.f32 0.0, %v927
      %929 = vmatmul.bf16.gmra.mxu0 %v902
      %v930 = vpop.f32.mrf.mxu0
      %v931 = vadd.f32 0.0, %v930
      %v932 = vpop.f32.mrf.mxu0
      %v933 = vadd.f32 0.0, %v932
      %934 = vmatmul.bf16.gmra.mxu0 %v905
      %v935 = vpop.f32.mrf.mxu0
      %v936 = vadd.f32 0.0, %v935
      %v937 = vpop.f32.mrf.mxu0
      %v938 = vadd.f32 0.0, %v937
      %939 = vdwg.mxu0
      %940 = vst.msk [vmem:[%s335] sm:$0xff] %vm429, %v921
      %941 = vst.msk [vmem:[%s335 + $0x8] sm:$0xff] %vm429, %v923
      %942 = vst.msk [vmem:[%s335 + $0x10] sm:$0xff] %vm429, %v926
      %943 = vst.msk [vmem:[%s335 + $0x18] sm:$0xff] %vm429, %v928
      %944 = vst.msk [vmem:[%s335 + $0x20] sm:$0xff] %vm429, %v931
      %945 = vst.msk [vmem:[%s335 + $0x28] sm:$0xff] %vm429, %v933
      %946 = vst.msk [vmem:[%s335 + $0x30] sm:$0xff] %vm429, %v936
      %947 = vst.msk [vmem:[%s335 + $0x38] sm:$0xff] %vm429, %v938
      %v948 = vsel %vm429, %v921, 0.0
      %v949 = vsel %vm429, %v923, 0.0
      %v950 = vadd.f32 %v948, %v949
      %v951 = vsel %vm429, %v926, 0.0
      %v952 = vadd.f32 %v950, %v951
      %v953 = vsel %vm429, %v928, 0.0
      %v954 = vadd.f32 %v952, %v953
      %v955 = vsel %vm429, %v931, 0.0
      %v956 = vadd.f32 %v954, %v955
      %v957 = vsel %vm429, %v933, 0.0
      %v958 = vadd.f32 %v956, %v957
      %v959 = vsel %vm429, %v936, 0.0
      %v960 = vadd.f32 %v958, %v959
      %v961 = vsel %vm429, %v938, 0.0
      %v962 = vadd.f32 %v960, %v961
      %v963 = vrot.slane %v962, 4
      %v964 = vadd.f32 %v962, %v963
      %v965 = vrot.slane %v964, 2
      %v966 = vadd.f32 %v964, %v965
      %v967 = vrot.slane %v966, 1
      %v968 = vadd.f32 %v966, %v967
      %969 = vst.msk [vmem:[%s339] sm:$0x1] %vm437, %v968
      %v970 = vmul.f32 %v921, %v921
      %v971 = vmul.f32 %v923, %v923
      %v972 = vmul.f32 %v926, %v926
      %v973 = vmul.f32 %v928, %v928
      %v974 = vmul.f32 %v931, %v931
      %v975 = vmul.f32 %v933, %v933
      %v976 = vmul.f32 %v936, %v936
      %v977 = vmul.f32 %v938, %v938
      %v978 = vsel %vm429, %v970, 0.0
      %v979 = vsel %vm429, %v971, 0.0
      %v980 = vadd.f32 %v978, %v979
      %v981 = vsel %vm429, %v972, 0.0
      %v982 = vadd.f32 %v980, %v981
      %v983 = vsel %vm429, %v973, 0.0
      %v984 = vadd.f32 %v982, %v983
      %v985 = vsel %vm429, %v974, 0.0
      %v986 = vadd.f32 %v984, %v985
      %v987 = vsel %vm429, %v975, 0.0
      %v988 = vadd.f32 %v986, %v987
      %v989 = vsel %vm429, %v976, 0.0
      %v990 = vadd.f32 %v988, %v989
      %v991 = vsel %vm429, %v977, 0.0
      %v992 = vadd.f32 %v990, %v991
      %v993 = vrot.slane %v992, 4
      %v994 = vadd.f32 %v992, %v993
      %v995 = vrot.slane %v994, 2
      %v996 = vadd.f32 %v994, %v995
      %v997 = vrot.slane %v996, 1
      %v998 = vadd.f32 %v996, %v997
      %999 = vst.msk [vmem:[%s339 + $0x1] sm:$0x1] %vm437, %v998
      %p1000 = scmp.lt.s32.totalorder %s20, 1
      %s1001 = scalar_select %p1000, %s20, 1
      %s1002 = smul.addr %s1001, 8
      %s1003 = smul.addr %s1002, 8
      %s1004 = scalar_lea.vmem %s7, %s1003
      %p1005 = scmp.lt.s32.totalorder %s20, 1
      %s1006 = scalar_select %p1005, %s20, 1
      %s1007 = smul.addr %s1006, 2
      %s1008 = scalar_lea.vmem %s8, %s1007
      // Predicated region
      $region49: #{bottle2neck_forward.9} parent=47 // pred_check
        %p1009 = pneg %p195
      $region50: #{bottle2neck_forward.9} parent=47 // pred_check_branch
        %1011 = sbr.rel (%p1009) target = $region52
      $region51: #{bottle2neck_forward.9} parent=47 // pred_region
        _
      $region52: #{bottle2neck_forward.9} parent=47 // pred_fallthru
        _
      // Predicated region
      $region53: #{bottle2neck_forward.9} parent=47 // pred_check
        %p1012 = pneg %p221
      $region54: #{bottle2neck_forward.9} parent=47 // pred_check_branch
        %1014 = sbr.rel (%p1012) target = $region56
      $region55: #{bottle2neck_forward.9} parent=47 // pred_region
        _
      $region56: #{bottle2neck_forward.9} parent=47 // pred_fallthru
        _
    $region48: #{bottle2neck_forward.9} parent=5 // pred_fallthru
      _
    %p1015 = scmp.le.s32.totalorder 2, %s15
    // Predicated region
    $region57: #{bottle2neck_forward.9} parent=5 // pred_check
      %p1016 = pneg %p1015
    $region58: #{bottle2neck_forward.9} parent=5 // pred_check_branch
      %1018 = sbr.rel (%p1016) target = $region60
    $region59: #{bottle2neck_forward.9} parent=5 // pred_region
      %s1019 = ssub.s32 %s15, 2
      // Predicated region
      $region61: #{bottle2neck_forward.9} parent=59 // pred_check
        %p1020 = pneg %p201
      $region62: #{bottle2neck_forward.9} parent=59 // pred_check_branch
        %1022 = sbr.rel (%p1020) target = $region64
      $region63: #{bottle2neck_forward.9} parent=59 // pred_region
        %p1023 = scmp.lt.s32.totalorder %s21, 1
        %s1024 = scalar_select %p1023, %s21, 1
        %s1025 = smul.addr %s1024, 8
        %s1026 = smul.addr %s1025, 8
        %s1027 = scalar_lea.vmem %s7, %s1026
      $region64: #{bottle2neck_forward.9} parent=59 // pred_fallthru
        _
      // Predicated region
      $region65: #{bottle2neck_forward.9} parent=59 // pred_check
        %p1028 = pneg %p227
      $region66: #{bottle2neck_forward.9} parent=59 // pred_check_branch
        %1030 = sbr.rel (%p1028) target = $region68
      $region67: #{bottle2neck_forward.9} parent=59 // pred_region
        %p1031 = scmp.lt.s32.totalorder %s21, 1
        %s1032 = scalar_select %p1031, %s21, 1
        %s1033 = smul.addr %s1032, 2
        %s1034 = scalar_lea.vmem %s8, %s1033
      $region68: #{bottle2neck_forward.9} parent=59 // pred_fallthru
        _
    $region60: #{bottle2neck_forward.9} parent=5 // pred_fallthru
      _
  $region6: #{bottle2neck_forward.9} parent=0 // loop_footer
    %s19 = sadd.s32 1, %s15
  $region7: #{bottle2neck_forward.9} parent=0 // loop_footer_branch
    %14 = sbr.rel target = $region3
  $region8: #{bottle2neck_forward.9} parent=0 // loop_exit
    _

// kernel: bottle2neck_forward.11
$region0: #{bottle2neck_forward.11}
  #allocation0 [shape = 'u32[]', space=smem, size = 0x4, offset = 0x4, fixed_abs, tag = 'smem constant byte address 0x4 - core index']
  #allocation1 [shape = 'u32[72,128]{1,0:T(1,128)}', space=vmem, size = 0x9000, scoped, tag = 'internal scratch']
  %s0 = inlined_call_operand.vmem [shape: f32[128,64], index: 0, kind: input, shape index: {}]
  %s1 = inlined_call_operand.vmem [shape: f32[1,64], index: 1, kind: input, shape index: {}]
  %s2 = inlined_call_operand.vmem [shape: f32[1,64], index: 2, kind: input, shape index: {}]
  %s3 = inlined_call_operand.vmem [shape: f32[128,64], index: 3, kind: input, shape index: {}]
  %s4 = inlined_call_operand.hbm [shape: f32[128,64], index: 4, kind: output, shape index: {}]
  %s5 = sld [smem:[#allocation0]]
  $region26: #{bottle2neck_forward.11} parent=0
    _
  %s7 = ssub.s32 1, %s5
  %s8 = scalar_select 0, %s7, %s5
  $region1: #{bottle2neck_forward.11} parent=0
    #allocation2 [shape = 'u8[65536]{0}', space=vmem, size = 0x10000, scoped, tag = 'output window, operand 0, single buffered']
    #allocation3 [shape = 's32[1]{0}', space=sflag, size = 0x4, scoped, tag = 'scoped memory for bottle2neck_forward.11']
    %9 = vsyncpa [#allocation3], 0
    // Predicated region
    $region2: #{bottle2neck_forward.11} parent=1 // pred_check
      _
    $region3: #{bottle2neck_forward.11} parent=1 // pred_check_branch
      %11 = sbr.rel (0) target = $region5
    $region4: #{bottle2neck_forward.11} parent=1 // pred_region
      _
    $region5: #{bottle2neck_forward.11} parent=1 // pred_fallthru
      _
    // Predicated region
    $region6: #{bottle2neck_forward.11} parent=1 // pred_check
      _
    $region7: #{bottle2neck_forward.11} parent=1 // pred_check_branch
      %13 = sbr.rel (0) target = $region9
    $region8: #{bottle2neck_forward.11} parent=1 // pred_region
      _
    $region9: #{bottle2neck_forward.11} parent=1 // pred_fallthru
      _
    // Predicated region
    $region10: #{bottle2neck_forward.11} parent=1 // pred_check
      _
    $region11: #{bottle2neck_forward.11} parent=1 // pred_check_branch
      %15 = sbr.rel (0) target = $region13
    $region12: #{bottle2neck_forward.11} parent=1 // pred_region
      _
    $region13: #{bottle2neck_forward.11} parent=1 // pred_fallthru
      _
    // Predicated region
    $region14: #{bottle2neck_forward.11} parent=1 // pred_check
      _
    $region15: #{bottle2neck_forward.11} parent=1 // pred_check_branch
      %17 = sbr.rel (0) target = $region17
    $region16: #{bottle2neck_forward.11} parent=1 // pred_region
      _
    $region17: #{bottle2neck_forward.11} parent=1 // pred_fallthru
      _
    %v18 = vld [vmem:[%s0] sm:$0xff]
    %v19 = vld [vmem:[%s0 + $0x8] sm:$0xff]
    %v20 = vld [vmem:[%s0 + $0x10] sm:$0xff]
    %v21 = vld [vmem:[%s0 + $0x18] sm:$0xff]
    %v22 = vld [vmem:[%s0 + $0x20] sm:$0xff]
    %v23 = vld [vmem:[%s0 + $0x28] sm:$0xff]
    %v24 = vld [vmem:[%s0 + $0x30] sm:$0xff]
    %v25 = vld [vmem:[%s0 + $0x38] sm:$0xff]
    %v26 = vld [vmem:[%s0 + $0x40] sm:$0xff]
    %v27 = vld [vmem:[%s0 + $0x48] sm:$0xff]
    %v28 = vld [vmem:[%s0 + $0x50] sm:$0xff]
    %v29 = vld [vmem:[%s0 + $0x58] sm:$0xff]
    %v30 = vld [vmem:[%s0 + $0x60] sm:$0xff]
    %v31 = vld [vmem:[%s0 + $0x68] sm:$0xff]
    %v32 = vld [vmem:[%s0 + $0x70] sm:$0xff]
    %v33 = vld [vmem:[%s0 + $0x78] sm:$0xff]
    %v34 = vld [vmem:[%s1] sm:$0x1]
    %v36 = vperm.slane %v34, 0
    %v38 = vmul.f32 %v18, %v36
    %v39 = vmul.f32 %v19, %v36
    %v40 = vmul.f32 %v20, %v36
    %v41 = vmul.f32 %v21, %v36
    %v42 = vmul.f32 %v22, %v36
    %v43 = vmul.f32 %v23, %v36
    %v44 = vmul.f32 %v24, %v36
    %v45 = vmul.f32 %v25, %v36
    %v46 = vmul.f32 %v26, %v36
    %v47 = vmul.f32 %v27, %v36
    %v48 = vmul.f32 %v28, %v36
    %v49 = vmul.f32 %v29, %v36
    %v50 = vmul.f32 %v30, %v36
    %v51 = vmul.f32 %v31, %v36
    %v52 = vmul.f32 %v32, %v36
    %v53 = vmul.f32 %v33, %v36
    %v54 = vld [vmem:[%s2] sm:$0x1]
    %v56 = vperm.slane %v54, 0
    %v58 = vadd.f32 %v38, %v56
    %v59 = vadd.f32 %v39, %v56
    %v60 = vadd.f32 %v40, %v56
    %v61 = vadd.f32 %v41, %v56
    %v62 = vadd.f32 %v42, %v56
    %v63 = vadd.f32 %v43, %v56
    %v64 = vadd.f32 %v44, %v56
    %v65 = vadd.f32 %v45, %v56
    %v66 = vadd.f32 %v46, %v56
    %v67 = vadd.f32 %v47, %v56
    %v68 = vadd.f32 %v48, %v56
    %v69 = vadd.f32 %v49, %v56
    %v70 = vadd.f32 %v50, %v56
    %v71 = vadd.f32 %v51, %v56
    %v72 = vadd.f32 %v52, %v56
    %v73 = vadd.f32 %v53, %v56
    %v74 = vld [vmem:[%s3] sm:$0xff]
    %v75 = vld [vmem:[%s3 + $0x8] sm:$0xff]
    %v76 = vld [vmem:[%s3 + $0x10] sm:$0xff]
    %v77 = vld [vmem:[%s3 + $0x18] sm:$0xff]
    %v78 = vld [vmem:[%s3 + $0x20] sm:$0xff]
    %v79 = vld [vmem:[%s3 + $0x28] sm:$0xff]
    %v80 = vld [vmem:[%s3 + $0x30] sm:$0xff]
    %v81 = vld [vmem:[%s3 + $0x38] sm:$0xff]
    %v82 = vld [vmem:[%s3 + $0x40] sm:$0xff]
    %v83 = vld [vmem:[%s3 + $0x48] sm:$0xff]
    %v84 = vld [vmem:[%s3 + $0x50] sm:$0xff]
    %v85 = vld [vmem:[%s3 + $0x58] sm:$0xff]
    %v86 = vld [vmem:[%s3 + $0x60] sm:$0xff]
    %v87 = vld [vmem:[%s3 + $0x68] sm:$0xff]
    %v88 = vld [vmem:[%s3 + $0x70] sm:$0xff]
    %v89 = vld [vmem:[%s3 + $0x78] sm:$0xff]
    %v90 = vadd.f32 %v58, %v74
    %v91 = vadd.f32 %v59, %v75
    %v92 = vadd.f32 %v60, %v76
    %v93 = vadd.f32 %v61, %v77
    %v94 = vadd.f32 %v62, %v78
    %v95 = vadd.f32 %v63, %v79
    %v96 = vadd.f32 %v64, %v80
    %v97 = vadd.f32 %v65, %v81
    %v98 = vadd.f32 %v66, %v82
    %v99 = vadd.f32 %v67, %v83
    %v100 = vadd.f32 %v68, %v84
    %v101 = vadd.f32 %v69, %v85
    %v102 = vadd.f32 %v70, %v86
    %v103 = vadd.f32 %v71, %v87
    %v104 = vadd.f32 %v72, %v88
    %v105 = vadd.f32 %v73, %v89
    %v106 = vmax.f32 %v90, 0.0
    %v107 = vmax.f32 %v91, 0.0
    %v108 = vmax.f32 %v92, 0.0
    %v109 = vmax.f32 %v93, 0.0
    %v110 = vmax.f32 %v94, 0.0
    %v111 = vmax.f32 %v95, 0.0
    %v112 = vmax.f32 %v96, 0.0
    %v113 = vmax.f32 %v97, 0.0
    %v114 = vmax.f32 %v98, 0.0
    %v115 = vmax.f32 %v99, 0.0
    %v116 = vmax.f32 %v100, 0.0
    %v117 = vmax.f32 %v101, 0.0
    %v118 = vmax.f32 %v102, 0.0
    %v119 = vmax.f32 %v103, 0.0
    %v120 = vmax.f32 %v104, 0.0
    %v121 = vmax.f32 %v105, 0.0
    %vm122 = vcmask 523264
    %123 = vst.msk [vmem:[#allocation2] sm:$0xff] %vm122, %v106
    %124 = vst.msk [vmem:[#allocation2 + $0x8] sm:$0xff] %vm122, %v107
    %125 = vst.msk [vmem:[#allocation2 + $0x10] sm:$0xff] %vm122, %v108
    %126 = vst.msk [vmem:[#allocation2 + $0x18] sm:$0xff] %vm122, %v109
    %127 = vst.msk [vmem:[#allocation2 + $0x20] sm:$0xff] %vm122, %v110
    %128 = vst.msk [vmem:[#allocation2 + $0x28] sm:$0xff] %vm122, %v111
    %129 = vst.msk [vmem:[#allocation2 + $0x30] sm:$0xff] %vm122, %v112
    %130 = vst.msk [vmem:[#allocation2 + $0x38] sm:$0xff] %vm122, %v113
    %131 = vst.msk [vmem:[#allocation2 + $0x40] sm:$0xff] %vm122, %v114
    %132 = vst.msk [vmem:[#allocation2 + $0x48] sm:$0xff] %vm122, %v115
    %133 = vst.msk [vmem:[#allocation2 + $0x50] sm:$0xff] %vm122, %v116
    %134 = vst.msk [vmem:[#allocation2 + $0x58] sm:$0xff] %vm122, %v117
    %135 = vst.msk [vmem:[#allocation2 + $0x60] sm:$0xff] %vm122, %v118
    %136 = vst.msk [vmem:[#allocation2 + $0x68] sm:$0xff] %vm122, %v119
    %137 = vst.msk [vmem:[#allocation2 + $0x70] sm:$0xff] %vm122, %v120
    %138 = vst.msk [vmem:[#allocation2 + $0x78] sm:$0xff] %vm122, %v121
    // Predicated region
    $region18: #{bottle2neck_forward.11} parent=1 // pred_check
      _
    $region19: #{bottle2neck_forward.11} parent=1 // pred_check_branch
      %140 = sbr.rel (0) target = $region21
    $region20: #{bottle2neck_forward.11} parent=1 // pred_region
      %142 = vsyncadd [#allocation3], 0
      %s143 = sshll.u32 [#allocation2], 4
      %s144 = int_to_ptr.vmem [resolvable:$true] %s143
      %s145 = sshll.u32 %s4, 4
      %s146 = int_to_ptr.hbm [resolvable:$true] %s145
      %151 = dma.vmem_to_hbm [thread:$0]  %s144, 2048, %s146, [#allocation3], 128, 128, 8
    $region21: #{bottle2neck_forward.11} parent=1 // pred_fallthru
      _
    // Predicated region
    $region22: #{bottle2neck_forward.11} parent=1 // pred_check
      _
    $region23: #{bottle2neck_forward.11} parent=1 // pred_check_branch
      %153 = sbr.rel (0) target = $region25
    $region24: #{bottle2neck_forward.11} parent=1 // pred_region
      %155 = dma.done [#allocation3], 2048
    $region25: #{bottle2neck_forward.11} parent=1 // pred_fallthru
      _
    %156 = vsyncpa [#allocation3], 1

// kernel: bottle2neck_forward.10
$region0: #{bottle2neck_forward.10}
  #allocation0 [shape = 'u32[]', space=smem, size = 0x4, offset = 0x4, fixed_abs, tag = 'smem constant byte address 0x4 - core index']
  #allocation1 [shape = 'u32[72,128]{1,0:T(1,128)}', space=vmem, size = 0x9000, scoped, tag = 'internal scratch']
  %s0 = inlined_call_operand.vmem [shape: f32[4,128,6], index: 0, kind: input, shape index: {}]
  %s1 = inlined_call_operand.vmem [shape: f32[1,6], index: 1, kind: input, shape index: {}]
  %s2 = inlined_call_operand.vmem [shape: f32[1,6], index: 2, kind: input, shape index: {}]
  %s3 = inlined_call_operand.vmem [shape: f32[128,6], index: 3, kind: input, shape index: {}]
  %s4 = inlined_call_operand.vmem [shape: f32[1,6], index: 4, kind: input, shape index: {}]
  %s5 = inlined_call_operand.vmem [shape: f32[1,6], index: 5, kind: input, shape index: {}]
  %s6 = inlined_call_operand.vmem [shape: f32[128,6], index: 6, kind: input, shape index: {}]
  %s7 = inlined_call_operand.vmem [shape: f32[1,6], index: 7, kind: input, shape index: {}]
  %s8 = inlined_call_operand.vmem [shape: f32[1,6], index: 8, kind: input, shape index: {}]
  %s9 = inlined_call_operand.vmem [shape: f32[128,6], index: 9, kind: input, shape index: {}]
  %s10 = inlined_call_operand.vmem [shape: f32[1,6], index: 10, kind: input, shape index: {}]
  %s11 = inlined_call_operand.vmem [shape: f32[1,6], index: 11, kind: input, shape index: {}]
  %s12 = inlined_call_operand.vmem [shape: bf16[24,64], index: 12, kind: input, shape index: {}]
  %s13 = inlined_call_operand.vmem [shape: f32[128,64], index: 13, kind: output, shape index: {0}]
  %s14 = inlined_call_operand.vmem [shape: f32[1,2,64], index: 14, kind: output, shape index: {1}]
  %15 = xla_tuple %s13, %s14
  %s16 = sld [smem:[#allocation0]]
  $region70: #{bottle2neck_forward.10} parent=0
    _
  %s18 = ssub.s32 1, %s16
  %s19 = scalar_select 0, %s18, %s16
  // Predicated region
  $region2: #{bottle2neck_forward.10} parent=0 // pred_check
    _
  $region3: #{bottle2neck_forward.10} parent=0 // pred_check_branch
    %21 = sbr.rel (0) target = $region5
  $region4: #{bottle2neck_forward.10} parent=0 // pred_region
    %s22 = scalar_lea.vmem %s0, 384
  $region5: #{bottle2neck_forward.10} parent=0 // pred_fallthru
    _
  // Predicated region
  $region6: #{bottle2neck_forward.10} parent=0 // pred_check
    _
  $region7: #{bottle2neck_forward.10} parent=0 // pred_check_branch
    %24 = sbr.rel (0) target = $region9
  $region8: #{bottle2neck_forward.10} parent=0 // pred_region
    _
  $region9: #{bottle2neck_forward.10} parent=0 // pred_fallthru
    _
  // Predicated region
  $region10: #{bottle2neck_forward.10} parent=0 // pred_check
    _
  $region11: #{bottle2neck_forward.10} parent=0 // pred_check_branch
    %26 = sbr.rel (0) target = $region13
  $region12: #{bottle2neck_forward.10} parent=0 // pred_region
    _
  $region13: #{bottle2neck_forward.10} parent=0 // pred_fallthru
    _
  // Predicated region
  $region14: #{bottle2neck_forward.10} parent=0 // pred_check
    _
  $region15: #{bottle2neck_forward.10} parent=0 // pred_check_branch
    %28 = sbr.rel (0) target = $region17
  $region16: #{bottle2neck_forward.10} parent=0 // pred_region
    _
  $region17: #{bottle2neck_forward.10} parent=0 // pred_fallthru
    _
  // Predicated region
  $region18: #{bottle2neck_forward.10} parent=0 // pred_check
    _
  $region19: #{bottle2neck_forward.10} parent=0 // pred_check_branch
    %30 = sbr.rel (0) target = $region21
  $region20: #{bottle2neck_forward.10} parent=0 // pred_region
    _
  $region21: #{bottle2neck_forward.10} parent=0 // pred_fallthru
    _
  // Predicated region
  $region22: #{bottle2neck_forward.10} parent=0 // pred_check
    _
  $region23: #{bottle2neck_forward.10} parent=0 // pred_check_branch
    %32 = sbr.rel (0) target = $region25
  $region24: #{bottle2neck_forward.10} parent=0 // pred_region
    _
  $region25: #{bottle2neck_forward.10} parent=0 // pred_fallthru
    _
  // Predicated region
  $region26: #{bottle2neck_forward.10} parent=0 // pred_check
    _
  $region27: #{bottle2neck_forward.10} parent=0 // pred_check_branch
    %34 = sbr.rel (0) target = $region29
  $region28: #{bottle2neck_forward.10} parent=0 // pred_region
    _
  $region29: #{bottle2neck_forward.10} parent=0 // pred_fallthru
    _
  // Predicated region
  $region30: #{bottle2neck_forward.10} parent=0 // pred_check
    _
  $region31: #{bottle2neck_forward.10} parent=0 // pred_check_branch
    %36 = sbr.rel (0) target = $region33
  $region32: #{bottle2neck_forward.10} parent=0 // pred_region
    _
  $region33: #{bottle2neck_forward.10} parent=0 // pred_fallthru
    _
  // Predicated region
  $region34: #{bottle2neck_forward.10} parent=0 // pred_check
    _
  $region35: #{bottle2neck_forward.10} parent=0 // pred_check_branch
    %38 = sbr.rel (0) target = $region37
  $region36: #{bottle2neck_forward.10} parent=0 // pred_region
    _
  $region37: #{bottle2neck_forward.10} parent=0 // pred_fallthru
    _
  // Predicated region
  $region38: #{bottle2neck_forward.10} parent=0 // pred_check
    _
  $region39: #{bottle2neck_forward.10} parent=0 // pred_check_branch
    %40 = sbr.rel (0) target = $region41
  $region40: #{bottle2neck_forward.10} parent=0 // pred_region
    _
  $region41: #{bottle2neck_forward.10} parent=0 // pred_fallthru
    _
  // Predicated region
  $region42: #{bottle2neck_forward.10} parent=0 // pred_check
    _
  $region43: #{bottle2neck_forward.10} parent=0 // pred_check_branch
    %42 = sbr.rel (0) target = $region45
  $region44: #{bottle2neck_forward.10} parent=0 // pred_region
    _
  $region45: #{bottle2neck_forward.10} parent=0 // pred_fallthru
    _
  // Predicated region
  $region46: #{bottle2neck_forward.10} parent=0 // pred_check
    _
  $region47: #{bottle2neck_forward.10} parent=0 // pred_check_branch
    %44 = sbr.rel (0) target = $region49
  $region48: #{bottle2neck_forward.10} parent=0 // pred_region
    _
  $region49: #{bottle2neck_forward.10} parent=0 // pred_fallthru
    _
  // Predicated region
  $region50: #{bottle2neck_forward.10} parent=0 // pred_check
    _
  $region51: #{bottle2neck_forward.10} parent=0 // pred_check_branch
    %46 = sbr.rel (0) target = $region53
  $region52: #{bottle2neck_forward.10} parent=0 // pred_region
    _
  $region53: #{bottle2neck_forward.10} parent=0 // pred_fallthru
    _
  %s47 = scalar_lea.vmem %s0, 384
  %s48 = scalar_lea.vmem %s0, 384
  %v50 = vld [vmem:[%s3] sm:$0xff]
  %v51 = vld [vmem:[%s3 + $0x8] sm:$0xff]
  %v52 = vld [vmem:[%s3 + $0x10] sm:$0xff]
  %v53 = vld [vmem:[%s3 + $0x18] sm:$0xff]
  %v54 = vld [vmem:[%s3 + $0x20] sm:$0xff]
  %v55 = vld [vmem:[%s3 + $0x28] sm:$0xff]
  %v56 = vld [vmem:[%s3 + $0x30] sm:$0xff]
  %v57 = vld [vmem:[%s3 + $0x38] sm:$0xff]
  %v58 = vld [vmem:[%s3 + $0x40] sm:$0xff]
  %v59 = vld [vmem:[%s3 + $0x48] sm:$0xff]
  %v60 = vld [vmem:[%s3 + $0x50] sm:$0xff]
  %v61 = vld [vmem:[%s3 + $0x58] sm:$0xff]
  %v62 = vld [vmem:[%s3 + $0x60] sm:$0xff]
  %v63 = vld [vmem:[%s3 + $0x68] sm:$0xff]
  %v64 = vld [vmem:[%s3 + $0x70] sm:$0xff]
  %v65 = vld [vmem:[%s3 + $0x78] sm:$0xff]
  %v66 = vld [vmem:[%s4] sm:$0x1]
  %v68 = vperm.slane %v66, 0
  %v70 = vmul.f32 %v50, %v68
  %v71 = vmul.f32 %v51, %v68
  %v72 = vmul.f32 %v52, %v68
  %v73 = vmul.f32 %v53, %v68
  %v74 = vmul.f32 %v54, %v68
  %v75 = vmul.f32 %v55, %v68
  %v76 = vmul.f32 %v56, %v68
  %v77 = vmul.f32 %v57, %v68
  %v78 = vmul.f32 %v58, %v68
  %v79 = vmul.f32 %v59, %v68
  %v80 = vmul.f32 %v60, %v68
  %v81 = vmul.f32 %v61, %v68
  %v82 = vmul.f32 %v62, %v68
  %v83 = vmul.f32 %v63, %v68
  %v84 = vmul.f32 %v64, %v68
  %v85 = vmul.f32 %v65, %v68
  %v86 = vld [vmem:[%s5] sm:$0x1]
  %v88 = vperm.slane %v86, 0
  %v90 = vadd.f32 %v70, %v88
  %v91 = vadd.f32 %v71, %v88
  %v92 = vadd.f32 %v72, %v88
  %v93 = vadd.f32 %v73, %v88
  %v94 = vadd.f32 %v74, %v88
  %v95 = vadd.f32 %v75, %v88
  %v96 = vadd.f32 %v76, %v88
  %v97 = vadd.f32 %v77, %v88
  %v98 = vadd.f32 %v78, %v88
  %v99 = vadd.f32 %v79, %v88
  %v100 = vadd.f32 %v80, %v88
  %v101 = vadd.f32 %v81, %v88
  %v102 = vadd.f32 %v82, %v88
  %v103 = vadd.f32 %v83, %v88
  %v104 = vadd.f32 %v84, %v88
  %v105 = vadd.f32 %v85, %v88
  %v106 = vmax.f32 %v90, 0.0
  %v107 = vmax.f32 %v91, 0.0
  %v108 = vmax.f32 %v92, 0.0
  %v109 = vmax.f32 %v93, 0.0
  %v110 = vmax.f32 %v94, 0.0
  %v111 = vmax.f32 %v95, 0.0
  %v112 = vmax.f32 %v96, 0.0
  %v113 = vmax.f32 %v97, 0.0
  %v114 = vmax.f32 %v98, 0.0
  %v115 = vmax.f32 %v99, 0.0
  %v116 = vmax.f32 %v100, 0.0
  %v117 = vmax.f32 %v101, 0.0
  %v118 = vmax.f32 %v102, 0.0
  %v119 = vmax.f32 %v103, 0.0
  %v120 = vmax.f32 %v104, 0.0
  %v121 = vmax.f32 %v105, 0.0
  %v122 = vld [vmem:[%s6] sm:$0xff]
  %v123 = vld [vmem:[%s6 + $0x8] sm:$0xff]
  %v124 = vld [vmem:[%s6 + $0x10] sm:$0xff]
  %v125 = vld [vmem:[%s6 + $0x18] sm:$0xff]
  %v126 = vld [vmem:[%s6 + $0x20] sm:$0xff]
  %v127 = vld [vmem:[%s6 + $0x28] sm:$0xff]
  %v128 = vld [vmem:[%s6 + $0x30] sm:$0xff]
  %v129 = vld [vmem:[%s6 + $0x38] sm:$0xff]
  %v130 = vld [vmem:[%s6 + $0x40] sm:$0xff]
  %v131 = vld [vmem:[%s6 + $0x48] sm:$0xff]
  %v132 = vld [vmem:[%s6 + $0x50] sm:$0xff]
  %v133 = vld [vmem:[%s6 + $0x58] sm:$0xff]
  %v134 = vld [vmem:[%s6 + $0x60] sm:$0xff]
  %v135 = vld [vmem:[%s6 + $0x68] sm:$0xff]
  %v136 = vld [vmem:[%s6 + $0x70] sm:$0xff]
  %v137 = vld [vmem:[%s6 + $0x78] sm:$0xff]
  %v138 = vld [vmem:[%s7] sm:$0x1]
  %v140 = vperm.slane %v138, 0
  %v142 = vmul.f32 %v122, %v140
  %v143 = vmul.f32 %v123, %v140
  %v144 = vmul.f32 %v124, %v140
  %v145 = vmul.f32 %v125, %v140
  %v146 = vmul.f32 %v126, %v140
  %v147 = vmul.f32 %v127, %v140
  %v148 = vmul.f32 %v128, %v140
  %v149 = vmul.f32 %v129, %v140
  %v150 = vmul.f32 %v130, %v140
  %v151 = vmul.f32 %v131, %v140
  %v152 = vmul.f32 %v132, %v140
  %v153 = vmul.f32 %v133, %v140
  %v154 = vmul.f32 %v134, %v140
  %v155 = vmul.f32 %v135, %v140
  %v156 = vmul.f32 %v136, %v140
  %v157 = vmul.f32 %v137, %v140
  %v158 = vld [vmem:[%s8] sm:$0x1]
  %v160 = vperm.slane %v158, 0
  %v162 = vadd.f32 %v142, %v160
  %v163 = vadd.f32 %v143, %v160
  %v164 = vadd.f32 %v144, %v160
  %v165 = vadd.f32 %v145, %v160
  %v166 = vadd.f32 %v146, %v160
  %v167 = vadd.f32 %v147, %v160
  %v168 = vadd.f32 %v148, %v160
  %v169 = vadd.f32 %v149, %v160
  %v170 = vadd.f32 %v150, %v160
  %v171 = vadd.f32 %v151, %v160
  %v172 = vadd.f32 %v152, %v160
  %v173 = vadd.f32 %v153, %v160
  %v174 = vadd.f32 %v154, %v160
  %v175 = vadd.f32 %v155, %v160
  %v176 = vadd.f32 %v156, %v160
  %v177 = vadd.f32 %v157, %v160
  %v178 = vmax.f32 %v162, 0.0
  %v179 = vmax.f32 %v163, 0.0
  %v180 = vmax.f32 %v164, 0.0
  %v181 = vmax.f32 %v165, 0.0
  %v182 = vmax.f32 %v166, 0.0
  %v183 = vmax.f32 %v167, 0.0
  %v184 = vmax.f32 %v168, 0.0
  %v185 = vmax.f32 %v169, 0.0
  %v186 = vmax.f32 %v170, 0.0
  %v187 = vmax.f32 %v171, 0.0
  %v188 = vmax.f32 %v172, 0.0
  %v189 = vmax.f32 %v173, 0.0
  %v190 = vmax.f32 %v174, 0.0
  %v191 = vmax.f32 %v175, 0.0
  %v192 = vmax.f32 %v176, 0.0
  %v193 = vmax.f32 %v177, 0.0
  %v194 = vld [vmem:[%s9] sm:$0xff]
  %v195 = vld [vmem:[%s9 + $0x8] sm:$0xff]
  %v196 = vld [vmem:[%s9 + $0x10] sm:$0xff]
  %v197 = vld [vmem:[%s9 + $0x18] sm:$0xff]
  %v198 = vld [vmem:[%s9 + $0x20] sm:$0xff]
  %v199 = vld [vmem:[%s9 + $0x28] sm:$0xff]
  %v200 = vld [vmem:[%s9 + $0x30] sm:$0xff]
  %v201 = vld [vmem:[%s9 + $0x38] sm:$0xff]
  %v202 = vld [vmem:[%s9 + $0x40] sm:$0xff]
  %v203 = vld [vmem:[%s9 + $0x48] sm:$0xff]
  %v204 = vld [vmem:[%s9 + $0x50] sm:$0xff]
  %v205 = vld [vmem:[%s9 + $0x58] sm:$0xff]
  %v206 = vld [vmem:[%s9 + $0x60] sm:$0xff]
  %v207 = vld [vmem:[%s9 + $0x68] sm:$0xff]
  %v208 = vld [vmem:[%s9 + $0x70] sm:$0xff]
  %v209 = vld [vmem:[%s9 + $0x78] sm:$0xff]
  %v210 = vld [vmem:[%s10] sm:$0x1]
  %v212 = vperm.slane %v210, 0
  %v214 = vmul.f32 %v194, %v212
  %v215 = vmul.f32 %v195, %v212
  %v216 = vmul.f32 %v196, %v212
  %v217 = vmul.f32 %v197, %v212
  %v218 = vmul.f32 %v198, %v212
  %v219 = vmul.f32 %v199, %v212
  %v220 = vmul.f32 %v200, %v212
  %v221 = vmul.f32 %v201, %v212
  %v222 = vmul.f32 %v202, %v212
  %v223 = vmul.f32 %v203, %v212
  %v224 = vmul.f32 %v204, %v212
  %v225 = vmul.f32 %v205, %v212
  %v226 = vmul.f32 %v206, %v212
  %v227 = vmul.f32 %v207, %v212
  %v228 = vmul.f32 %v208, %v212
  %v229 = vmul.f32 %v209, %v212
  %v230 = vld [vmem:[%s11] sm:$0x1]
  %v232 = vperm.slane %v230, 0
  %v234 = vadd.f32 %v214, %v232
  %v235 = vadd.f32 %v215, %v232
  %v236 = vadd.f32 %v216, %v232
  %v237 = vadd.f32 %v217, %v232
  %v238 = vadd.f32 %v218, %v232
  %v239 = vadd.f32 %v219, %v232
  %v240 = vadd.f32 %v220, %v232
  %v241 = vadd.f32 %v221, %v232
  %v242 = vadd.f32 %v222, %v232
  %v243 = vadd.f32 %v223, %v232
  %v244 = vadd.f32 %v224, %v232
  %v245 = vadd.f32 %v225, %v232
  %v246 = vadd.f32 %v226, %v232
  %v247 = vadd.f32 %v227, %v232
  %v248 = vadd.f32 %v228, %v232
  %v249 = vadd.f32 %v229, %v232
  %v250 = vmax.f32 %v234, 0.0
  %v251 = vmax.f32 %v235, 0.0
  %v252 = vmax.f32 %v236, 0.0
  %v253 = vmax.f32 %v237, 0.0
  %v254 = vmax.f32 %v238, 0.0
  %v255 = vmax.f32 %v239, 0.0
  %v256 = vmax.f32 %v240, 0.0
  %v257 = vmax.f32 %v241, 0.0
  %v258 = vmax.f32 %v242, 0.0
  %v259 = vmax.f32 %v243, 0.0
  %v260 = vmax.f32 %v244, 0.0
  %v261 = vmax.f32 %v245, 0.0
  %v262 = vmax.f32 %v246, 0.0
  %v263 = vmax.f32 %v247, 0.0
  %v264 = vmax.f32 %v248, 0.0
  %v265 = vmax.f32 %v249, 0.0
  %v266 = vld [vmem:[%s48] sm:$0xff]
  %v267 = vld [vmem:[%s48 + $0x8] sm:$0xff]
  %v268 = vld [vmem:[%s48 + $0x10] sm:$0xff]
  %v269 = vld [vmem:[%s48 + $0x18] sm:$0xff]
  %v270 = vld [vmem:[%s48 + $0x20] sm:$0xff]
  %v271 = vld [vmem:[%s48 + $0x28] sm:$0xff]
  %v272 = vld [vmem:[%s48 + $0x30] sm:$0xff]
  %v273 = vld [vmem:[%s48 + $0x38] sm:$0xff]
  %v274 = vld [vmem:[%s48 + $0x40] sm:$0xff]
  %v275 = vld [vmem:[%s48 + $0x48] sm:$0xff]
  %v276 = vld [vmem:[%s48 + $0x50] sm:$0xff]
  %v277 = vld [vmem:[%s48 + $0x58] sm:$0xff]
  %v278 = vld [vmem:[%s48 + $0x60] sm:$0xff]
  %v279 = vld [vmem:[%s48 + $0x68] sm:$0xff]
  %v280 = vld [vmem:[%s48 + $0x70] sm:$0xff]
  %v281 = vld [vmem:[%s48 + $0x78] sm:$0xff]
  %v282 = vld [vmem:[%s1] sm:$0x1]
  %v284 = vperm.slane %v282, 0
  %v286 = vmul.f32 %v266, %v284
  %v287 = vmul.f32 %v267, %v284
  %v288 = vmul.f32 %v268, %v284
  %v289 = vmul.f32 %v269, %v284
  %v290 = vmul.f32 %v270, %v284
  %v291 = vmul.f32 %v271, %v284
  %v292 = vmul.f32 %v272, %v284
  %v293 = vmul.f32 %v273, %v284
  %v294 = vmul.f32 %v274, %v284
  %v295 = vmul.f32 %v275, %v284
  %v296 = vmul.f32 %v276, %v284
  %v297 = vmul.f32 %v277, %v284
  %v298 = vmul.f32 %v278, %v284
  %v299 = vmul.f32 %v279, %v284
  %v300 = vmul.f32 %v280, %v284
  %v301 = vmul.f32 %v281, %v284
  %v302 = vld [vmem:[%s2] sm:$0x1]
  %v304 = vperm.slane %v302, 0
  %v306 = vadd.f32 %v286, %v304
  %v307 = vadd.f32 %v287, %v304
  %v308 = vadd.f32 %v288, %v304
  %v309 = vadd.f32 %v289, %v304
  %v310 = vadd.f32 %v290, %v304
  %v311 = vadd.f32 %v291, %v304
  %v312 = vadd.f32 %v292, %v304
  %v313 = vadd.f32 %v293, %v304
  %v314 = vadd.f32 %v294, %v304
  %v315 = vadd.f32 %v295, %v304
  %v316 = vadd.f32 %v296, %v304
  %v317 = vadd.f32 %v297, %v304
  %v318 = vadd.f32 %v298, %v304
  %v319 = vadd.f32 %v299, %v304
  %v320 = vadd.f32 %v300, %v304
  %v321 = vadd.f32 %v301, %v304
  %v322 = vmax.f32 %v306, 0.0
  %v323 = vmax.f32 %v307, 0.0
  %v324 = vmax.f32 %v308, 0.0
  %v325 = vmax.f32 %v309, 0.0
  %v326 = vmax.f32 %v310, 0.0
  %v327 = vmax.f32 %v311, 0.0
  %v328 = vmax.f32 %v312, 0.0
  %v329 = vmax.f32 %v313, 0.0
  %v330 = vmax.f32 %v314, 0.0
  %v331 = vmax.f32 %v315, 0.0
  %v332 = vmax.f32 %v316, 0.0
  %v333 = vmax.f32 %v317, 0.0
  %v334 = vmax.f32 %v318, 0.0
  %v335 = vmax.f32 %v319, 0.0
  %v336 = vmax.f32 %v320, 0.0
  %v337 = vmax.f32 %v321, 0.0
  %354 = vrot.lane.b32.xlu0 %v178, 6
  %v355 = vpop.permute.xlu0 %354
  %356 = vrot.lane.b32.xlu0 %v179, 6
  %v357 = vpop.permute.xlu0 %356
  %358 = vrot.lane.b32.xlu0 %v180, 6
  %v359 = vpop.permute.xlu0 %358
  %360 = vrot.lane.b32.xlu0 %v181, 6
  %v361 = vpop.permute.xlu0 %360
  %362 = vrot.lane.b32.xlu0 %v182, 6
  %v363 = vpop.permute.xlu0 %362
  %364 = vrot.lane.b32.xlu0 %v183, 6
  %v365 = vpop.permute.xlu0 %364
  %366 = vrot.lane.b32.xlu0 %v184, 6
  %v367 = vpop.permute.xlu0 %366
  %368 = vrot.lane.b32.xlu0 %v185, 6
  %v369 = vpop.permute.xlu0 %368
  %370 = vrot.lane.b32.xlu0 %v186, 6
  %v371 = vpop.permute.xlu0 %370
  %372 = vrot.lane.b32.xlu0 %v187, 6
  %v373 = vpop.permute.xlu0 %372
  %374 = vrot.lane.b32.xlu0 %v188, 6
  %v375 = vpop.permute.xlu0 %374
  %376 = vrot.lane.b32.xlu0 %v189, 6
  %v377 = vpop.permute.xlu0 %376
  %378 = vrot.lane.b32.xlu0 %v190, 6
  %v379 = vpop.permute.xlu0 %378
  %380 = vrot.lane.b32.xlu0 %v191, 6
  %v381 = vpop.permute.xlu0 %380
  %382 = vrot.lane.b32.xlu0 %v192, 6
  %v383 = vpop.permute.xlu0 %382
  %384 = vrot.lane.b32.xlu0 %v193, 6
  %v385 = vpop.permute.xlu0 %384
  %418 = vrot.lane.b32.xlu0 %v250, 12
  %v419 = vpop.permute.xlu0 %418
  %420 = vrot.lane.b32.xlu0 %v251, 12
  %v421 = vpop.permute.xlu0 %420
  %422 = vrot.lane.b32.xlu0 %v252, 12
  %v423 = vpop.permute.xlu0 %422
  %424 = vrot.lane.b32.xlu0 %v253, 12
  %v425 = vpop.permute.xlu0 %424
  %426 = vrot.lane.b32.xlu0 %v254, 12
  %v427 = vpop.permute.xlu0 %426
  %428 = vrot.lane.b32.xlu0 %v255, 12
  %v429 = vpop.permute.xlu0 %428
  %430 = vrot.lane.b32.xlu0 %v256, 12
  %v431 = vpop.permute.xlu0 %430
  %432 = vrot.lane.b32.xlu0 %v257, 12
  %v433 = vpop.permute.xlu0 %432
  %434 = vrot.lane.b32.xlu0 %v258, 12
  %v435 = vpop.permute.xlu0 %434
  %436 = vrot.lane.b32.xlu0 %v259, 12
  %v437 = vpop.permute.xlu0 %436
  %438 = vrot.lane.b32.xlu0 %v260, 12
  %v439 = vpop.permute.xlu0 %438
  %440 = vrot.lane.b32.xlu0 %v261, 12
  %v441 = vpop.permute.xlu0 %440
  %442 = vrot.lane.b32.xlu0 %v262, 12
  %v443 = vpop.permute.xlu0 %442
  %444 = vrot.lane.b32.xlu0 %v263, 12
  %v445 = vpop.permute.xlu0 %444
  %446 = vrot.lane.b32.xlu0 %v264, 12
  %v447 = vpop.permute.xlu0 %446
  %448 = vrot.lane.b32.xlu0 %v265, 12
  %v449 = vpop.permute.xlu0 %448
  %482 = vrot.lane.b32.xlu0 %v322, 18
  %v483 = vpop.permute.xlu0 %482
  %484 = vrot.lane.b32.xlu0 %v323, 18
  %v485 = vpop.permute.xlu0 %484
  %486 = vrot.lane.b32.xlu0 %v324, 18
  %v487 = vpop.permute.xlu0 %486
  %488 = vrot.lane.b32.xlu0 %v325, 18
  %v489 = vpop.permute.xlu0 %488
  %490 = vrot.lane.b32.xlu0 %v326, 18
  %v491 = vpop.permute.xlu0 %490
  %492 = vrot.lane.b32.xlu0 %v327, 18
  %v493 = vpop.permute.xlu0 %492
  %494 = vrot.lane.b32.xlu0 %v328, 18
  %v495 = vpop.permute.xlu0 %494
  %496 = vrot.lane.b32.xlu0 %v329, 18
  %v497 = vpop.permute.xlu0 %496
  %498 = vrot.lane.b32.xlu0 %v330, 18
  %v499 = vpop.permute.xlu0 %498
  %500 = vrot.lane.b32.xlu0 %v331, 18
  %v501 = vpop.permute.xlu0 %500
  %502 = vrot.lane.b32.xlu0 %v332, 18
  %v503 = vpop.permute.xlu0 %502
  %504 = vrot.lane.b32.xlu0 %v333, 18
  %v505 = vpop.permute.xlu0 %504
  %506 = vrot.lane.b32.xlu0 %v334, 18
  %v507 = vpop.permute.xlu0 %506
  %508 = vrot.lane.b32.xlu0 %v335, 18
  %v509 = vpop.permute.xlu0 %508
  %510 = vrot.lane.b32.xlu0 %v336, 18
  %v511 = vpop.permute.xlu0 %510
  %512 = vrot.lane.b32.xlu0 %v337, 18
  %v513 = vpop.permute.xlu0 %512
  %vm530 = vcmask 48128
  %v531 = vsel %vm530, %v106, %v355
  %v532 = vsel %vm530, %v107, %v357
  %v533 = vsel %vm530, %v108, %v359
  %v534 = vsel %vm530, %v109, %v361
  %v535 = vsel %vm530, %v110, %v363
  %v536 = vsel %vm530, %v111, %v365
  %v537 = vsel %vm530, %v112, %v367
  %v538 = vsel %vm530, %v113, %v369
  %v539 = vsel %vm530, %v114, %v371
  %v540 = vsel %vm530, %v115, %v373
  %v541 = vsel %vm530, %v116, %v375
  %v542 = vsel %vm530, %v117, %v377
  %v543 = vsel %vm530, %v118, %v379
  %v544 = vsel %vm530, %v119, %v381
  %v545 = vsel %vm530, %v120, %v383
  %v546 = vsel %vm530, %v121, %v385
  %vm547 = vcmask 97280
  %v548 = vsel %vm547, %v531, %v419
  %v549 = vsel %vm547, %v532, %v421
  %v550 = vsel %vm547, %v533, %v423
  %v551 = vsel %vm547, %v534, %v425
  %v552 = vsel %vm547, %v535, %v427
  %v553 = vsel %vm547, %v536, %v429
  %v554 = vsel %vm547, %v537, %v431
  %v555 = vsel %vm547, %v538, %v433
  %v556 = vsel %vm547, %v539, %v435
  %v557 = vsel %vm547, %v540, %v437
  %v558 = vsel %vm547, %v541, %v439
  %v559 = vsel %vm547, %v542, %v441
  %v560 = vsel %vm547, %v543, %v443
  %v561 = vsel %vm547, %v544, %v445
  %v562 = vsel %vm547, %v545, %v447
  %v563 = vsel %vm547, %v546, %v449
  %vm564 = vcmask 146432
  %v565 = vsel %vm564, %v548, %v483
  %v566 = vsel %vm564, %v549, %v485
  %v567 = vsel %vm564, %v550, %v487
  %v568 = vsel %vm564, %v551, %v489
  %v569 = vsel %vm564, %v552, %v491
  %v570 = vsel %vm564, %v553, %v493
  %v571 = vsel %vm564, %v554, %v495
  %v572 = vsel %vm564, %v555, %v497
  %v573 = vsel %vm564, %v556, %v499
  %v574 = vsel %vm564, %v557, %v501
  %v575 = vsel %vm564, %v558, %v503
  %v576 = vsel %vm564, %v559, %v505
  %v577 = vsel %vm564, %v560, %v507
  %v578 = vsel %vm564, %v561, %v509
  %v579 = vsel %vm564, %v562, %v511
  %v580 = vsel %vm564, %v563, %v513
  %v581 = vpack.c.bf16 %v566, %v565
  %v582 = vpack.c.bf16 %v568, %v567
  %v583 = vpack.c.bf16 %v570, %v569
  %v584 = vpack.c.bf16 %v572, %v571
  %v585 = vpack.c.bf16 %v574, %v573
  %v586 = vpack.c.bf16 %v576, %v575
  %v587 = vpack.c.bf16 %v578, %v577
  %v588 = vpack.c.bf16 %v580, %v579
  %v589 = vld [vmem:[%s12] sm:$0xf]
  %v590 = vld [vmem:[%s12 + $0x4] sm:$0xf]
  %v591 = vld [vmem:[%s12 + $0x8] sm:$0xf]
  %v595 = vunpack.c.l.b16 %v589
  %v596 = vunpack.c.l.b16 %v590
  %v597 = vunpack.c.l.b16 %v591
  %v598 = vpack.c.b16 %v596, %v595
  %v599 = vpack.c.b16 %v597, %v597
  %vm601 = vcmask 195584
  %v603 = vsel %vm601, %v581, 0
  %v606 = vsel %vm601, %v582, 0
  %v609 = vsel %vm601, %v583, 0
  %v612 = vsel %vm601, %v584, 0
  %v615 = vsel %vm601, %v585, 0
  %v618 = vsel %vm601, %v586, 0
  %v621 = vsel %vm601, %v587, 0
  %v624 = vsel %vm601, %v588, 0
  %vm626 = vcmask 1043456
  %v628 = vsel %vm626, %v599, 0
  %630 = vmatpush.bf16.msra.mxu0 0
  %631 = vmatpush.bf16.msra.mxu0 0
  %632 = vmatpush.bf16.msra.mxu0 0
  %633 = vmatpush.bf16.msra.mxu0 0
  %634 = vmatpush.bf16.msra.mxu0 0
  %635 = vmatpush.bf16.msra.mxu0 0
  %636 = vmatpush.bf16.msra.mxu0 %v628
  %637 = vmatpush.bf16.msra.mxu0 %v598
  %638 = vmatmul.bf16.gmra.mxu0 %v603
  %v639 = vpop.f32.mrf.mxu0
  %v640 = vadd.f32 0.0, %v639
  %v641 = vpop.f32.mrf.mxu0
  %v642 = vadd.f32 0.0, %v641
  %643 = vmatmul.bf16.gmra.mxu0 %v606
  %v644 = vpop.f32.mrf.mxu0
  %v645 = vadd.f32 0.0, %v644
  %v646 = vpop.f32.mrf.mxu0
  %v647 = vadd.f32 0.0, %v646
  %648 = vmatmul.bf16.gmra.mxu0 %v609
  %v649 = vpop.f32.mrf.mxu0
  %v650 = vadd.f32 0.0, %v649
  %v651 = vpop.f32.mrf.mxu0
  %v652 = vadd.f32 0.0, %v651
  %653 = vmatmul.bf16.gmra.mxu0 %v612
  %v654 = vpop.f32.mrf.mxu0
  %v655 = vadd.f32 0.0, %v654
  %v656 = vpop.f32.mrf.mxu0
  %v657 = vadd.f32 0.0, %v656
  %658 = vmatmul.bf16.gmra.mxu0 %v615
  %v659 = vpop.f32.mrf.mxu0
  %v660 = vadd.f32 0.0, %v659
  %v661 = vpop.f32.mrf.mxu0
  %v662 = vadd.f32 0.0, %v661
  %663 = vmatmul.bf16.gmra.mxu0 %v618
  %v664 = vpop.f32.mrf.mxu0
  %v665 = vadd.f32 0.0, %v664
  %v666 = vpop.f32.mrf.mxu0
  %v667 = vadd.f32 0.0, %v666
  %668 = vmatmul.bf16.gmra.mxu0 %v621
  %v669 = vpop.f32.mrf.mxu0
  %v670 = vadd.f32 0.0, %v669
  %v671 = vpop.f32.mrf.mxu0
  %v672 = vadd.f32 0.0, %v671
  %673 = vmatmul.bf16.gmra.mxu0 %v624
  %v674 = vpop.f32.mrf.mxu0
  %v675 = vadd.f32 0.0, %v674
  %v676 = vpop.f32.mrf.mxu0
  %v677 = vadd.f32 0.0, %v676
  %678 = vdwg.mxu0
  %vm679 = vcmask 523264
  %680 = vst.msk [vmem:[%s13] sm:$0xff] %vm679, %v640
  %681 = vst.msk [vmem:[%s13 + $0x8] sm:$0xff] %vm679, %v642
  %682 = vst.msk [vmem:[%s13 + $0x10] sm:$0xff] %vm679, %v645
  %683 = vst.msk [vmem:[%s13 + $0x18] sm:$0xff] %vm679, %v647
  %684 = vst.msk [vmem:[%s13 + $0x20] sm:$0xff] %vm679, %v650
  %685 = vst.msk [vmem:[%s13 + $0x28] sm:$0xff] %vm679, %v652
  %686 = vst.msk [vmem:[%s13 + $0x30] sm:$0xff] %vm679, %v655
  %687 = vst.msk [vmem:[%s13 + $0x38] sm:$0xff] %vm679, %v657
  %688 = vst.msk [vmem:[%s13 + $0x40] sm:$0xff] %vm679, %v660
  %689 = vst.msk [vmem:[%s13 + $0x48] sm:$0xff] %vm679, %v662
  %690 = vst.msk [vmem:[%s13 + $0x50] sm:$0xff] %vm679, %v665
  %691 = vst.msk [vmem:[%s13 + $0x58] sm:$0xff] %vm679, %v667
  %692 = vst.msk [vmem:[%s13 + $0x60] sm:$0xff] %vm679, %v670
  %693 = vst.msk [vmem:[%s13 + $0x68] sm:$0xff] %vm679, %v672
  %694 = vst.msk [vmem:[%s13 + $0x70] sm:$0xff] %vm679, %v675
  %695 = vst.msk [vmem:[%s13 + $0x78] sm:$0xff] %vm679, %v677
  %v696 = vsel %vm679, %v640, 0.0
  %v697 = vsel %vm679, %v642, 0.0
  %v698 = vadd.f32 %v696, %v697
  %v699 = vsel %vm679, %v645, 0.0
  %v700 = vadd.f32 %v698, %v699
  %v701 = vsel %vm679, %v647, 0.0
  %v702 = vadd.f32 %v700, %v701
  %v703 = vsel %vm679, %v650, 0.0
  %v704 = vadd.f32 %v702, %v703
  %v705 = vsel %vm679, %v652, 0.0
  %v706 = vadd.f32 %v704, %v705
  %v707 = vsel %vm679, %v655, 0.0
  %v708 = vadd.f32 %v706, %v707
  %v709 = vsel %vm679, %v657, 0.0
  %v710 = vadd.f32 %v708, %v709
  %v711 = vsel %vm679, %v660, 0.0
  %v712 = vadd.f32 %v710, %v711
  %v713 = vsel %vm679, %v662, 0.0
  %v714 = vadd.f32 %v712, %v713
  %v715 = vsel %vm679, %v665, 0.0
  %v716 = vadd.f32 %v714, %v715
  %v717 = vsel %vm679, %v667, 0.0
  %v718 = vadd.f32 %v716, %v717
  %v719 = vsel %vm679, %v670, 0.0
  %v720 = vadd.f32 %v718, %v719
  %v721 = vsel %vm679, %v672, 0.0
  %v722 = vadd.f32 %v720, %v721
  %v723 = vsel %vm679, %v675, 0.0
  %v724 = vadd.f32 %v722, %v723
  %v725 = vsel %vm679, %v677, 0.0
  %v726 = vadd.f32 %v724, %v725
  %v727 = vrot.slane %v726, 4
  %v728 = vadd.f32 %v726, %v727
  %v729 = vrot.slane %v728, 2
  %v730 = vadd.f32 %v728, %v729
  %v731 = vrot.slane %v730, 1
  %v732 = vadd.f32 %v730, %v731
  %vm733 = vcmask 516096
  %734 = vst.msk [vmem:[%s14] sm:$0x1] %vm733, %v732
  %v735 = vmul.f32 %v640, %v640
  %v736 = vmul.f32 %v642, %v642
  %v737 = vmul.f32 %v645, %v645
  %v738 = vmul.f32 %v647, %v647
  %v739 = vmul.f32 %v650, %v650
  %v740 = vmul.f32 %v652, %v652
  %v741 = vmul.f32 %v655, %v655
  %v742 = vmul.f32 %v657, %v657
  %v743 = vmul.f32 %v660, %v660
  %v744 = vmul.f32 %v662, %v662
  %v745 = vmul.f32 %v665, %v665
  %v746 = vmul.f32 %v667, %v667
  %v747 = vmul.f32 %v670, %v670
  %v748 = vmul.f32 %v672, %v672
  %v749 = vmul.f32 %v675, %v675
  %v750 = vmul.f32 %v677, %v677
  %v751 = vsel %vm679, %v735, 0.0
  %v752 = vsel %vm679, %v736, 0.0
  %v753 = vadd.f32 %v751, %v752
  %v754 = vsel %vm679, %v737, 0.0
  %v755 = vadd.f32 %v753, %v754
  %v756 = vsel %vm679, %v738, 0.0
  %v757 = vadd.f32 %v755, %v756
  %v758 = vsel %vm679, %v739, 0.0
  %v759 = vadd.f32 %v757, %v758
  %v760 = vsel %vm679, %v740, 0.0
  %v761 = vadd.f32 %v759, %v760
  %v762 = vsel %vm679, %v741, 0.0
  %v763 = vadd.f32 %v761, %v762
  %v764 = vsel %vm679, %v742, 0.0
  %v765 = vadd.f32 %v763, %v764
  %v766 = vsel %vm679, %v743, 0.0
  %v767 = vadd.f32 %v765, %v766
  %v768 = vsel %vm679, %v744, 0.0
  %v769 = vadd.f32 %v767, %v768
  %v770 = vsel %vm679, %v745, 0.0
  %v771 = vadd.f32 %v769, %v770
  %v772 = vsel %vm679, %v746, 0.0
  %v773 = vadd.f32 %v771, %v772
  %v774 = vsel %vm679, %v747, 0.0
  %v775 = vadd.f32 %v773, %v774
  %v776 = vsel %vm679, %v748, 0.0
  %v777 = vadd.f32 %v775, %v776
  %v778 = vsel %vm679, %v749, 0.0
  %v779 = vadd.f32 %v777, %v778
  %v780 = vsel %vm679, %v750, 0.0
  %v781 = vadd.f32 %v779, %v780
  %v782 = vrot.slane %v781, 4
  %v783 = vadd.f32 %v781, %v782
  %v784 = vrot.slane %v783, 2
  %v785 = vadd.f32 %v783, %v784
  %v786 = vrot.slane %v785, 1
  %v787 = vadd.f32 %v785, %v786
  %788 = vst.msk [vmem:[%s14 + $0x1] sm:$0x1] %vm733, %v787
  // Predicated region
  $region54: #{bottle2neck_forward.10} parent=0 // pred_check
    _
  $region55: #{bottle2neck_forward.10} parent=0 // pred_check_branch
    %790 = sbr.rel (0) target = $region57
  $region56: #{bottle2neck_forward.10} parent=0 // pred_region
    _
  $region57: #{bottle2neck_forward.10} parent=0 // pred_fallthru
    _
  // Predicated region
  $region58: #{bottle2neck_forward.10} parent=0 // pred_check
    _
  $region59: #{bottle2neck_forward.10} parent=0 // pred_check_branch
    %792 = sbr.rel (0) target = $region61
  $region60: #{bottle2neck_forward.10} parent=0 // pred_region
    _
  $region61: #{bottle2neck_forward.10} parent=0 // pred_fallthru
    _
  // Predicated region
  $region62: #{bottle2neck_forward.10} parent=0 // pred_check
    _
  $region63: #{bottle2neck_forward.10} parent=0 // pred_check_branch
    %794 = sbr.rel (0) target = $region65
  $region64: #{bottle2neck_forward.10} parent=0 // pred_region
    _
  $region65: #{bottle2neck_forward.10} parent=0 // pred_fallthru
    _
  // Predicated region
  $region66: #{bottle2neck_forward.10} parent=0 // pred_check
    _
  $region67: #{bottle2neck_forward.10} parent=0 // pred_check_branch
    %796 = sbr.rel (0) target = $region69
  $region68: #{bottle2neck_forward.10} parent=0 // pred_region
    _
  $region69: #{bottle2neck_forward.10} parent=0 // pred_fallthru
    _

</llo_original>
